<compile_context>
chip_gen: v7x
topology: tpu7x:2x2x1
jax: 0.10.0
libtpu: 0.0.40
codegen_flags: <defaults>
</compile_context>

<pallas_src>
import math

import jax
import jax.numpy as jnp
from jax.experimental import pallas as pl
from jax.experimental.pallas import tpu as pltpu


# ---------------------------------------------------------------------------
# Fused BasicBlock kernel (both convs, BN bias, residual, ReLUs in one call)
# ---------------------------------------------------------------------------
def basic_block_pallas(x_nhwc, w1, b1, w2, b2, out_dtype=jnp.float32):
    """Fused BasicBlock forward on NHWC bf16 activations.

    x_nhwc : (N, H, W, C)  bf16 activations
    w1, w2 : (9*C, C)      bf16 weights, BN scale folded in,
                           row index = (kh*3 + kw)*C + cin
    b1, b2 : (1, C)        f32 folded BN bias (beta - mean*scale)
    returns: (N, C, H*W)   out_dtype (wrapper reshapes to NCHW for free)
    """
    N, H, W, C = x_nhwc.shape
    HW = H * W
    K9 = 9 * C

    def kernel(x_ref, w1_ref, b1_ref, w2_ref, b2_ref, o_ref,
               pad_ref, patch_ref):
        # Zero-padded activation scratch (padding=1). Only the interior is
        # ever written afterwards, so the border stays zero for both convs.
        pad_ref[...] = jnp.zeros_like(pad_ref)
        pad_ref[1:H + 1, 1:W + 1, :] = x_ref[0]

        def im2col():
            # Build the (H*W, 9C) bf16 patch matrix in VMEM. Column block t
            # holds tap (kh, kw) = (t // 3, t % 3), matching the (9C, C)
            # weight row layout. Stores are 128-lane aligned (t*C offsets).
            xt = pad_ref[...]                                  # (H+2, W+2, C)
            for kh in range(3):
                for kw in range(3):
                    t = kh * 3 + kw
                    patch_ref[:, t * C:(t + 1) * C] = (
                        xt[kh:kh + H, kw:kw + W, :].reshape(HW, C))

        # ---- conv1 + BN1 + ReLU : one K=9C MXU matmul, fp32 accumulation ----
        im2col()
        y1 = jnp.dot(patch_ref[...], w1_ref[...],
                     preferred_element_type=jnp.float32)
        y1 = jnp.maximum(y1 + b1_ref[...], 0.0).astype(jnp.bfloat16)

        # ---- re-pad conv1 output in place (border of pad_ref still zero) ----
        pad_ref[1:H + 1, 1:W + 1, :] = y1.reshape(H, W, C)

        # ---- conv2 + BN2 + residual + ReLU ----
        im2col()
        y2 = jnp.dot(patch_ref[...], w2_ref[...],
                     preferred_element_type=jnp.float32)
        y2 = y2 + b2_ref[...]
        y2 = y2 + x_ref[0].reshape(HW, C).astype(jnp.float32)   # identity residual
        y2 = jnp.maximum(y2, 0.0)

        # Lane-dense (C, H*W) store (H*W = multiple of 128) instead of an XLA
        # NHWC->NCHW transpose with a 16-wide masked last dim.
        o_ref[0] = y2.T.astype(o_ref.dtype)

    return pl.pallas_call(
        kernel,
        out_shape=jax.ShapeDtypeStruct((N, C, HW), out_dtype),
        grid=(N,),
        in_specs=[
            pl.BlockSpec((1, H, W, C), lambda n: (n, 0, 0, 0)),   # activation
            pl.BlockSpec((K9, C), lambda n: (0, 0)),              # w1 (folded BN1)
            pl.BlockSpec((1, C), lambda n: (0, 0)),               # b1
            pl.BlockSpec((K9, C), lambda n: (0, 0)),              # w2 (folded BN2)
            pl.BlockSpec((1, C), lambda n: (0, 0)),               # b2
        ],
        out_specs=pl.BlockSpec((1, C, HW), lambda n: (n, 0, 0)),
        scratch_shapes=[
            pltpu.VMEM((H + 2, W + 2, C), jnp.bfloat16),   # shared padded act
            pltpu.VMEM((HW, K9), jnp.bfloat16),            # im2col patches
        ],
        compiler_params=pltpu.CompilerParams(
            dimension_semantics=("parallel",),
            vmem_limit_bytes=32 * 1024 * 1024,   # conservative for v7x (64 MiB phys)
        ),
    )(x_nhwc, w1, b1, w2, b2)


# ---------------------------------------------------------------------------
# BasicBlock forward (public API: PyTorch-style NCHW in / NCHW out)
# ---------------------------------------------------------------------------
def basic_block_forward(x_nchw, params):
    """Equivalent of BasicBlock.forward(x) with stride=1, downsample=None."""
    N, C, H, W = x_nchw.shape
    # NCHW -> NHWC (+ bf16 cast): transpose output is lane-dense (C=last dim).
    x = jnp.transpose(x_nchw, (0, 2, 3, 1)).astype(jnp.bfloat16)
    y = basic_block_pallas(x, params["w1"], params["b1"],
                           params["w2"], params["b2"],
                           out_dtype=jnp.float32)
    # (N, C, H*W) -> (N, C, H, W): contiguous reshape, no data movement.
    return y.reshape(N, C, H, W)


# ---------------------------------------------------------------------------
# Deterministic parameter initialization (eval-mode BN folded into scale/bias)
# ---------------------------------------------------------------------------
def _bn_fold(key, c):
    k1, k2, k3, k4 = jax.random.split(key, 4)
    gamma = 1.0 + 0.1 * jax.random.normal(k1, (c,), jnp.float32)
    beta = 0.1 * jax.random.normal(k2, (c,), jnp.float32)
    mean = 0.1 * jax.random.normal(k3, (c,), jnp.float32)
    var = 1.0 + 0.1 * jax.random.uniform(k4, (c,), jnp.float32)
    scale = gamma / jnp.sqrt(var + 1e-5)
    bias = beta - mean * scale
    return scale, bias


def init_params(key, c):
    kw1, kb1, kw2, kb2 = jax.random.split(key, 4)

    def conv_w(k):
        # HWIO conv weight, Kaiming-ish init.
        return jax.random.normal(k, (3, 3, c, c), jnp.float32) * math.sqrt(2.0 / (9 * c))

    def fold(w, s):
        # Fold BN scale into the conv weight (output channel), then flatten to
        # (9*Cin, Cout) with row index (kh*3 + kw)*Cin + cin, matching the
        # in-kernel im2col column layout.
        return (w * s[None, None, None, :]).reshape(9 * c, c).astype(jnp.bfloat16)

    w1 = conv_w(kw1)
    s1, b1 = _bn_fold(kb1, c)
    w2 = conv_w(kw2)
    s2, b2 = _bn_fold(kb2, c)
    return dict(
        w1=fold(w1, s1), b1=b1.reshape(1, c),
        w2=fold(w2, s2), b2=b2.reshape(1, c),
    )


# ---------------------------------------------------------------------------
# Pure-JAX reference (same bf16 input/weight/intermediate rounding, fp32 math)
# ---------------------------------------------------------------------------
def _reference(x_nchw, params):
    c = params["b1"].shape[-1]
    x = jnp.transpose(x_nchw, (0, 2, 3, 1)).astype(jnp.bfloat16).astype(jnp.float32)

    def conv_bn(v, w9, b):
        w = w9.reshape(3, 3, c, c).astype(jnp.float32)
        y = jax.lax.conv_general_dilated(
            v, w, window_strides=(1, 1), padding=((1, 1), (1, 1)),
            dimension_numbers=("NHWC", "HWIO", "NHWC"),
            precision=jax.lax.Precision.HIGHEST)
        return y + b.reshape(1, 1, 1, c)

    y1 = jnp.maximum(conv_bn(x, params["w1"], params["b1"]), 0.0)
    y1 = y1.astype(jnp.bfloat16).astype(jnp.float32)   # kernel keeps conv1 out in bf16
    y2 = jnp.maximum(conv_bn(y1, params["w2"], params["b2"]) + x, 0.0)
    return jnp.transpose(y2, (0, 3, 1, 2))


if __name__ == "__main__":
    key = jax.random.PRNGKey(0)
    pkey, xkey = jax.random.split(key)
    # BasicBlock(in_channel=128, out_channel=128), stride=1, downsample=None.
    N, C, H, W = 2, 128, 16, 16
    params = init_params(pkey, C)
    x = jax.random.normal(xkey, (N, C, H, W), jnp.float32)

    out = basic_block_forward(x, params)
    jax.block_until_ready(out)

    assert out.shape == (N, C, H, W)
    assert bool(jnp.all(jnp.isfinite(out)))
    ref = _reference(x, params)
    max_err = float(jnp.max(jnp.abs(out - ref)))
    assert max_err < 5e-3, f"max abs err vs reference: {max_err}"
    print("KERNEL_OK")
</pallas_src>

<mosaic_0001>
module attributes {stable_mosaic.version = 11 : i64} {
  func.func @kernel(%arg0: i32, %arg1: memref<1x16x16x128xbf16, #tpu.memory_space<vmem>>, %arg2: memref<1152x128xbf16, #tpu.memory_space<vmem>>, %arg3: memref<1x128xf32, #tpu.memory_space<vmem>>, %arg4: memref<1152x128xbf16, #tpu.memory_space<vmem>>, %arg5: memref<1x128xf32, #tpu.memory_space<vmem>>, %arg6: memref<1x128x256xf32, #tpu.memory_space<vmem>>, %arg7: memref<18x18x128xbf16, #tpu.memory_space<vmem>>, %arg8: memref<256x1152xbf16, #tpu.memory_space<vmem>>) attributes {dimension_semantics = [#tpu.dimension_semantics<parallel>], iteration_bounds = array<i64: 2>, scalar_prefetch = 0 : i64, scratch_operands = 2 : i64, tpu.core_type = #tpu.core_type<tc>, window_params = [{transform_indices = @transform_0, window_bounds = array<i64: 1, 16, 16, 128>}, {pipeline_mode = #tpu.pipeline_mode<synchronous>, transform_indices = @transform_1, window_bounds = array<i64: 1152, 128>}, {pipeline_mode = #tpu.pipeline_mode<synchronous>, transform_indices = @transform_2, window_bounds = array<i64: 1, 128>}, {pipeline_mode = #tpu.pipeline_mode<synchronous>, transform_indices = @transform_3, window_bounds = array<i64: 1152, 128>}, {pipeline_mode = #tpu.pipeline_mode<synchronous>, transform_indices = @transform_4, window_bounds = array<i64: 1, 128>}, {transform_indices = @transform_5, window_bounds = array<i64: 1, 128, 256>}]} {
    %cst = arith.constant 0.000000e+00 : bf16
    %0 = vector.broadcast %cst : bf16 to vector<18x18x128xbf16>
    %c0 = arith.constant 0 : index
    %c0_0 = arith.constant 0 : index
    %c0_1 = arith.constant 0 : index
    %1 = vector.load %arg7[%c0, %c0_0, %c0_1] : memref<18x18x128xbf16, #tpu.memory_space<vmem>>, vector<18x18x128xbf16>
    tpu.vector_store %arg7[%c0, %c0_0, %c0_1], %0 {strides = array<i32>} : memref<18x18x128xbf16, #tpu.memory_space<vmem>>, vector<18x18x128xbf16>,
    %c0_2 = arith.constant 0 : index
    %c0_3 = arith.constant 0 : index
    %c0_4 = arith.constant 0 : index
    %c0_5 = arith.constant 0 : index
    %2 = vector.load %arg1[%c0_2, %c0_3, %c0_4, %c0_5] : memref<1x16x16x128xbf16, #tpu.memory_space<vmem>>, vector<1x16x16x128xbf16>
    %3 = vector.shape_cast %2 : vector<1x16x16x128xbf16> to vector<16x16x128xbf16>
    %c1 = arith.constant 1 : index
    %c1_6 = arith.constant 1 : index
    %c0_7 = arith.constant 0 : index
    %4 = vector.load %arg7[%c1, %c1_6, %c0_7] : memref<18x18x128xbf16, #tpu.memory_space<vmem>>, vector<16x16x128xbf16>
    tpu.vector_store %arg7[%c1, %c1_6, %c0_7], %3 {strides = array<i32>} : memref<18x18x128xbf16, #tpu.memory_space<vmem>>, vector<16x16x128xbf16>,
    %c0_8 = arith.constant 0 : index
    %c0_9 = arith.constant 0 : index
    %c0_10 = arith.constant 0 : index
    %5 = vector.load %arg7[%c0_8, %c0_9, %c0_10] : memref<18x18x128xbf16, #tpu.memory_space<vmem>>, vector<18x18x128xbf16>
    %6 = vector.extract_strided_slice %5 {offsets = [0, 0, 0], sizes = [16, 16, 128], strides = [1, 1, 1]} : vector<18x18x128xbf16> to vector<16x16x128xbf16>
    %7 = vector.shape_cast %6 : vector<16x16x128xbf16> to vector<256x128xbf16>
    %c0_11 = arith.constant 0 : index
    %c0_12 = arith.constant 0 : index
    %8 = vector.load %arg8[%c0_11, %c0_12] : memref<256x1152xbf16, #tpu.memory_space<vmem>>, vector<256x128xbf16>
    tpu.vector_store %arg8[%c0_11, %c0_12], %7 {strides = array<i32>} : memref<256x1152xbf16, #tpu.memory_space<vmem>>, vector<256x128xbf16>,
    %9 = vector.extract_strided_slice %5 {offsets = [0, 1, 0], sizes = [16, 16, 128], strides = [1, 1, 1]} : vector<18x18x128xbf16> to vector<16x16x128xbf16>
    %10 = vector.shape_cast %9 : vector<16x16x128xbf16> to vector<256x128xbf16>
    %c0_13 = arith.constant 0 : index
    %c128 = arith.constant 128 : index
    %11 = vector.load %arg8[%c0_13, %c128] : memref<256x1152xbf16, #tpu.memory_space<vmem>>, vector<256x128xbf16>
    tpu.vector_store %arg8[%c0_13, %c128], %10 {strides = array<i32>} : memref<256x1152xbf16, #tpu.memory_space<vmem>>, vector<256x128xbf16>,
    %12 = vector.extract_strided_slice %5 {offsets = [0, 2, 0], sizes = [16, 16, 128], strides = [1, 1, 1]} : vector<18x18x128xbf16> to vector<16x16x128xbf16>
    %13 = vector.shape_cast %12 : vector<16x16x128xbf16> to vector<256x128xbf16>
    %c0_14 = arith.constant 0 : index
    %c256 = arith.constant 256 : index
    %14 = vector.load %arg8[%c0_14, %c256] : memref<256x1152xbf16, #tpu.memory_space<vmem>>, vector<256x128xbf16>
    tpu.vector_store %arg8[%c0_14, %c256], %13 {strides = array<i32>} : memref<256x1152xbf16, #tpu.memory_space<vmem>>, vector<256x128xbf16>,
    %15 = vector.extract_strided_slice %5 {offsets = [1, 0, 0], sizes = [16, 16, 128], strides = [1, 1, 1]} : vector<18x18x128xbf16> to vector<16x16x128xbf16>
    %16 = vector.shape_cast %15 : vector<16x16x128xbf16> to vector<256x128xbf16>
    %c0_15 = arith.constant 0 : index
    %c384 = arith.constant 384 : index
    %17 = vector.load %arg8[%c0_15, %c384] : memref<256x1152xbf16, #tpu.memory_space<vmem>>, vector<256x128xbf16>
    tpu.vector_store %arg8[%c0_15, %c384], %16 {strides = array<i32>} : memref<256x1152xbf16, #tpu.memory_space<vmem>>, vector<256x128xbf16>,
    %18 = vector.extract_strided_slice %5 {offsets = [1, 1, 0], sizes = [16, 16, 128], strides = [1, 1, 1]} : vector<18x18x128xbf16> to vector<16x16x128xbf16>
    %19 = vector.shape_cast %18 : vector<16x16x128xbf16> to vector<256x128xbf16>
    %c0_16 = arith.constant 0 : index
    %c512 = arith.constant 512 : index
    %20 = vector.load %arg8[%c0_16, %c512] : memref<256x1152xbf16, #tpu.memory_space<vmem>>, vector<256x128xbf16>
    tpu.vector_store %arg8[%c0_16, %c512], %19 {strides = array<i32>} : memref<256x1152xbf16, #tpu.memory_space<vmem>>, vector<256x128xbf16>,
    %21 = vector.extract_strided_slice %5 {offsets = [1, 2, 0], sizes = [16, 16, 128], strides = [1, 1, 1]} : vector<18x18x128xbf16> to vector<16x16x128xbf16>
    %22 = vector.shape_cast %21 : vector<16x16x128xbf16> to vector<256x128xbf16>
    %c0_17 = arith.constant 0 : index
    %c640 = arith.constant 640 : index
    %23 = vector.load %arg8[%c0_17, %c640] : memref<256x1152xbf16, #tpu.memory_space<vmem>>, vector<256x128xbf16>
    tpu.vector_store %arg8[%c0_17, %c640], %22 {strides = array<i32>} : memref<256x1152xbf16, #tpu.memory_space<vmem>>, vector<256x128xbf16>,
    %24 = vector.extract_strided_slice %5 {offsets = [2, 0, 0], sizes = [16, 16, 128], strides = [1, 1, 1]} : vector<18x18x128xbf16> to vector<16x16x128xbf16>
    %25 = vector.shape_cast %24 : vector<16x16x128xbf16> to vector<256x128xbf16>
    %c0_18 = arith.constant 0 : index
    %c768 = arith.constant 768 : index
    %26 = vector.load %arg8[%c0_18, %c768] : memref<256x1152xbf16, #tpu.memory_space<vmem>>, vector<256x128xbf16>
    tpu.vector_store %arg8[%c0_18, %c768], %25 {strides = array<i32>} : memref<256x1152xbf16, #tpu.memory_space<vmem>>, vector<256x128xbf16>,
    %27 = vector.extract_strided_slice %5 {offsets = [2, 1, 0], sizes = [16, 16, 128], strides = [1, 1, 1]} : vector<18x18x128xbf16> to vector<16x16x128xbf16>
    %28 = vector.shape_cast %27 : vector<16x16x128xbf16> to vector<256x128xbf16>
    %c0_19 = arith.constant 0 : index
    %c896 = arith.constant 896 : index
    %29 = vector.load %arg8[%c0_19, %c896] : memref<256x1152xbf16, #tpu.memory_space<vmem>>, vector<256x128xbf16>
    tpu.vector_store %arg8[%c0_19, %c896], %28 {strides = array<i32>} : memref<256x1152xbf16, #tpu.memory_space<vmem>>, vector<256x128xbf16>,
    %30 = vector.extract_strided_slice %5 {offsets = [2, 2, 0], sizes = [16, 16, 128], strides = [1, 1, 1]} : vector<18x18x128xbf16> to vector<16x16x128xbf16>
    %31 = vector.shape_cast %30 : vector<16x16x128xbf16> to vector<256x128xbf16>
    %c0_20 = arith.constant 0 : index
    %c1024 = arith.constant 1024 : index
    %32 = vector.load %arg8[%c0_20, %c1024] : memref<256x1152xbf16, #tpu.memory_space<vmem>>, vector<256x128xbf16>
    tpu.vector_store %arg8[%c0_20, %c1024], %31 {strides = array<i32>} : memref<256x1152xbf16, #tpu.memory_space<vmem>>, vector<256x128xbf16>,
    %c0_21 = arith.constant 0 : index
    %c0_22 = arith.constant 0 : index
    %33 = vector.load %arg8[%c0_21, %c0_22] : memref<256x1152xbf16, #tpu.memory_space<vmem>>, vector<256x1152xbf16>
    %c0_23 = arith.constant 0 : index
    %c0_24 = arith.constant 0 : index
    %34 = vector.load %arg2[%c0_23, %c0_24] : memref<1152x128xbf16, #tpu.memory_space<vmem>>, vector<1152x128xbf16>
    %cst_25 = arith.constant dense<0.000000e+00> : vector<256x128xf32>
    %35 = tpu.matmul %33, %34, %cst_25 {dimension_numbers = #tpu.dot_dimension_numbers<[1], [0], [0], [1], [0, 0, 1, 1], [], []>} : vector<256x1152xbf16>, vector<1152x128xbf16>, vector<256x128xf32> -> vector<256x128xf32>
    %c0_26 = arith.constant 0 : index
    %c0_27 = arith.constant 0 : index
    %36 = vector.load %arg3[%c0_26, %c0_27] : memref<1x128xf32, #tpu.memory_space<vmem>>, vector<1x128xf32>
    %37 = vector.broadcast %36 : vector<1x128xf32> to vector<256x128xf32>
    %38 = arith.addf %35, %37 : vector<256x128xf32>
    %cst_28 = arith.constant 0.000000e+00 : f32
    %39 = vector.broadcast %cst_28 : f32 to vector<256x128xf32>
    %40 = arith.maximumf %38, %39 : vector<256x128xf32>
    %41 = arith.truncf %40 : vector<256x128xf32> to vector<256x128xbf16>
    %42 = vector.shape_cast %41 : vector<256x128xbf16> to vector<16x16x128xbf16>
    %c1_29 = arith.constant 1 : index
    %c1_30 = arith.constant 1 : index
    %c0_31 = arith.constant 0 : index
    %43 = vector.load %arg7[%c1_29, %c1_30, %c0_31] : memref<18x18x128xbf16, #tpu.memory_space<vmem>>, vector<16x16x128xbf16>
    tpu.vector_store %arg7[%c1_29, %c1_30, %c0_31], %42 {strides = array<i32>} : memref<18x18x128xbf16, #tpu.memory_space<vmem>>, vector<16x16x128xbf16>,
    %c0_32 = arith.constant 0 : index
    %c0_33 = arith.constant 0 : index
    %c0_34 = arith.constant 0 : index
    %44 = vector.load %arg7[%c0_32, %c0_33, %c0_34] : memref<18x18x128xbf16, #tpu.memory_space<vmem>>, vector<18x18x128xbf16>
    %45 = vector.extract_strided_slice %44 {offsets = [0, 0, 0], sizes = [16, 16, 128], strides = [1, 1, 1]} : vector<18x18x128xbf16> to vector<16x16x128xbf16>
    %46 = vector.shape_cast %45 : vector<16x16x128xbf16> to vector<256x128xbf16>
    %c0_35 = arith.constant 0 : index
    %c0_36 = arith.constant 0 : index
    %47 = vector.load %arg8[%c0_35, %c0_36] : memref<256x1152xbf16, #tpu.memory_space<vmem>>, vector<256x128xbf16>
    tpu.vector_store %arg8[%c0_35, %c0_36], %46 {strides = array<i32>} : memref<256x1152xbf16, #tpu.memory_space<vmem>>, vector<256x128xbf16>,
    %48 = vector.extract_strided_slice %44 {offsets = [0, 1, 0], sizes = [16, 16, 128], strides = [1, 1, 1]} : vector<18x18x128xbf16> to vector<16x16x128xbf16>
    %49 = vector.shape_cast %48 : vector<16x16x128xbf16> to vector<256x128xbf16>
    %c0_37 = arith.constant 0 : index
    %c128_38 = arith.constant 128 : index
    %50 = vector.load %arg8[%c0_37, %c128_38] : memref<256x1152xbf16, #tpu.memory_space<vmem>>, vector<256x128xbf16>
    tpu.vector_store %arg8[%c0_37, %c128_38], %49 {strides = array<i32>} : memref<256x1152xbf16, #tpu.memory_space<vmem>>, vector<256x128xbf16>,
    %51 = vector.extract_strided_slice %44 {offsets = [0, 2, 0], sizes = [16, 16, 128], strides = [1, 1, 1]} : vector<18x18x128xbf16> to vector<16x16x128xbf16>
    %52 = vector.shape_cast %51 : vector<16x16x128xbf16> to vector<256x128xbf16>
    %c0_39 = arith.constant 0 : index
    %c256_40 = arith.constant 256 : index
    %53 = vector.load %arg8[%c0_39, %c256_40] : memref<256x1152xbf16, #tpu.memory_space<vmem>>, vector<256x128xbf16>
    tpu.vector_store %arg8[%c0_39, %c256_40], %52 {strides = array<i32>} : memref<256x1152xbf16, #tpu.memory_space<vmem>>, vector<256x128xbf16>,
    %54 = vector.extract_strided_slice %44 {offsets = [1, 0, 0], sizes = [16, 16, 128], strides = [1, 1, 1]} : vector<18x18x128xbf16> to vector<16x16x128xbf16>
    %55 = vector.shape_cast %54 : vector<16x16x128xbf16> to vector<256x128xbf16>
    %c0_41 = arith.constant 0 : index
    %c384_42 = arith.constant 384 : index
    %56 = vector.load %arg8[%c0_41, %c384_42] : memref<256x1152xbf16, #tpu.memory_space<vmem>>, vector<256x128xbf16>
    tpu.vector_store %arg8[%c0_41, %c384_42], %55 {strides = array<i32>} : memref<256x1152xbf16, #tpu.memory_space<vmem>>, vector<256x128xbf16>,
    %57 = vector.extract_strided_slice %44 {offsets = [1, 1, 0], sizes = [16, 16, 128], strides = [1, 1, 1]} : vector<18x18x128xbf16> to vector<16x16x128xbf16>
    %58 = vector.shape_cast %57 : vector<16x16x128xbf16> to vector<256x128xbf16>
    %c0_43 = arith.constant 0 : index
    %c512_44 = arith.constant 512 : index
    %59 = vector.load %arg8[%c0_43, %c512_44] : memref<256x1152xbf16, #tpu.memory_space<vmem>>, vector<256x128xbf16>
    tpu.vector_store %arg8[%c0_43, %c512_44], %58 {strides = array<i32>} : memref<256x1152xbf16, #tpu.memory_space<vmem>>, vector<256x128xbf16>,
    %60 = vector.extract_strided_slice %44 {offsets = [1, 2, 0], sizes = [16, 16, 128], strides = [1, 1, 1]} : vector<18x18x128xbf16> to vector<16x16x128xbf16>
    %61 = vector.shape_cast %60 : vector<16x16x128xbf16> to vector<256x128xbf16>
    %c0_45 = arith.constant 0 : index
    %c640_46 = arith.constant 640 : index
    %62 = vector.load %arg8[%c0_45, %c640_46] : memref<256x1152xbf16, #tpu.memory_space<vmem>>, vector<256x128xbf16>
    tpu.vector_store %arg8[%c0_45, %c640_46], %61 {strides = array<i32>} : memref<256x1152xbf16, #tpu.memory_space<vmem>>, vector<256x128xbf16>,
    %63 = vector.extract_strided_slice %44 {offsets = [2, 0, 0], sizes = [16, 16, 128], strides = [1, 1, 1]} : vector<18x18x128xbf16> to vector<16x16x128xbf16>
    %64 = vector.shape_cast %63 : vector<16x16x128xbf16> to vector<256x128xbf16>
    %c0_47 = arith.constant 0 : index
    %c768_48 = arith.constant 768 : index
    %65 = vector.load %arg8[%c0_47, %c768_48] : memref<256x1152xbf16, #tpu.memory_space<vmem>>, vector<256x128xbf16>
    tpu.vector_store %arg8[%c0_47, %c768_48], %64 {strides = array<i32>} : memref<256x1152xbf16, #tpu.memory_space<vmem>>, vector<256x128xbf16>,
    %66 = vector.extract_strided_slice %44 {offsets = [2, 1, 0], sizes = [16, 16, 128], strides = [1, 1, 1]} : vector<18x18x128xbf16> to vector<16x16x128xbf16>
    %67 = vector.shape_cast %66 : vector<16x16x128xbf16> to vector<256x128xbf16>
    %c0_49 = arith.constant 0 : index
    %c896_50 = arith.constant 896 : index
    %68 = vector.load %arg8[%c0_49, %c896_50] : memref<256x1152xbf16, #tpu.memory_space<vmem>>, vector<256x128xbf16>
    tpu.vector_store %arg8[%c0_49, %c896_50], %67 {strides = array<i32>} : memref<256x1152xbf16, #tpu.memory_space<vmem>>, vector<256x128xbf16>,
    %69 = vector.extract_strided_slice %44 {offsets = [2, 2, 0], sizes = [16, 16, 128], strides = [1, 1, 1]} : vector<18x18x128xbf16> to vector<16x16x128xbf16>
    %70 = vector.shape_cast %69 : vector<16x16x128xbf16> to vector<256x128xbf16>
    %c0_51 = arith.constant 0 : index
    %c1024_52 = arith.constant 1024 : index
    %71 = vector.load %arg8[%c0_51, %c1024_52] : memref<256x1152xbf16, #tpu.memory_space<vmem>>, vector<256x128xbf16>
    tpu.vector_store %arg8[%c0_51, %c1024_52], %70 {strides = array<i32>} : memref<256x1152xbf16, #tpu.memory_space<vmem>>, vector<256x128xbf16>,
    %c0_53 = arith.constant 0 : index
    %c0_54 = arith.constant 0 : index
    %72 = vector.load %arg8[%c0_53, %c0_54] : memref<256x1152xbf16, #tpu.memory_space<vmem>>, vector<256x1152xbf16>
    %c0_55 = arith.constant 0 : index
    %c0_56 = arith.constant 0 : index
    %73 = vector.load %arg4[%c0_55, %c0_56] : memref<1152x128xbf16, #tpu.memory_space<vmem>>, vector<1152x128xbf16>
    %cst_57 = arith.constant dense<0.000000e+00> : vector<256x128xf32>
    %74 = tpu.matmul %72, %73, %cst_57 {dimension_numbers = #tpu.dot_dimension_numbers<[1], [0], [0], [1], [0, 0, 1, 1], [], []>} : vector<256x1152xbf16>, vector<1152x128xbf16>, vector<256x128xf32> -> vector<256x128xf32>
    %c0_58 = arith.constant 0 : index
    %c0_59 = arith.constant 0 : index
    %75 = vector.load %arg5[%c0_58, %c0_59] : memref<1x128xf32, #tpu.memory_space<vmem>>, vector<1x128xf32>
    %76 = vector.broadcast %75 : vector<1x128xf32> to vector<256x128xf32>
    %77 = arith.addf %74, %76 : vector<256x128xf32>
    %c0_60 = arith.constant 0 : index
    %c0_61 = arith.constant 0 : index
    %c0_62 = arith.constant 0 : index
    %c0_63 = arith.constant 0 : index
    %78 = vector.load %arg1[%c0_60, %c0_61, %c0_62, %c0_63] : memref<1x16x16x128xbf16, #tpu.memory_space<vmem>>, vector<1x16x16x128xbf16>
    %79 = vector.shape_cast %78 : vector<1x16x16x128xbf16> to vector<16x16x128xbf16>
    %80 = vector.shape_cast %79 : vector<16x16x128xbf16> to vector<256x128xbf16>
    %81 = arith.extf %80 : vector<256x128xbf16> to vector<256x128xf32>
    %82 = arith.addf %77, %81 : vector<256x128xf32>
    %cst_64 = arith.constant 0.000000e+00 : f32
    %83 = vector.broadcast %cst_64 : f32 to vector<256x128xf32>
    %84 = arith.maximumf %82, %83 : vector<256x128xf32>
    %85 = tpu.transpose %84, [1, 0] : vector<256x128xf32> -> vector<128x256xf32>
    %c0_65 = arith.constant 0 : index
    %c0_66 = arith.constant 0 : index
    %c0_67 = arith.constant 0 : index
    %86 = vector.load %arg6[%c0_65, %c0_66, %c0_67] : memref<1x128x256xf32, #tpu.memory_space<vmem>>, vector<1x128x256xf32>
    %87 = vector.shape_cast %86 : vector<1x128x256xf32> to vector<128x256xf32>
    %88 = vector.shape_cast %85 : vector<128x256xf32> to vector<1x128x256xf32>
    tpu.vector_store %arg6[%c0_65, %c0_66, %c0_67], %88 {strides = array<i32>} : memref<1x128x256xf32, #tpu.memory_space<vmem>>, vector<1x128x256xf32>,
    return
  }
  func.func @transform_0(%arg0: i32) -> (i32, i32, i32, i32) {
    %c0_i32 = arith.constant 0 : i32
    %c0_i32_0 = arith.constant 0 : i32
    %c0_i32_1 = arith.constant 0 : i32
    %c0_i32_2 = arith.constant 0 : i32
    return %arg0, %c0_i32, %c0_i32_0, %c0_i32_1 : i32, i32, i32, i32
  }
  func.func @transform_1(%arg0: i32) -> (i32, i32) {
    %c0_i32 = arith.constant 0 : i32
    %c0_i32_0 = arith.constant 0 : i32
    %c0_i32_1 = arith.constant 0 : i32
    return %c0_i32, %c0_i32_0 : i32, i32
  }
  func.func @transform_2(%arg0: i32) -> (i32, i32) {
    %c0_i32 = arith.constant 0 : i32
    %c0_i32_0 = arith.constant 0 : i32
    %c0_i32_1 = arith.constant 0 : i32
    return %c0_i32, %c0_i32_0 : i32, i32
  }
  func.func @transform_3(%arg0: i32) -> (i32, i32) {
    %c0_i32 = arith.constant 0 : i32
    %c0_i32_0 = arith.constant 0 : i32
    %c0_i32_1 = arith.constant 0 : i32
    return %c0_i32, %c0_i32_0 : i32, i32
  }
  func.func @transform_4(%arg0: i32) -> (i32, i32) {
    %c0_i32 = arith.constant 0 : i32
    %c0_i32_0 = arith.constant 0 : i32
    %c0_i32_1 = arith.constant 0 : i32
    return %c0_i32, %c0_i32_0 : i32, i32
  }
  func.func @transform_5(%arg0: i32) -> (i32, i32, i32) {
    %c0_i32 = arith.constant 0 : i32
    %c0_i32_0 = arith.constant 0 : i32
    %c0_i32_1 = arith.constant 0 : i32
    return %arg0, %c0_i32, %c0_i32_0 : i32, i32, i32
  }
}

</mosaic_0001>

<llo_original>
// kernel: tpu_custom_call.1
$region0: #{tpu_custom_call.1}
  #allocation0 [shape = 'u32[]', space=smem, size = 0x4, offset = 0x4, fixed_abs, tag = 'smem constant byte address 0x4 - core index']
  #allocation1 [shape = 'u32[144,128]{1,0:T(1,128)}', space=vmem, size = 0x12000, scoped, tag = 'internal scratch']
  #allocation2 [shape = 'bf16[18,18,128]{2,1,0:T(8,128)(2,1)}', space=vmem, size = 0x1b000, scoped, tag = 'scratch operand']
  #allocation3 [shape = 'bf16[256,1152]{1,0:T(16,128)(2,1)}', space=vmem, size = 0x90000, scoped, tag = 'scratch operand']
  %s0 = inlined_call_operand.hbm [shape: bf16[2,16,16,128], index: 0, kind: input, shape index: {}]
  %s1 = inlined_call_operand.hbm [shape: bf16[1152,128], index: 1, kind: input, shape index: {}]
  %s2 = inlined_call_operand.vmem [shape: f32[1,128], index: 2, kind: input, shape index: {}]
  %s3 = inlined_call_operand.hbm [shape: bf16[1152,128], index: 3, kind: input, shape index: {}]
  %s4 = inlined_call_operand.vmem [shape: f32[1,128], index: 4, kind: input, shape index: {}]
  %s5 = inlined_call_operand.hbm [shape: f32[2,128,256], index: 5, kind: output, shape index: {}]
  %s6 = sld [smem:[#allocation0]]
  $region65: #{tpu_custom_call.1} parent=0
    _
  %s8 = ssub.s32 1, %s6
  %s9 = scalar_select 0, %s8, %s6
  $region1: #{tpu_custom_call.1} parent=0
    #allocation4 [shape = 'u8[131072]{0}', space=vmem, size = 0x20000, scoped, tag = 'input window, operand 0']
    #allocation5 [shape = 's32[2]{0}', space=sflag, size = 0x8, scoped, tag = 'scoped memory for tpu_custom_call.1']
    #allocation6 [shape = 's32[2]{0}', space=sflag, size = 0x8, scoped, tag = 'scoped memory for tpu_custom_call.1']
    #allocation7 [shape = 'u8[294912]{0}', space=vmem, size = 0x48000, scoped, tag = 'input window, operand 1, single buffered']
    #allocation8 [shape = 's32[1]{0}', space=sflag, size = 0x4, scoped, tag = 'scoped memory for tpu_custom_call.1']
    #allocation9 [shape = 'u8[294912]{0}', space=vmem, size = 0x48000, scoped, tag = 'input window, operand 3, single buffered']
    #allocation10 [shape = 'u8[262144]{0}', space=vmem, size = 0x40000, scoped, tag = 'output window, operand 0']
    %10 = vsyncpa [#allocation5], 0
    %s11 = scalar_lea.sflag [#allocation5], 1
    %12 = vsyncpa %s11, 0
    %13 = vsyncpa [#allocation8], 0
    %14 = vsyncpa [#allocation6], 0
    %s15 = scalar_lea.sflag [#allocation6], 1
    %16 = vsyncpa %s15, 0
    loop: start=0, step=1, limit=4
    $region2: #{tpu_custom_call.1} parent=1 // loop_pre_header
      _
    $region3: #{tpu_custom_call.1} parent=1 // loop_header
      %s18 = sphi 0, %s22
      %p19 = scmp.ge.s32.totalorder %s18, 4
      %s28 = sphi 0, %s30
      %s31 = sphi 0, %s28
      %s32 = sphi 0, %s31
      %s48 = sphi 0, %s32
      %s52 = sphi 0, %s52
      %s54 = sphi 0, %s52
      %s55 = sphi 0, %s54
      %s69 = sphi 0, %s55
      %s73 = sphi 0, %s73
      %s75 = sphi 0, %s73
      %s76 = sphi 0, %s75
      %s90 = sphi 0, %s76
      %s94 = sphi 0, %s94
      %s96 = sphi 0, %s94
      %s97 = sphi 0, %s96
      %s111 = sphi 0, %s97
      %s115 = sphi 0, %s115
      %s117 = sphi 0, %s115
      %s118 = sphi 0, %s117
      %s132 = sphi 0, %s118
      %s138 = sphi 0, %s140
      %s141 = sphi 0, %s138
      %s142 = sphi 0, %s141
      %s158 = sphi 0, %s142
    $region4: #{tpu_custom_call.1} parent=1 // loop_header_branch
      %21 = sbr.rel (%p19) target = $region8
    $region5: #{tpu_custom_call.1} parent=1 // loop_body
      %s23 = ssub.s32 %s18, 1
      %s24 = ssub.s32 %s18, 2
      %s25 = sadd.s32 %s18, 1
      %s26 = ssub.s32 %s18, %s25
      %p27 = scmp.eq.s32.totalorder %s26, 0
      %s29 = sadd.s32 %s28, 1
      %s30 = scalar_select %p27, %s28, %s29
      %p33 = pneg %p27
      %p34 = scmp.eq.s32.totalorder %s18, 1
      %p35 = por %p33, %p34
      %p36 = scmp.ne.s32.totalorder %s28, %s31
      %p37 = scmp.eq.s32.totalorder %s18, 0
      %p38 = por %p36, %p37
      %p39 = scmp.ne.s32.totalorder %s28, %s31
      %p40 = scmp.eq.s32.totalorder %s23, 1
      %p41 = por %p39, %p40
      %p42 = scmp.ne.s32.totalorder %s31, %s32
      %p43 = scmp.eq.s32.totalorder %s23, 0
      %p44 = por %p42, %p43
      %p45 = scmp.ne.s32.totalorder %s31, %s32
      %p46 = scmp.eq.s32.totalorder %s24, 1
      %p47 = por %p45, %p46
      %p49 = scmp.ne.s32.totalorder %s32, %s48
      %p50 = scmp.eq.s32.totalorder %s24, 0
      %p51 = por %p49, %p50
      %s53 = sadd.s32 %s52, 1
      %p56 = scmp.eq.s32.totalorder %s18, 1
      %p57 = scmp.ne.s32.totalorder %s52, %s54
      %p58 = scmp.eq.s32.totalorder %s18, 0
      %p59 = por %p57, %p58
      %p60 = scmp.ne.s32.totalorder %s52, %s54
      %p61 = scmp.eq.s32.totalorder %s23, 1
      %p62 = por %p60, %p61
      %p63 = scmp.ne.s32.totalorder %s54, %s55
      %p64 = scmp.eq.s32.totalorder %s23, 0
      %p65 = por %p63, %p64
      %p66 = scmp.ne.s32.totalorder %s54, %s55
      %p67 = scmp.eq.s32.totalorder %s24, 1
      %p68 = por %p66, %p67
      %p70 = scmp.ne.s32.totalorder %s55, %s69
      %p71 = scmp.eq.s32.totalorder %s24, 0
      %p72 = por %p70, %p71
      %s74 = sadd.s32 %s73, 1
      %p77 = scmp.eq.s32.totalorder %s18, 1
      %p78 = scmp.ne.s32.totalorder %s73, %s75
      %p79 = scmp.eq.s32.totalorder %s18, 0
      %p80 = por %p78, %p79
      %p81 = scmp.ne.s32.totalorder %s73, %s75
      %p82 = scmp.eq.s32.totalorder %s23, 1
      %p83 = por %p81, %p82
      %p84 = scmp.ne.s32.totalorder %s75, %s76
      %p85 = scmp.eq.s32.totalorder %s23, 0
      %p86 = por %p84, %p85
      %p87 = scmp.ne.s32.totalorder %s75, %s76
      %p88 = scmp.eq.s32.totalorder %s24, 1
      %p89 = por %p87, %p88
      %p91 = scmp.ne.s32.totalorder %s76, %s90
      %p92 = scmp.eq.s32.totalorder %s24, 0
      %p93 = por %p91, %p92
      %s95 = sadd.s32 %s94, 1
      %p98 = scmp.eq.s32.totalorder %s18, 1
      %p99 = scmp.ne.s32.totalorder %s94, %s96
      %p100 = scmp.eq.s32.totalorder %s18, 0
      %p101 = por %p99, %p100
      %p102 = scmp.ne.s32.totalorder %s94, %s96
      %p103 = scmp.eq.s32.totalorder %s23, 1
      %p104 = por %p102, %p103
      %p105 = scmp.ne.s32.totalorder %s96, %s97
      %p106 = scmp.eq.s32.totalorder %s23, 0
      %p107 = por %p105, %p106
      %p108 = scmp.ne.s32.totalorder %s96, %s97
      %p109 = scmp.eq.s32.totalorder %s24, 1
      %p110 = por %p108, %p109
      %p112 = scmp.ne.s32.totalorder %s97, %s111
      %p113 = scmp.eq.s32.totalorder %s24, 0
      %p114 = por %p112, %p113
      %s116 = sadd.s32 %s115, 1
      %p119 = scmp.eq.s32.totalorder %s18, 1
      %p120 = scmp.ne.s32.totalorder %s115, %s117
      %p121 = scmp.eq.s32.totalorder %s18, 0
      %p122 = por %p120, %p121
      %p123 = scmp.ne.s32.totalorder %s115, %s117
      %p124 = scmp.eq.s32.totalorder %s23, 1
      %p125 = por %p123, %p124
      %p126 = scmp.ne.s32.totalorder %s117, %s118
      %p127 = scmp.eq.s32.totalorder %s23, 0
      %p128 = por %p126, %p127
      %p129 = scmp.ne.s32.totalorder %s117, %s118
      %p130 = scmp.eq.s32.totalorder %s24, 1
      %p131 = por %p129, %p130
      %p133 = scmp.ne.s32.totalorder %s118, %s132
      %p134 = scmp.eq.s32.totalorder %s24, 0
      %p135 = por %p133, %p134
      %s136 = ssub.s32 %s18, %s25
      %p137 = scmp.eq.s32.totalorder %s136, 0
      %s139 = sadd.s32 %s138, 1
      %s140 = scalar_select %p137, %s138, %s139
      %p143 = pneg %p137
      %p144 = scmp.eq.s32.totalorder %s18, 1
      %p145 = por %p143, %p144
      %p146 = scmp.ne.s32.totalorder %s138, %s141
      %p147 = scmp.eq.s32.totalorder %s18, 0
      %p148 = por %p146, %p147
      %p149 = scmp.ne.s32.totalorder %s138, %s141
      %p150 = scmp.eq.s32.totalorder %s23, 1
      %p151 = por %p149, %p150
      %p152 = scmp.ne.s32.totalorder %s141, %s142
      %p153 = scmp.eq.s32.totalorder %s23, 0
      %p154 = por %p152, %p153
      %p155 = scmp.ne.s32.totalorder %s141, %s142
      %p156 = scmp.eq.s32.totalorder %s24, 1
      %p157 = por %p155, %p156
      %p159 = scmp.ne.s32.totalorder %s142, %s158
      %p160 = scmp.eq.s32.totalorder %s24, 0
      %p161 = por %p159, %p160
      %p162 = scmp.le.s32.totalorder 1, %s18
      %p163 = scmp.lt.s32.totalorder %s18, 3
      %p164 = pnand %p162, %p163
      %p165 = pneg %p164
      // Predicated region
      $region9: #{tpu_custom_call.1} parent=5 // pred_check
        _
      $region10: #{tpu_custom_call.1} parent=5 // pred_check_branch
        %167 = sbr.rel (%p164) target = $region12
      $region11: #{tpu_custom_call.1} parent=5 // pred_region
        %s168 = ssub.s32 %s18, 1
        // Predicated region
        $region13: #{tpu_custom_call.1} parent=11 // pred_check
          %p169 = pneg %p65
        $region14: #{tpu_custom_call.1} parent=11 // pred_check_branch
          %171 = sbr.rel (%p169) target = $region16
        $region15: #{tpu_custom_call.1} parent=11 // pred_region
          %s173 = ssub.s32 9216, 9216
          %174 = vsyncadd [#allocation8], %s173
          %s175 = sshll.u32 [#allocation7], 4
          %s176 = int_to_ptr.vmem [resolvable:$true] %s175
          %181 = dma.hbm_to_vmem [thread:$0]  %s1, 9216, %s176, [#allocation8], 64, 64, 4
        $region16: #{tpu_custom_call.1} parent=11 // pred_fallthru
          _
        // Predicated region
        $region17: #{tpu_custom_call.1} parent=11 // pred_check
          %p182 = pneg %p86
        $region18: #{tpu_custom_call.1} parent=11 // pred_check_branch
          %184 = sbr.rel (%p182) target = $region20
        $region19: #{tpu_custom_call.1} parent=11 // pred_region
          _
        $region20: #{tpu_custom_call.1} parent=11 // pred_fallthru
          _
        // Predicated region
        $region21: #{tpu_custom_call.1} parent=11 // pred_check
          %p185 = pneg %p107
        $region22: #{tpu_custom_call.1} parent=11 // pred_check_branch
          %187 = sbr.rel (%p185) target = $region24
        $region23: #{tpu_custom_call.1} parent=11 // pred_region
          %s189 = ssub.s32 9216, 9216
          %190 = vsyncadd [#allocation8], %s189
          %s191 = sshll.u32 [#allocation9], 4
          %s192 = int_to_ptr.vmem [resolvable:$true] %s191
          %197 = dma.hbm_to_vmem [thread:$0]  %s3, 9216, %s192, [#allocation8], 64, 64, 4
        $region24: #{tpu_custom_call.1} parent=11 // pred_fallthru
          _
        // Predicated region
        $region25: #{tpu_custom_call.1} parent=11 // pred_check
          %p198 = pneg %p128
        $region26: #{tpu_custom_call.1} parent=11 // pred_check_branch
          %200 = sbr.rel (%p198) target = $region28
        $region27: #{tpu_custom_call.1} parent=11 // pred_region
          _
        $region28: #{tpu_custom_call.1} parent=11 // pred_fallthru
          _
      $region12: #{tpu_custom_call.1} parent=5 // pred_fallthru
        _
      %p201 = scmp.lt.s32.totalorder %s18, 2
      // Predicated region
      $region29: #{tpu_custom_call.1} parent=5 // pred_check
        %p202 = pneg %p201
      $region30: #{tpu_custom_call.1} parent=5 // pred_check_branch
        %204 = sbr.rel (%p202) target = $region32
      $region31: #{tpu_custom_call.1} parent=5 // pred_region
        // Predicated region
        $region33: #{tpu_custom_call.1} parent=31 // pred_check
          %p205 = pneg %p38
        $region34: #{tpu_custom_call.1} parent=31 // pred_check_branch
          %207 = sbr.rel (%p205) target = $region36
        $region35: #{tpu_custom_call.1} parent=31 // pred_region
          %s208 = sand.u32 %s28, 1
          %s209 = scalar_lea.sflag [#allocation5], %s208
          %s210 = sand.u32 %s28, 1
          %s211 = smul.addr %s210, 128
          %s212 = scalar_lea.vmem [#allocation4], %s211
          %s214 = ssub.s32 2048, 2048
          %215 = vsyncadd %s209, %s214
          %s216 = smul.addr %s18, 32
          %s217 = smul.addr %s216, 64
          %s218 = scalar_lea.hbm %s0, %s217
          %s219 = sshll.u32 %s212, 4
          %s220 = int_to_ptr.vmem [resolvable:$true] %s219
          %225 = dma.hbm_to_vmem [thread:$0]  %s218, 2048, %s220, %s209, 64, 64, 4
        $region36: #{tpu_custom_call.1} parent=31 // pred_fallthru
          _
      $region32: #{tpu_custom_call.1} parent=5 // pred_fallthru
        _
      %p226 = scmp.le.s32.totalorder 1, %s18
      %p227 = scmp.lt.s32.totalorder %s18, 3
      %p228 = pnand %p226, %p227
      %p229 = pneg %p228
      // Predicated region
      $region37: #{tpu_custom_call.1} parent=5 // pred_check
        _
      $region38: #{tpu_custom_call.1} parent=5 // pred_check_branch
        %231 = sbr.rel (%p228) target = $region40
      $region39: #{tpu_custom_call.1} parent=5 // pred_region
        %s232 = ssub.s32 %s18, 1
        %s233 = sand.u32 %s31, 1
        %s234 = scalar_lea.sflag [#allocation5], %s233
        %s235 = sand.u32 %s31, 1
        %s236 = smul.addr %s235, 128
        %s237 = scalar_lea.vmem [#allocation4], %s236
        // Predicated region
        $region41: #{tpu_custom_call.1} parent=39 // pred_check
          %p238 = pneg %p44
        $region42: #{tpu_custom_call.1} parent=39 // pred_check_branch
          %240 = sbr.rel (%p238) target = $region44
        $region43: #{tpu_custom_call.1} parent=39 // pred_region
          %241 = dma.done %s234, 2048
        $region44: #{tpu_custom_call.1} parent=39 // pred_fallthru
          _
        // Predicated region
        $region45: #{tpu_custom_call.1} parent=39 // pred_check
          %p242 = pneg %p65
        $region46: #{tpu_custom_call.1} parent=39 // pred_check_branch
          %244 = sbr.rel (%p242) target = $region48
        $region47: #{tpu_custom_call.1} parent=39 // pred_region
          %245 = dma.done [#allocation8], 9216
        $region48: #{tpu_custom_call.1} parent=39 // pred_fallthru
          _
        // Predicated region
        $region49: #{tpu_custom_call.1} parent=39 // pred_check
          %p246 = pneg %p107
        $region50: #{tpu_custom_call.1} parent=39 // pred_check_branch
          %248 = sbr.rel (%p246) target = $region52
        $region51: #{tpu_custom_call.1} parent=39 // pred_region
          %249 = dma.done [#allocation8], 9216
        $region52: #{tpu_custom_call.1} parent=39 // pred_fallthru
          _
        %s250 = sand.u32 %s31, 1
        %s251 = scalar_lea.sflag [#allocation5], %s250
        %s252 = sand.u32 %s31, 1
        %s253 = smul.addr %s252, 128
        %s254 = scalar_lea.vmem [#allocation4], %s253
        %p255 = pneg %p44
        %p256 = pneg %p41
        %p257 = pneg %p65
        %p258 = pneg %p62
        %p259 = pneg %p86
        %p260 = pneg %p83
        %p261 = pneg %p107
        %p262 = pneg %p104
        %p263 = pneg %p128
        %p264 = pneg %p125
        %p265 = pneg %p154
        %p266 = pneg %p151
        %s267 = sand.u32 %s141, 1
        %s268 = scalar_lea.sflag [#allocation6], %s267
        %s269 = sand.u32 %s141, 1
        %s270 = smul.addr %s269, 256
        %s271 = scalar_lea.vmem [#allocation10], %s270
        %273 = vst [vmem:[#allocation2] sm:$0xf] 0
        %274 = vst [vmem:[#allocation2 + $0x4] sm:$0xf] 0
        %275 = vst [vmem:[#allocation2 + $0x8] sm:$0x1] 0
        %276 = vst [vmem:[#allocation2 + $0xc] sm:$0xf] 0
        %277 = vst [vmem:[#allocation2 + $0x10] sm:$0xf] 0
        %278 = vst [vmem:[#allocation2 + $0x14] sm:$0x1] 0
        %279 = vst [vmem:[#allocation2 + $0x18] sm:$0xf] 0
        %280 = vst [vmem:[#allocation2 + $0x1c] sm:$0xf] 0
        %281 = vst [vmem:[#allocation2 + $0x20] sm:$0x1] 0
        %282 = vst [vmem:[#allocation2 + $0x24] sm:$0xf] 0
        %283 = vst [vmem:[#allocation2 + $0x28] sm:$0xf] 0
        %284 = vst [vmem:[#allocation2 + $0x2c] sm:$0x1] 0
        %285 = vst [vmem:[#allocation2 + $0x30] sm:$0xf] 0
        %286 = vst [vmem:[#allocation2 + $0x34] sm:$0xf] 0
        %287 = vst [vmem:[#allocation2 + $0x38] sm:$0x1] 0
        %288 = vst [vmem:[#allocation2 + $0x3c] sm:$0xf] 0
        %289 = vst [vmem:[#allocation2 + $0x40] sm:$0xf] 0
        %290 = vst [vmem:[#allocation2 + $0x44] sm:$0x1] 0
        %291 = vst [vmem:[#allocation2 + $0x48] sm:$0xf] 0
        %292 = vst [vmem:[#allocation2 + $0x4c] sm:$0xf] 0
        %293 = vst [vmem:[#allocation2 + $0x50] sm:$0x1] 0
        %294 = vst [vmem:[#allocation2 + $0x54] sm:$0xf] 0
        %295 = vst [vmem:[#allocation2 + $0x58] sm:$0xf] 0
        %296 = vst [vmem:[#allocation2 + $0x5c] sm:$0x1] 0
        %297 = vst [vmem:[#allocation2 + $0x60] sm:$0xf] 0
        %298 = vst [vmem:[#allocation2 + $0x64] sm:$0xf] 0
        %299 = vst [vmem:[#allocation2 + $0x68] sm:$0x1] 0
        %300 = vst [vmem:[#allocation2 + $0x6c] sm:$0xf] 0
        %301 = vst [vmem:[#allocation2 + $0x70] sm:$0xf] 0
        %302 = vst [vmem:[#allocation2 + $0x74] sm:$0x1] 0
        %303 = vst [vmem:[#allocation2 + $0x78] sm:$0xf] 0
        %304 = vst [vmem:[#allocation2 + $0x7c] sm:$0xf] 0
        %305 = vst [vmem:[#allocation2 + $0x80] sm:$0x1] 0
        %306 = vst [vmem:[#allocation2 + $0x84] sm:$0xf] 0
        %307 = vst [vmem:[#allocation2 + $0x88] sm:$0xf] 0
        %308 = vst [vmem:[#allocation2 + $0x8c] sm:$0x1] 0
        %309 = vst [vmem:[#allocation2 + $0x90] sm:$0xf] 0
        %310 = vst [vmem:[#allocation2 + $0x94] sm:$0xf] 0
        %311 = vst [vmem:[#allocation2 + $0x98] sm:$0x1] 0
        %312 = vst [vmem:[#allocation2 + $0x9c] sm:$0xf] 0
        %313 = vst [vmem:[#allocation2 + $0xa0] sm:$0xf] 0
        %314 = vst [vmem:[#allocation2 + $0xa4] sm:$0x1] 0
        %315 = vst [vmem:[#allocation2 + $0xa8] sm:$0xf] 0
        %316 = vst [vmem:[#allocation2 + $0xac] sm:$0xf] 0
        %317 = vst [vmem:[#allocation2 + $0xb0] sm:$0x1] 0
        %318 = vst [vmem:[#allocation2 + $0xb4] sm:$0xf] 0
        %319 = vst [vmem:[#allocation2 + $0xb8] sm:$0xf] 0
        %320 = vst [vmem:[#allocation2 + $0xbc] sm:$0x1] 0
        %321 = vst [vmem:[#allocation2 + $0xc0] sm:$0xf] 0
        %322 = vst [vmem:[#allocation2 + $0xc4] sm:$0xf] 0
        %323 = vst [vmem:[#allocation2 + $0xc8] sm:$0x1] 0
        %324 = vst [vmem:[#allocation2 + $0xcc] sm:$0xf] 0
        %325 = vst [vmem:[#allocation2 + $0xd0] sm:$0xf] 0
        %326 = vst [vmem:[#allocation2 + $0xd4] sm:$0x1] 0
        %v327 = vld [vmem:[%s237] sm:$0xf]
        %v328 = vld [vmem:[%s237 + $0x4] sm:$0xf]
        %v329 = vld [vmem:[%s237 + $0x8] sm:$0xf]
        %v330 = vld [vmem:[%s237 + $0xc] sm:$0xf]
        %v331 = vld [vmem:[%s237 + $0x10] sm:$0xf]
        %v332 = vld [vmem:[%s237 + $0x14] sm:$0xf]
        %v333 = vld [vmem:[%s237 + $0x18] sm:$0xf]
        %v334 = vld [vmem:[%s237 + $0x1c] sm:$0xf]
        %v335 = vld [vmem:[%s237 + $0x20] sm:$0xf]
        %v336 = vld [vmem:[%s237 + $0x24] sm:$0xf]
        %v337 = vld [vmem:[%s237 + $0x28] sm:$0xf]
        %v338 = vld [vmem:[%s237 + $0x2c] sm:$0xf]
        %v339 = vld [vmem:[%s237 + $0x30] sm:$0xf]
        %v340 = vld [vmem:[%s237 + $0x34] sm:$0xf]
        %v341 = vld [vmem:[%s237 + $0x38] sm:$0xf]
        %v342 = vld [vmem:[%s237 + $0x3c] sm:$0xf]
        %v343 = vld [vmem:[%s237 + $0x40] sm:$0xf]
        %v344 = vld [vmem:[%s237 + $0x44] sm:$0xf]
        %v345 = vld [vmem:[%s237 + $0x48] sm:$0xf]
        %v346 = vld [vmem:[%s237 + $0x4c] sm:$0xf]
        %v347 = vld [vmem:[%s237 + $0x50] sm:$0xf]
        %v348 = vld [vmem:[%s237 + $0x54] sm:$0xf]
        %v349 = vld [vmem:[%s237 + $0x58] sm:$0xf]
        %v350 = vld [vmem:[%s237 + $0x5c] sm:$0xf]
        %v351 = vld [vmem:[%s237 + $0x60] sm:$0xf]
        %v352 = vld [vmem:[%s237 + $0x64] sm:$0xf]
        %v353 = vld [vmem:[%s237 + $0x68] sm:$0xf]
        %v354 = vld [vmem:[%s237 + $0x6c] sm:$0xf]
        %v355 = vld [vmem:[%s237 + $0x70] sm:$0xf]
        %v356 = vld [vmem:[%s237 + $0x74] sm:$0xf]
        %v357 = vld [vmem:[%s237 + $0x78] sm:$0xf]
        %v358 = vld [vmem:[%s237 + $0x7c] sm:$0xf]
        %vm359 = vsmask.f32 256
        %vm360 = vsmask.f32 4368
        %vm361 = vmor %vm359, %vm360
        %v363 = vshrl.u32 %v327, 16
        %v365 = vrot.slane %v363, 7
        %v366 = vshll.u32 %v327, 16
        %v368 = vor.u32 %v365, %v366
        %v369 = vrot.slane %v365, 4
        %v371 = vshrl.u32 %v328, 16
        %v373 = vrot.slane %v371, 7
        %v374 = vshll.u32 %v328, 16
        %v376 = vor.u32 %v373, %v374
        %v377 = vsel %vm361, %v369, %v376
        %v378 = vrot.slane %v373, 4
        %v380 = vshrl.u32 %v329, 16
        %v382 = vrot.slane %v380, 7
        %v383 = vshll.u32 %v329, 16
        %v385 = vor.u32 %v382, %v383
        %v386 = vrot.slane %v382, 4
        %v388 = vshrl.u32 %v330, 16
        %v390 = vrot.slane %v388, 7
        %v391 = vshll.u32 %v330, 16
        %v393 = vor.u32 %v390, %v391
        %v394 = vsel %vm361, %v386, %v393
        %v395 = vrot.slane %v390, 4
        %v397 = vshrl.u32 %v331, 16
        %v399 = vrot.slane %v397, 7
        %v400 = vshll.u32 %v331, 16
        %v402 = vor.u32 %v399, %v400
        %v403 = vrot.slane %v399, 4
        %v405 = vshrl.u32 %v332, 16
        %v407 = vrot.slane %v405, 7
        %v408 = vshll.u32 %v332, 16
        %v410 = vor.u32 %v407, %v408
        %v411 = vsel %vm361, %v403, %v410
        %v412 = vrot.slane %v407, 4
        %v414 = vshrl.u32 %v333, 16
        %v416 = vrot.slane %v414, 7
        %v417 = vshll.u32 %v333, 16
        %v419 = vor.u32 %v416, %v417
        %v420 = vrot.slane %v416, 4
        %v422 = vshrl.u32 %v334, 16
        %v424 = vrot.slane %v422, 7
        %v425 = vshll.u32 %v334, 16
        %v427 = vor.u32 %v424, %v425
        %v428 = vsel %vm361, %v420, %v427
        %v429 = vrot.slane %v424, 4
        %v431 = vshrl.u32 %v335, 16
        %v433 = vrot.slane %v431, 7
        %v434 = vshll.u32 %v335, 16
        %v436 = vor.u32 %v433, %v434
        %v437 = vrot.slane %v433, 4
        %v439 = vshrl.u32 %v336, 16
        %v441 = vrot.slane %v439, 7
        %v442 = vshll.u32 %v336, 16
        %v444 = vor.u32 %v441, %v442
        %v445 = vsel %vm361, %v437, %v444
        %v446 = vrot.slane %v441, 4
        %v448 = vshrl.u32 %v337, 16
        %v450 = vrot.slane %v448, 7
        %v451 = vshll.u32 %v337, 16
        %v453 = vor.u32 %v450, %v451
        %v454 = vrot.slane %v450, 4
        %v456 = vshrl.u32 %v338, 16
        %v458 = vrot.slane %v456, 7
        %v459 = vshll.u32 %v338, 16
        %v461 = vor.u32 %v458, %v459
        %v462 = vsel %vm361, %v454, %v461
        %v463 = vrot.slane %v458, 4
        %v465 = vshrl.u32 %v339, 16
        %v467 = vrot.slane %v465, 7
        %v468 = vshll.u32 %v339, 16
        %v470 = vor.u32 %v467, %v468
        %v471 = vrot.slane %v467, 4
        %v473 = vshrl.u32 %v340, 16
        %v475 = vrot.slane %v473, 7
        %v476 = vshll.u32 %v340, 16
        %v478 = vor.u32 %v475, %v476
        %v479 = vsel %vm361, %v471, %v478
        %v480 = vrot.slane %v475, 4
        %v482 = vshrl.u32 %v341, 16
        %v484 = vrot.slane %v482, 7
        %v485 = vshll.u32 %v341, 16
        %v487 = vor.u32 %v484, %v485
        %v488 = vrot.slane %v484, 4
        %v490 = vshrl.u32 %v342, 16
        %v492 = vrot.slane %v490, 7
        %v493 = vshll.u32 %v342, 16
        %v495 = vor.u32 %v492, %v493
        %v496 = vsel %vm361, %v488, %v495
        %v497 = vrot.slane %v492, 4
        %v499 = vshrl.u32 %v343, 16
        %v501 = vrot.slane %v499, 7
        %v502 = vshll.u32 %v343, 16
        %v504 = vor.u32 %v501, %v502
        %v505 = vrot.slane %v501, 4
        %v507 = vshrl.u32 %v344, 16
        %v509 = vrot.slane %v507, 7
        %v510 = vshll.u32 %v344, 16
        %v512 = vor.u32 %v509, %v510
        %v513 = vsel %vm361, %v505, %v512
        %v514 = vrot.slane %v509, 4
        %v516 = vshrl.u32 %v345, 16
        %v518 = vrot.slane %v516, 7
        %v519 = vshll.u32 %v345, 16
        %v521 = vor.u32 %v518, %v519
        %v522 = vrot.slane %v518, 4
        %v524 = vshrl.u32 %v346, 16
        %v526 = vrot.slane %v524, 7
        %v527 = vshll.u32 %v346, 16
        %v529 = vor.u32 %v526, %v527
        %v530 = vsel %vm361, %v522, %v529
        %v531 = vrot.slane %v526, 4
        %v533 = vshrl.u32 %v347, 16
        %v535 = vrot.slane %v533, 7
        %v536 = vshll.u32 %v347, 16
        %v538 = vor.u32 %v535, %v536
        %v539 = vrot.slane %v535, 4
        %v541 = vshrl.u32 %v348, 16
        %v543 = vrot.slane %v541, 7
        %v544 = vshll.u32 %v348, 16
        %v546 = vor.u32 %v543, %v544
        %v547 = vsel %vm361, %v539, %v546
        %v548 = vrot.slane %v543, 4
        %v550 = vshrl.u32 %v349, 16
        %v552 = vrot.slane %v550, 7
        %v553 = vshll.u32 %v349, 16
        %v555 = vor.u32 %v552, %v553
        %v556 = vrot.slane %v552, 4
        %v558 = vshrl.u32 %v350, 16
        %v560 = vrot.slane %v558, 7
        %v561 = vshll.u32 %v350, 16
        %v563 = vor.u32 %v560, %v561
        %v564 = vsel %vm361, %v556, %v563
        %v565 = vrot.slane %v560, 4
        %v567 = vshrl.u32 %v351, 16
        %v569 = vrot.slane %v567, 7
        %v570 = vshll.u32 %v351, 16
        %v572 = vor.u32 %v569, %v570
        %v573 = vrot.slane %v569, 4
        %v575 = vshrl.u32 %v352, 16
        %v577 = vrot.slane %v575, 7
        %v578 = vshll.u32 %v352, 16
        %v580 = vor.u32 %v577, %v578
        %v581 = vsel %vm361, %v573, %v580
        %v582 = vrot.slane %v577, 4
        %v584 = vshrl.u32 %v353, 16
        %v586 = vrot.slane %v584, 7
        %v587 = vshll.u32 %v353, 16
        %v589 = vor.u32 %v586, %v587
        %v590 = vrot.slane %v586, 4
        %v592 = vshrl.u32 %v354, 16
        %v594 = vrot.slane %v592, 7
        %v595 = vshll.u32 %v354, 16
        %v597 = vor.u32 %v594, %v595
        %v598 = vsel %vm361, %v590, %v597
        %v599 = vrot.slane %v594, 4
        %v601 = vshrl.u32 %v355, 16
        %v603 = vrot.slane %v601, 7
        %v604 = vshll.u32 %v355, 16
        %v606 = vor.u32 %v603, %v604
        %v607 = vrot.slane %v603, 4
        %v609 = vshrl.u32 %v356, 16
        %v611 = vrot.slane %v609, 7
        %v612 = vshll.u32 %v356, 16
        %v614 = vor.u32 %v611, %v612
        %v615 = vsel %vm361, %v607, %v614
        %v616 = vrot.slane %v611, 4
        %v618 = vshrl.u32 %v357, 16
        %v620 = vrot.slane %v618, 7
        %v621 = vshll.u32 %v357, 16
        %v623 = vor.u32 %v620, %v621
        %v624 = vrot.slane %v620, 4
        %v626 = vshrl.u32 %v358, 16
        %v628 = vrot.slane %v626, 7
        %v629 = vshll.u32 %v358, 16
        %v631 = vor.u32 %v628, %v629
        %v632 = vsel %vm361, %v624, %v631
        %v633 = vrot.slane %v628, 4
        %s682 = scalar_lea.vmem [#allocation2], 12
        %vm683 = vcmask 1043456
        %vm684 = vsmask.f32 7938
        %vm685 = vmand %vm683, %vm684
        %v686 = vld [vmem:[%s682] sm:$0xf]
        %v687 = vsel %vm685, %v368, %v686
        %688 = vst [vmem:[%s682] sm:$0xf] %v687
        %689 = vst [vmem:[%s682 + $0x4] sm:$0xf] %v377
        %vm690 = vcmask 1040384
        %vm691 = vmand %vm690, %vm359
        %v692 = vld [vmem:[%s682 + $0x8] sm:$0x1]
        %v693 = vsel %vm691, %v378, %v692
        %694 = vst [vmem:[%s682 + $0x8] sm:$0x1] %v693
        %v695 = vld [vmem:[%s682 + $0xc] sm:$0xf]
        %v696 = vsel %vm685, %v385, %v695
        %697 = vst [vmem:[%s682 + $0xc] sm:$0xf] %v696
        %698 = vst [vmem:[%s682 + $0x10] sm:$0xf] %v394
        %v699 = vld [vmem:[%s682 + $0x14] sm:$0x1]
        %v700 = vsel %vm691, %v395, %v699
        %701 = vst [vmem:[%s682 + $0x14] sm:$0x1] %v700
        %v702 = vld [vmem:[%s682 + $0x18] sm:$0xf]
        %v703 = vsel %vm685, %v402, %v702
        %704 = vst [vmem:[%s682 + $0x18] sm:$0xf] %v703
        %705 = vst [vmem:[%s682 + $0x1c] sm:$0xf] %v411
        %v706 = vld [vmem:[%s682 + $0x20] sm:$0x1]
        %v707 = vsel %vm691, %v412, %v706
        %708 = vst [vmem:[%s682 + $0x20] sm:$0x1] %v707
        %v709 = vld [vmem:[%s682 + $0x24] sm:$0xf]
        %v710 = vsel %vm685, %v419, %v709
        %711 = vst [vmem:[%s682 + $0x24] sm:$0xf] %v710
        %712 = vst [vmem:[%s682 + $0x28] sm:$0xf] %v428
        %v713 = vld [vmem:[%s682 + $0x2c] sm:$0x1]
        %v714 = vsel %vm691, %v429, %v713
        %715 = vst [vmem:[%s682 + $0x2c] sm:$0x1] %v714
        %v716 = vld [vmem:[%s682 + $0x30] sm:$0xf]
        %v717 = vsel %vm685, %v436, %v716
        %718 = vst [vmem:[%s682 + $0x30] sm:$0xf] %v717
        %719 = vst [vmem:[%s682 + $0x34] sm:$0xf] %v445
        %v720 = vld [vmem:[%s682 + $0x38] sm:$0x1]
        %v721 = vsel %vm691, %v446, %v720
        %722 = vst [vmem:[%s682 + $0x38] sm:$0x1] %v721
        %v723 = vld [vmem:[%s682 + $0x3c] sm:$0xf]
        %v724 = vsel %vm685, %v453, %v723
        %725 = vst [vmem:[%s682 + $0x3c] sm:$0xf] %v724
        %726 = vst [vmem:[%s682 + $0x40] sm:$0xf] %v462
        %v727 = vld [vmem:[%s682 + $0x44] sm:$0x1]
        %v728 = vsel %vm691, %v463, %v727
        %729 = vst [vmem:[%s682 + $0x44] sm:$0x1] %v728
        %v730 = vld [vmem:[%s682 + $0x48] sm:$0xf]
        %v731 = vsel %vm685, %v470, %v730
        %732 = vst [vmem:[%s682 + $0x48] sm:$0xf] %v731
        %733 = vst [vmem:[%s682 + $0x4c] sm:$0xf] %v479
        %v734 = vld [vmem:[%s682 + $0x50] sm:$0x1]
        %v735 = vsel %vm691, %v480, %v734
        %736 = vst [vmem:[%s682 + $0x50] sm:$0x1] %v735
        %v737 = vld [vmem:[%s682 + $0x54] sm:$0xf]
        %v738 = vsel %vm685, %v487, %v737
        %739 = vst [vmem:[%s682 + $0x54] sm:$0xf] %v738
        %740 = vst [vmem:[%s682 + $0x58] sm:$0xf] %v496
        %v741 = vld [vmem:[%s682 + $0x5c] sm:$0x1]
        %v742 = vsel %vm691, %v497, %v741
        %743 = vst [vmem:[%s682 + $0x5c] sm:$0x1] %v742
        %v744 = vld [vmem:[%s682 + $0x60] sm:$0xf]
        %v745 = vsel %vm685, %v504, %v744
        %746 = vst [vmem:[%s682 + $0x60] sm:$0xf] %v745
        %747 = vst [vmem:[%s682 + $0x64] sm:$0xf] %v513
        %v748 = vld [vmem:[%s682 + $0x68] sm:$0x1]
        %v749 = vsel %vm691, %v514, %v748
        %750 = vst [vmem:[%s682 + $0x68] sm:$0x1] %v749
        %v751 = vld [vmem:[%s682 + $0x6c] sm:$0xf]
        %v752 = vsel %vm685, %v521, %v751
        %753 = vst [vmem:[%s682 + $0x6c] sm:$0xf] %v752
        %754 = vst [vmem:[%s682 + $0x70] sm:$0xf] %v530
        %v755 = vld [vmem:[%s682 + $0x74] sm:$0x1]
        %v756 = vsel %vm691, %v531, %v755
        %757 = vst [vmem:[%s682 + $0x74] sm:$0x1] %v756
        %v758 = vld [vmem:[%s682 + $0x78] sm:$0xf]
        %v759 = vsel %vm685, %v538, %v758
        %760 = vst [vmem:[%s682 + $0x78] sm:$0xf] %v759
        %761 = vst [vmem:[%s682 + $0x7c] sm:$0xf] %v547
        %v762 = vld [vmem:[%s682 + $0x80] sm:$0x1]
        %v763 = vsel %vm691, %v548, %v762
        %764 = vst [vmem:[%s682 + $0x80] sm:$0x1] %v763
        %v765 = vld [vmem:[%s682 + $0x84] sm:$0xf]
        %v766 = vsel %vm685, %v555, %v765
        %767 = vst [vmem:[%s682 + $0x84] sm:$0xf] %v766
        %768 = vst [vmem:[%s682 + $0x88] sm:$0xf] %v564
        %v769 = vld [vmem:[%s682 + $0x8c] sm:$0x1]
        %v770 = vsel %vm691, %v565, %v769
        %771 = vst [vmem:[%s682 + $0x8c] sm:$0x1] %v770
        %v772 = vld [vmem:[%s682 + $0x90] sm:$0xf]
        %v773 = vsel %vm685, %v572, %v772
        %774 = vst [vmem:[%s682 + $0x90] sm:$0xf] %v773
        %775 = vst [vmem:[%s682 + $0x94] sm:$0xf] %v581
        %v776 = vld [vmem:[%s682 + $0x98] sm:$0x1]
        %v777 = vsel %vm691, %v582, %v776
        %778 = vst [vmem:[%s682 + $0x98] sm:$0x1] %v777
        %v779 = vld [vmem:[%s682 + $0x9c] sm:$0xf]
        %v780 = vsel %vm685, %v589, %v779
        %781 = vst [vmem:[%s682 + $0x9c] sm:$0xf] %v780
        %782 = vst [vmem:[%s682 + $0xa0] sm:$0xf] %v598
        %v783 = vld [vmem:[%s682 + $0xa4] sm:$0x1]
        %v784 = vsel %vm691, %v599, %v783
        %785 = vst [vmem:[%s682 + $0xa4] sm:$0x1] %v784
        %v786 = vld [vmem:[%s682 + $0xa8] sm:$0xf]
        %v787 = vsel %vm685, %v606, %v786
        %788 = vst [vmem:[%s682 + $0xa8] sm:$0xf] %v787
        %789 = vst [vmem:[%s682 + $0xac] sm:$0xf] %v615
        %v790 = vld [vmem:[%s682 + $0xb0] sm:$0x1]
        %v791 = vsel %vm691, %v616, %v790
        %792 = vst [vmem:[%s682 + $0xb0] sm:$0x1] %v791
        %v793 = vld [vmem:[%s682 + $0xb4] sm:$0xf]
        %v794 = vsel %vm685, %v623, %v793
        %795 = vst [vmem:[%s682 + $0xb4] sm:$0xf] %v794
        %796 = vst [vmem:[%s682 + $0xb8] sm:$0xf] %v632
        %v797 = vld [vmem:[%s682 + $0xbc] sm:$0x1]
        %v798 = vsel %vm691, %v633, %v797
        %799 = vst [vmem:[%s682 + $0xbc] sm:$0x1] %v798
        %v800 = vld [vmem:[#allocation2] sm:$0xf]
        %v801 = vld [vmem:[#allocation2 + $0x4] sm:$0xf]
        %v802 = vld [vmem:[#allocation2 + $0x8] sm:$0x1]
        %v803 = vld [vmem:[#allocation2 + $0xc] sm:$0xf]
        %v804 = vld [vmem:[#allocation2 + $0x10] sm:$0xf]
        %v805 = vld [vmem:[#allocation2 + $0x14] sm:$0x1]
        %v806 = vld [vmem:[#allocation2 + $0x18] sm:$0xf]
        %v807 = vld [vmem:[#allocation2 + $0x1c] sm:$0xf]
        %v808 = vld [vmem:[#allocation2 + $0x20] sm:$0x1]
        %v809 = vld [vmem:[#allocation2 + $0x24] sm:$0xf]
        %v810 = vld [vmem:[#allocation2 + $0x28] sm:$0xf]
        %v811 = vld [vmem:[#allocation2 + $0x2c] sm:$0x1]
        %v812 = vld [vmem:[#allocation2 + $0x30] sm:$0xf]
        %v813 = vld [vmem:[#allocation2 + $0x34] sm:$0xf]
        %v814 = vld [vmem:[#allocation2 + $0x38] sm:$0x1]
        %v815 = vld [vmem:[#allocation2 + $0x3c] sm:$0xf]
        %v816 = vld [vmem:[#allocation2 + $0x40] sm:$0xf]
        %v817 = vld [vmem:[#allocation2 + $0x44] sm:$0x1]
        %v818 = vld [vmem:[#allocation2 + $0x48] sm:$0xf]
        %v819 = vld [vmem:[#allocation2 + $0x4c] sm:$0xf]
        %v820 = vld [vmem:[#allocation2 + $0x50] sm:$0x1]
        %v821 = vld [vmem:[#allocation2 + $0x54] sm:$0xf]
        %v822 = vld [vmem:[#allocation2 + $0x58] sm:$0xf]
        %v823 = vld [vmem:[#allocation2 + $0x5c] sm:$0x1]
        %v824 = vld [vmem:[#allocation2 + $0x60] sm:$0xf]
        %v825 = vld [vmem:[#allocation2 + $0x64] sm:$0xf]
        %v826 = vld [vmem:[#allocation2 + $0x68] sm:$0x1]
        %v827 = vld [vmem:[#allocation2 + $0x6c] sm:$0xf]
        %v828 = vld [vmem:[#allocation2 + $0x70] sm:$0xf]
        %v829 = vld [vmem:[#allocation2 + $0x74] sm:$0x1]
        %v830 = vld [vmem:[#allocation2 + $0x78] sm:$0xf]
        %v831 = vld [vmem:[#allocation2 + $0x7c] sm:$0xf]
        %v832 = vld [vmem:[#allocation2 + $0x80] sm:$0x1]
        %v833 = vld [vmem:[#allocation2 + $0x84] sm:$0xf]
        %v834 = vld [vmem:[#allocation2 + $0x88] sm:$0xf]
        %v835 = vld [vmem:[#allocation2 + $0x8c] sm:$0x1]
        %v836 = vld [vmem:[#allocation2 + $0x90] sm:$0xf]
        %v837 = vld [vmem:[#allocation2 + $0x94] sm:$0xf]
        %v838 = vld [vmem:[#allocation2 + $0x98] sm:$0x1]
        %v839 = vld [vmem:[#allocation2 + $0x9c] sm:$0xf]
        %v840 = vld [vmem:[#allocation2 + $0xa0] sm:$0xf]
        %v841 = vld [vmem:[#allocation2 + $0xa4] sm:$0x1]
        %v842 = vld [vmem:[#allocation2 + $0xa8] sm:$0xf]
        %v843 = vld [vmem:[#allocation2 + $0xac] sm:$0xf]
        %v844 = vld [vmem:[#allocation2 + $0xb0] sm:$0x1]
        %v845 = vld [vmem:[#allocation2 + $0xb4] sm:$0xf]
        %v846 = vld [vmem:[#allocation2 + $0xb8] sm:$0xf]
        %v847 = vld [vmem:[#allocation2 + $0xbc] sm:$0x1]
        %v848 = vld [vmem:[#allocation2 + $0xc0] sm:$0xf]
        %v849 = vld [vmem:[#allocation2 + $0xc4] sm:$0xf]
        %v850 = vld [vmem:[#allocation2 + $0xc8] sm:$0x1]
        %v851 = vld [vmem:[#allocation2 + $0xcc] sm:$0xf]
        %v852 = vld [vmem:[#allocation2 + $0xd0] sm:$0xf]
        %v853 = vld [vmem:[#allocation2 + $0xd4] sm:$0x1]
        %v886 = vunpack.c.l.b16 %v800
        %v887 = vunpack.c.l.b16 %v801
        %v888 = vunpack.c.l.b16 %v803
        %v889 = vunpack.c.l.b16 %v804
        %v890 = vunpack.c.l.b16 %v806
        %v891 = vunpack.c.l.b16 %v807
        %v892 = vunpack.c.l.b16 %v809
        %v893 = vunpack.c.l.b16 %v810
        %v894 = vunpack.c.l.b16 %v812
        %v895 = vunpack.c.l.b16 %v813
        %v896 = vunpack.c.l.b16 %v815
        %v897 = vunpack.c.l.b16 %v816
        %v898 = vunpack.c.l.b16 %v818
        %v899 = vunpack.c.l.b16 %v819
        %v900 = vunpack.c.l.b16 %v821
        %v901 = vunpack.c.l.b16 %v822
        %v902 = vunpack.c.l.b16 %v824
        %v903 = vunpack.c.l.b16 %v825
        %v904 = vunpack.c.l.b16 %v827
        %v905 = vunpack.c.l.b16 %v828
        %v906 = vunpack.c.l.b16 %v830
        %v907 = vunpack.c.l.b16 %v831
        %v908 = vunpack.c.l.b16 %v833
        %v909 = vunpack.c.l.b16 %v834
        %v910 = vunpack.c.l.b16 %v836
        %v911 = vunpack.c.l.b16 %v837
        %v912 = vunpack.c.l.b16 %v839
        %v913 = vunpack.c.l.b16 %v840
        %v914 = vunpack.c.l.b16 %v842
        %v915 = vunpack.c.l.b16 %v843
        %v916 = vunpack.c.l.b16 %v845
        %v917 = vunpack.c.l.b16 %v846
        %v918 = vpack.c.b16 %v887, %v886
        %v919 = vpack.c.b16 %v889, %v888
        %v920 = vpack.c.b16 %v891, %v890
        %v921 = vpack.c.b16 %v893, %v892
        %v922 = vpack.c.b16 %v895, %v894
        %v923 = vpack.c.b16 %v897, %v896
        %v924 = vpack.c.b16 %v899, %v898
        %v925 = vpack.c.b16 %v901, %v900
        %v926 = vpack.c.b16 %v903, %v902
        %v927 = vpack.c.b16 %v905, %v904
        %v928 = vpack.c.b16 %v907, %v906
        %v929 = vpack.c.b16 %v909, %v908
        %v930 = vpack.c.b16 %v911, %v910
        %v931 = vpack.c.b16 %v913, %v912
        %v932 = vpack.c.b16 %v915, %v914
        %v933 = vpack.c.b16 %v917, %v916
        %950 = vst [vmem:[#allocation3] sm:$0xff] %v918
        %951 = vst [vmem:[#allocation3 + $0x48] sm:$0xff] %v919
        %952 = vst [vmem:[#allocation3 + $0x90] sm:$0xff] %v920
        %953 = vst [vmem:[#allocation3 + $0xd8] sm:$0xff] %v921
        %954 = vst [vmem:[#allocation3 + $0x120] sm:$0xff] %v922
        %955 = vst [vmem:[#allocation3 + $0x168] sm:$0xff] %v923
        %956 = vst [vmem:[#allocation3 + $0x1b0] sm:$0xff] %v924
        %957 = vst [vmem:[#allocation3 + $0x1f8] sm:$0xff] %v925
        %958 = vst [vmem:[#allocation3 + $0x240] sm:$0xff] %v926
        %959 = vst [vmem:[#allocation3 + $0x288] sm:$0xff] %v927
        %960 = vst [vmem:[#allocation3 + $0x2d0] sm:$0xff] %v928
        %961 = vst [vmem:[#allocation3 + $0x318] sm:$0xff] %v929
        %962 = vst [vmem:[#allocation3 + $0x360] sm:$0xff] %v930
        %963 = vst [vmem:[#allocation3 + $0x3a8] sm:$0xff] %v931
        %964 = vst [vmem:[#allocation3 + $0x3f0] sm:$0xff] %v932
        %965 = vst [vmem:[#allocation3 + $0x438] sm:$0xff] %v933
        %vm966 = vsmask.f32 3328
        %vm967 = vsmask.f32 7440
        %vm968 = vmor %vm966, %vm967
        %v970 = vshrl.u32 %v800, 16
        %v972 = vrot.slane %v970, 4
        %v973 = vshll.u32 %v800, 16
        %v975 = vrot.slane %v973, 5
        %v976 = vor.u32 %v972, %v975
        %v977 = vrot.slane %v976, 4
        %v979 = vshll.u32 %v801, 16
        %v981 = vrot.slane %v979, 5
        %v982 = vsel %vm968, %v977, %v981
        %v983 = vshrl.u32 %v801, 16
        %v985 = vrot.slane %v983, 4
        %v986 = vor.u32 %v985, %v981
        %v987 = vrot.slane %v986, 4
        %v989 = vshll.u32 %v802, 16
        %v991 = vrot.slane %v989, 5
        %v992 = vsel %vm968, %v987, %v991
        %v994 = vshrl.u32 %v803, 16
        %v996 = vrot.slane %v994, 4
        %v997 = vshll.u32 %v803, 16
        %v999 = vrot.slane %v997, 5
        %v1000 = vor.u32 %v996, %v999
        %v1001 = vrot.slane %v1000, 4
        %v1003 = vshll.u32 %v804, 16
        %v1005 = vrot.slane %v1003, 5
        %v1006 = vsel %vm968, %v1001, %v1005
        %v1007 = vshrl.u32 %v804, 16
        %v1009 = vrot.slane %v1007, 4
        %v1010 = vor.u32 %v1009, %v1005
        %v1011 = vrot.slane %v1010, 4
        %v1013 = vshll.u32 %v805, 16
        %v1015 = vrot.slane %v1013, 5
        %v1016 = vsel %vm968, %v1011, %v1015
        %v1018 = vshrl.u32 %v806, 16
        %v1020 = vrot.slane %v1018, 4
        %v1021 = vshll.u32 %v806, 16
        %v1023 = vrot.slane %v1021, 5
        %v1024 = vor.u32 %v1020, %v1023
        %v1025 = vrot.slane %v1024, 4
        %v1027 = vshll.u32 %v807, 16
        %v1029 = vrot.slane %v1027, 5
        %v1030 = vsel %vm968, %v1025, %v1029
        %v1031 = vshrl.u32 %v807, 16
        %v1033 = vrot.slane %v1031, 4
        %v1034 = vor.u32 %v1033, %v1029
        %v1035 = vrot.slane %v1034, 4
        %v1037 = vshll.u32 %v808, 16
        %v1039 = vrot.slane %v1037, 5
        %v1040 = vsel %vm968, %v1035, %v1039
        %v1042 = vshrl.u32 %v809, 16
        %v1044 = vrot.slane %v1042, 4
        %v1045 = vshll.u32 %v809, 16
        %v1047 = vrot.slane %v1045, 5
        %v1048 = vor.u32 %v1044, %v1047
        %v1049 = vrot.slane %v1048, 4
        %v1051 = vshll.u32 %v810, 16
        %v1053 = vrot.slane %v1051, 5
        %v1054 = vsel %vm968, %v1049, %v1053
        %v1055 = vshrl.u32 %v810, 16
        %v1057 = vrot.slane %v1055, 4
        %v1058 = vor.u32 %v1057, %v1053
        %v1059 = vrot.slane %v1058, 4
        %v1061 = vshll.u32 %v811, 16
        %v1063 = vrot.slane %v1061, 5
        %v1064 = vsel %vm968, %v1059, %v1063
        %v1066 = vshrl.u32 %v812, 16
        %v1068 = vrot.slane %v1066, 4
        %v1069 = vshll.u32 %v812, 16
        %v1071 = vrot.slane %v1069, 5
        %v1072 = vor.u32 %v1068, %v1071
        %v1073 = vrot.slane %v1072, 4
        %v1075 = vshll.u32 %v813, 16
        %v1077 = vrot.slane %v1075, 5
        %v1078 = vsel %vm968, %v1073, %v1077
        %v1079 = vshrl.u32 %v813, 16
        %v1081 = vrot.slane %v1079, 4
        %v1082 = vor.u32 %v1081, %v1077
        %v1083 = vrot.slane %v1082, 4
        %v1085 = vshll.u32 %v814, 16
        %v1087 = vrot.slane %v1085, 5
        %v1088 = vsel %vm968, %v1083, %v1087
        %v1090 = vshrl.u32 %v815, 16
        %v1092 = vrot.slane %v1090, 4
        %v1093 = vshll.u32 %v815, 16
        %v1095 = vrot.slane %v1093, 5
        %v1096 = vor.u32 %v1092, %v1095
        %v1097 = vrot.slane %v1096, 4
        %v1099 = vshll.u32 %v816, 16
        %v1101 = vrot.slane %v1099, 5
        %v1102 = vsel %vm968, %v1097, %v1101
        %v1103 = vshrl.u32 %v816, 16
        %v1105 = vrot.slane %v1103, 4
        %v1106 = vor.u32 %v1105, %v1101
        %v1107 = vrot.slane %v1106, 4
        %v1109 = vshll.u32 %v817, 16
        %v1111 = vrot.slane %v1109, 5
        %v1112 = vsel %vm968, %v1107, %v1111
        %v1114 = vshrl.u32 %v818, 16
        %v1116 = vrot.slane %v1114, 4
        %v1117 = vshll.u32 %v818, 16
        %v1119 = vrot.slane %v1117, 5
        %v1120 = vor.u32 %v1116, %v1119
        %v1121 = vrot.slane %v1120, 4
        %v1123 = vshll.u32 %v819, 16
        %v1125 = vrot.slane %v1123, 5
        %v1126 = vsel %vm968, %v1121, %v1125
        %v1127 = vshrl.u32 %v819, 16
        %v1129 = vrot.slane %v1127, 4
        %v1130 = vor.u32 %v1129, %v1125
        %v1131 = vrot.slane %v1130, 4
        %v1133 = vshll.u32 %v820, 16
        %v1135 = vrot.slane %v1133, 5
        %v1136 = vsel %vm968, %v1131, %v1135
        %v1138 = vshrl.u32 %v821, 16
        %v1140 = vrot.slane %v1138, 4
        %v1141 = vshll.u32 %v821, 16
        %v1143 = vrot.slane %v1141, 5
        %v1144 = vor.u32 %v1140, %v1143
        %v1145 = vrot.slane %v1144, 4
        %v1147 = vshll.u32 %v822, 16
        %v1149 = vrot.slane %v1147, 5
        %v1150 = vsel %vm968, %v1145, %v1149
        %v1151 = vshrl.u32 %v822, 16
        %v1153 = vrot.slane %v1151, 4
        %v1154 = vor.u32 %v1153, %v1149
        %v1155 = vrot.slane %v1154, 4
        %v1157 = vshll.u32 %v823, 16
        %v1159 = vrot.slane %v1157, 5
        %v1160 = vsel %vm968, %v1155, %v1159
        %v1162 = vshrl.u32 %v824, 16
        %v1164 = vrot.slane %v1162, 4
        %v1165 = vshll.u32 %v824, 16
        %v1167 = vrot.slane %v1165, 5
        %v1168 = vor.u32 %v1164, %v1167
        %v1169 = vrot.slane %v1168, 4
        %v1171 = vshll.u32 %v825, 16
        %v1173 = vrot.slane %v1171, 5
        %v1174 = vsel %vm968, %v1169, %v1173
        %v1175 = vshrl.u32 %v825, 16
        %v1177 = vrot.slane %v1175, 4
        %v1178 = vor.u32 %v1177, %v1173
        %v1179 = vrot.slane %v1178, 4
        %v1181 = vshll.u32 %v826, 16
        %v1183 = vrot.slane %v1181, 5
        %v1184 = vsel %vm968, %v1179, %v1183
        %v1186 = vshrl.u32 %v827, 16
        %v1188 = vrot.slane %v1186, 4
        %v1189 = vshll.u32 %v827, 16
        %v1191 = vrot.slane %v1189, 5
        %v1192 = vor.u32 %v1188, %v1191
        %v1193 = vrot.slane %v1192, 4
        %v1195 = vshll.u32 %v828, 16
        %v1197 = vrot.slane %v1195, 5
        %v1198 = vsel %vm968, %v1193, %v1197
        %v1199 = vshrl.u32 %v828, 16
        %v1201 = vrot.slane %v1199, 4
        %v1202 = vor.u32 %v1201, %v1197
        %v1203 = vrot.slane %v1202, 4
        %v1205 = vshll.u32 %v829, 16
        %v1207 = vrot.slane %v1205, 5
        %v1208 = vsel %vm968, %v1203, %v1207
        %v1210 = vshrl.u32 %v830, 16
        %v1212 = vrot.slane %v1210, 4
        %v1213 = vshll.u32 %v830, 16
        %v1215 = vrot.slane %v1213, 5
        %v1216 = vor.u32 %v1212, %v1215
        %v1217 = vrot.slane %v1216, 4
        %v1219 = vshll.u32 %v831, 16
        %v1221 = vrot.slane %v1219, 5
        %v1222 = vsel %vm968, %v1217, %v1221
        %v1223 = vshrl.u32 %v831, 16
        %v1225 = vrot.slane %v1223, 4
        %v1226 = vor.u32 %v1225, %v1221
        %v1227 = vrot.slane %v1226, 4
        %v1229 = vshll.u32 %v832, 16
        %v1231 = vrot.slane %v1229, 5
        %v1232 = vsel %vm968, %v1227, %v1231
        %v1234 = vshrl.u32 %v833, 16
        %v1236 = vrot.slane %v1234, 4
        %v1237 = vshll.u32 %v833, 16
        %v1239 = vrot.slane %v1237, 5
        %v1240 = vor.u32 %v1236, %v1239
        %v1241 = vrot.slane %v1240, 4
        %v1243 = vshll.u32 %v834, 16
        %v1245 = vrot.slane %v1243, 5
        %v1246 = vsel %vm968, %v1241, %v1245
        %v1247 = vshrl.u32 %v834, 16
        %v1249 = vrot.slane %v1247, 4
        %v1250 = vor.u32 %v1249, %v1245
        %v1251 = vrot.slane %v1250, 4
        %v1253 = vshll.u32 %v835, 16
        %v1255 = vrot.slane %v1253, 5
        %v1256 = vsel %vm968, %v1251, %v1255
        %v1258 = vshrl.u32 %v836, 16
        %v1260 = vrot.slane %v1258, 4
        %v1261 = vshll.u32 %v836, 16
        %v1263 = vrot.slane %v1261, 5
        %v1264 = vor.u32 %v1260, %v1263
        %v1265 = vrot.slane %v1264, 4
        %v1267 = vshll.u32 %v837, 16
        %v1269 = vrot.slane %v1267, 5
        %v1270 = vsel %vm968, %v1265, %v1269
        %v1271 = vshrl.u32 %v837, 16
        %v1273 = vrot.slane %v1271, 4
        %v1274 = vor.u32 %v1273, %v1269
        %v1275 = vrot.slane %v1274, 4
        %v1277 = vshll.u32 %v838, 16
        %v1279 = vrot.slane %v1277, 5
        %v1280 = vsel %vm968, %v1275, %v1279
        %v1282 = vshrl.u32 %v839, 16
        %v1284 = vrot.slane %v1282, 4
        %v1285 = vshll.u32 %v839, 16
        %v1287 = vrot.slane %v1285, 5
        %v1288 = vor.u32 %v1284, %v1287
        %v1289 = vrot.slane %v1288, 4
        %v1291 = vshll.u32 %v840, 16
        %v1293 = vrot.slane %v1291, 5
        %v1294 = vsel %vm968, %v1289, %v1293
        %v1295 = vshrl.u32 %v840, 16
        %v1297 = vrot.slane %v1295, 4
        %v1298 = vor.u32 %v1297, %v1293
        %v1299 = vrot.slane %v1298, 4
        %v1301 = vshll.u32 %v841, 16
        %v1303 = vrot.slane %v1301, 5
        %v1304 = vsel %vm968, %v1299, %v1303
        %v1306 = vshrl.u32 %v842, 16
        %v1308 = vrot.slane %v1306, 4
        %v1309 = vshll.u32 %v842, 16
        %v1311 = vrot.slane %v1309, 5
        %v1312 = vor.u32 %v1308, %v1311
        %v1313 = vrot.slane %v1312, 4
        %v1315 = vshll.u32 %v843, 16
        %v1317 = vrot.slane %v1315, 5
        %v1318 = vsel %vm968, %v1313, %v1317
        %v1319 = vshrl.u32 %v843, 16
        %v1321 = vrot.slane %v1319, 4
        %v1322 = vor.u32 %v1321, %v1317
        %v1323 = vrot.slane %v1322, 4
        %v1325 = vshll.u32 %v844, 16
        %v1327 = vrot.slane %v1325, 5
        %v1328 = vsel %vm968, %v1323, %v1327
        %v1330 = vshrl.u32 %v845, 16
        %v1332 = vrot.slane %v1330, 4
        %v1333 = vshll.u32 %v845, 16
        %v1335 = vrot.slane %v1333, 5
        %v1336 = vor.u32 %v1332, %v1335
        %v1337 = vrot.slane %v1336, 4
        %v1339 = vshll.u32 %v846, 16
        %v1341 = vrot.slane %v1339, 5
        %v1342 = vsel %vm968, %v1337, %v1341
        %v1343 = vshrl.u32 %v846, 16
        %v1345 = vrot.slane %v1343, 4
        %v1346 = vor.u32 %v1345, %v1341
        %v1347 = vrot.slane %v1346, 4
        %v1349 = vshll.u32 %v847, 16
        %v1351 = vrot.slane %v1349, 5
        %v1352 = vsel %vm968, %v1347, %v1351
        %v1353 = vunpack.c.l.b16 %v982
        %v1354 = vunpack.c.l.b16 %v992
        %v1355 = vunpack.c.l.b16 %v1006
        %v1356 = vunpack.c.l.b16 %v1016
        %v1357 = vunpack.c.l.b16 %v1030
        %v1358 = vunpack.c.l.b16 %v1040
        %v1359 = vunpack.c.l.b16 %v1054
        %v1360 = vunpack.c.l.b16 %v1064
        %v1361 = vunpack.c.l.b16 %v1078
        %v1362 = vunpack.c.l.b16 %v1088
        %v1363 = vunpack.c.l.b16 %v1102
        %v1364 = vunpack.c.l.b16 %v1112
        %v1365 = vunpack.c.l.b16 %v1126
        %v1366 = vunpack.c.l.b16 %v1136
        %v1367 = vunpack.c.l.b16 %v1150
        %v1368 = vunpack.c.l.b16 %v1160
        %v1369 = vunpack.c.l.b16 %v1174
        %v1370 = vunpack.c.l.b16 %v1184
        %v1371 = vunpack.c.l.b16 %v1198
        %v1372 = vunpack.c.l.b16 %v1208
        %v1373 = vunpack.c.l.b16 %v1222
        %v1374 = vunpack.c.l.b16 %v1232
        %v1375 = vunpack.c.l.b16 %v1246
        %v1376 = vunpack.c.l.b16 %v1256
        %v1377 = vunpack.c.l.b16 %v1270
        %v1378 = vunpack.c.l.b16 %v1280
        %v1379 = vunpack.c.l.b16 %v1294
        %v1380 = vunpack.c.l.b16 %v1304
        %v1381 = vunpack.c.l.b16 %v1318
        %v1382 = vunpack.c.l.b16 %v1328
        %v1383 = vunpack.c.l.b16 %v1342
        %v1384 = vunpack.c.l.b16 %v1352
        %v1385 = vpack.c.b16 %v1354, %v1353
        %v1386 = vpack.c.b16 %v1356, %v1355
        %v1387 = vpack.c.b16 %v1358, %v1357
        %v1388 = vpack.c.b16 %v1360, %v1359
        %v1389 = vpack.c.b16 %v1362, %v1361
        %v1390 = vpack.c.b16 %v1364, %v1363
        %v1391 = vpack.c.b16 %v1366, %v1365
        %v1392 = vpack.c.b16 %v1368, %v1367
        %v1393 = vpack.c.b16 %v1370, %v1369
        %v1394 = vpack.c.b16 %v1372, %v1371
        %v1395 = vpack.c.b16 %v1374, %v1373
        %v1396 = vpack.c.b16 %v1376, %v1375
        %v1397 = vpack.c.b16 %v1378, %v1377
        %v1398 = vpack.c.b16 %v1380, %v1379
        %v1399 = vpack.c.b16 %v1382, %v1381
        %v1400 = vpack.c.b16 %v1384, %v1383
        %1417 = vst [vmem:[#allocation3 + $0x8] sm:$0xff] %v1385
        %1418 = vst [vmem:[#allocation3 + $0x50] sm:$0xff] %v1386
        %1419 = vst [vmem:[#allocation3 + $0x98] sm:$0xff] %v1387
        %1420 = vst [vmem:[#allocation3 + $0xe0] sm:$0xff] %v1388
        %1421 = vst [vmem:[#allocation3 + $0x128] sm:$0xff] %v1389
        %1422 = vst [vmem:[#allocation3 + $0x170] sm:$0xff] %v1390
        %1423 = vst [vmem:[#allocation3 + $0x1b8] sm:$0xff] %v1391
        %1424 = vst [vmem:[#allocation3 + $0x200] sm:$0xff] %v1392
        %1425 = vst [vmem:[#allocation3 + $0x248] sm:$0xff] %v1393
        %1426 = vst [vmem:[#allocation3 + $0x290] sm:$0xff] %v1394
        %1427 = vst [vmem:[#allocation3 + $0x2d8] sm:$0xff] %v1395
        %1428 = vst [vmem:[#allocation3 + $0x320] sm:$0xff] %v1396
        %1429 = vst [vmem:[#allocation3 + $0x368] sm:$0xff] %v1397
        %1430 = vst [vmem:[#allocation3 + $0x3b0] sm:$0xff] %v1398
        %1431 = vst [vmem:[#allocation3 + $0x3f8] sm:$0xff] %v1399
        %1432 = vst [vmem:[#allocation3 + $0x440] sm:$0xff] %v1400
        %vm1449 = vcmask 1042432
        %vm1450 = vcmask 1046532
        %vm1451 = vmor %vm1449, %vm1450
        %v1452 = vrot.slane %v800, 5
        %v1453 = vrot.slane %v1452, 4
        %v1454 = vrot.slane %v801, 5
        %v1455 = vsel %vm1451, %v1453, %v1454
        %v1456 = vrot.slane %v1454, 4
        %v1457 = vrot.slane %v802, 5
        %v1458 = vsel %vm1451, %v1456, %v1457
        %v1459 = vrot.slane %v803, 5
        %v1460 = vrot.slane %v1459, 4
        %v1461 = vrot.slane %v804, 5
        %v1462 = vsel %vm1451, %v1460, %v1461
        %v1463 = vrot.slane %v1461, 4
        %v1464 = vrot.slane %v805, 5
        %v1465 = vsel %vm1451, %v1463, %v1464
        %v1466 = vrot.slane %v806, 5
        %v1467 = vrot.slane %v1466, 4
        %v1468 = vrot.slane %v807, 5
        %v1469 = vsel %vm1451, %v1467, %v1468
        %v1470 = vrot.slane %v1468, 4
        %v1471 = vrot.slane %v808, 5
        %v1472 = vsel %vm1451, %v1470, %v1471
        %v1473 = vrot.slane %v809, 5
        %v1474 = vrot.slane %v1473, 4
        %v1475 = vrot.slane %v810, 5
        %v1476 = vsel %vm1451, %v1474, %v1475
        %v1477 = vrot.slane %v1475, 4
        %v1478 = vrot.slane %v811, 5
        %v1479 = vsel %vm1451, %v1477, %v1478
        %v1480 = vrot.slane %v812, 5
        %v1481 = vrot.slane %v1480, 4
        %v1482 = vrot.slane %v813, 5
        %v1483 = vsel %vm1451, %v1481, %v1482
        %v1484 = vrot.slane %v1482, 4
        %v1485 = vrot.slane %v814, 5
        %v1486 = vsel %vm1451, %v1484, %v1485
        %v1487 = vrot.slane %v815, 5
        %v1488 = vrot.slane %v1487, 4
        %v1489 = vrot.slane %v816, 5
        %v1490 = vsel %vm1451, %v1488, %v1489
        %v1491 = vrot.slane %v1489, 4
        %v1492 = vrot.slane %v817, 5
        %v1493 = vsel %vm1451, %v1491, %v1492
        %v1494 = vrot.slane %v818, 5
        %v1495 = vrot.slane %v1494, 4
        %v1496 = vrot.slane %v819, 5
        %v1497 = vsel %vm1451, %v1495, %v1496
        %v1498 = vrot.slane %v1496, 4
        %v1499 = vrot.slane %v820, 5
        %v1500 = vsel %vm1451, %v1498, %v1499
        %v1501 = vrot.slane %v821, 5
        %v1502 = vrot.slane %v1501, 4
        %v1503 = vrot.slane %v822, 5
        %v1504 = vsel %vm1451, %v1502, %v1503
        %v1505 = vrot.slane %v1503, 4
        %v1506 = vrot.slane %v823, 5
        %v1507 = vsel %vm1451, %v1505, %v1506
        %v1508 = vrot.slane %v824, 5
        %v1509 = vrot.slane %v1508, 4
        %v1510 = vrot.slane %v825, 5
        %v1511 = vsel %vm1451, %v1509, %v1510
        %v1512 = vrot.slane %v1510, 4
        %v1513 = vrot.slane %v826, 5
        %v1514 = vsel %vm1451, %v1512, %v1513
        %v1515 = vrot.slane %v827, 5
        %v1516 = vrot.slane %v1515, 4
        %v1517 = vrot.slane %v828, 5
        %v1518 = vsel %vm1451, %v1516, %v1517
        %v1519 = vrot.slane %v1517, 4
        %v1520 = vrot.slane %v829, 5
        %v1521 = vsel %vm1451, %v1519, %v1520
        %v1522 = vrot.slane %v830, 5
        %v1523 = vrot.slane %v1522, 4
        %v1524 = vrot.slane %v831, 5
        %v1525 = vsel %vm1451, %v1523, %v1524
        %v1526 = vrot.slane %v1524, 4
        %v1527 = vrot.slane %v832, 5
        %v1528 = vsel %vm1451, %v1526, %v1527
        %v1529 = vrot.slane %v833, 5
        %v1530 = vrot.slane %v1529, 4
        %v1531 = vrot.slane %v834, 5
        %v1532 = vsel %vm1451, %v1530, %v1531
        %v1533 = vrot.slane %v1531, 4
        %v1534 = vrot.slane %v835, 5
        %v1535 = vsel %vm1451, %v1533, %v1534
        %v1536 = vrot.slane %v836, 5
        %v1537 = vrot.slane %v1536, 4
        %v1538 = vrot.slane %v837, 5
        %v1539 = vsel %vm1451, %v1537, %v1538
        %v1540 = vrot.slane %v1538, 4
        %v1541 = vrot.slane %v838, 5
        %v1542 = vsel %vm1451, %v1540, %v1541
        %v1543 = vrot.slane %v839, 5
        %v1544 = vrot.slane %v1543, 4
        %v1545 = vrot.slane %v840, 5
        %v1546 = vsel %vm1451, %v1544, %v1545
        %v1547 = vrot.slane %v1545, 4
        %v1548 = vrot.slane %v841, 5
        %v1549 = vsel %vm1451, %v1547, %v1548
        %v1550 = vrot.slane %v842, 5
        %v1551 = vrot.slane %v1550, 4
        %v1552 = vrot.slane %v843, 5
        %v1553 = vsel %vm1451, %v1551, %v1552
        %v1554 = vrot.slane %v1552, 4
        %v1555 = vrot.slane %v844, 5
        %v1556 = vsel %vm1451, %v1554, %v1555
        %v1557 = vrot.slane %v845, 5
        %v1558 = vrot.slane %v1557, 4
        %v1559 = vrot.slane %v846, 5
        %v1560 = vsel %vm1451, %v1558, %v1559
        %v1561 = vrot.slane %v1559, 4
        %v1562 = vrot.slane %v847, 5
        %v1563 = vsel %vm1451, %v1561, %v1562
        %v1564 = vunpack.c.l.b16 %v1455
        %v1565 = vunpack.c.l.b16 %v1458
        %v1566 = vunpack.c.l.b16 %v1462
        %v1567 = vunpack.c.l.b16 %v1465
        %v1568 = vunpack.c.l.b16 %v1469
        %v1569 = vunpack.c.l.b16 %v1472
        %v1570 = vunpack.c.l.b16 %v1476
        %v1571 = vunpack.c.l.b16 %v1479
        %v1572 = vunpack.c.l.b16 %v1483
        %v1573 = vunpack.c.l.b16 %v1486
        %v1574 = vunpack.c.l.b16 %v1490
        %v1575 = vunpack.c.l.b16 %v1493
        %v1576 = vunpack.c.l.b16 %v1497
        %v1577 = vunpack.c.l.b16 %v1500
        %v1578 = vunpack.c.l.b16 %v1504
        %v1579 = vunpack.c.l.b16 %v1507
        %v1580 = vunpack.c.l.b16 %v1511
        %v1581 = vunpack.c.l.b16 %v1514
        %v1582 = vunpack.c.l.b16 %v1518
        %v1583 = vunpack.c.l.b16 %v1521
        %v1584 = vunpack.c.l.b16 %v1525
        %v1585 = vunpack.c.l.b16 %v1528
        %v1586 = vunpack.c.l.b16 %v1532
        %v1587 = vunpack.c.l.b16 %v1535
        %v1588 = vunpack.c.l.b16 %v1539
        %v1589 = vunpack.c.l.b16 %v1542
        %v1590 = vunpack.c.l.b16 %v1546
        %v1591 = vunpack.c.l.b16 %v1549
        %v1592 = vunpack.c.l.b16 %v1553
        %v1593 = vunpack.c.l.b16 %v1556
        %v1594 = vunpack.c.l.b16 %v1560
        %v1595 = vunpack.c.l.b16 %v1563
        %v1596 = vpack.c.b16 %v1565, %v1564
        %v1597 = vpack.c.b16 %v1567, %v1566
        %v1598 = vpack.c.b16 %v1569, %v1568
        %v1599 = vpack.c.b16 %v1571, %v1570
        %v1600 = vpack.c.b16 %v1573, %v1572
        %v1601 = vpack.c.b16 %v1575, %v1574
        %v1602 = vpack.c.b16 %v1577, %v1576
        %v1603 = vpack.c.b16 %v1579, %v1578
        %v1604 = vpack.c.b16 %v1581, %v1580
        %v1605 = vpack.c.b16 %v1583, %v1582
        %v1606 = vpack.c.b16 %v1585, %v1584
        %v1607 = vpack.c.b16 %v1587, %v1586
        %v1608 = vpack.c.b16 %v1589, %v1588
        %v1609 = vpack.c.b16 %v1591, %v1590
        %v1610 = vpack.c.b16 %v1593, %v1592
        %v1611 = vpack.c.b16 %v1595, %v1594
        %1628 = vst [vmem:[#allocation3 + $0x10] sm:$0xff] %v1596
        %1629 = vst [vmem:[#allocation3 + $0x58] sm:$0xff] %v1597
        %1630 = vst [vmem:[#allocation3 + $0xa0] sm:$0xff] %v1598
        %1631 = vst [vmem:[#allocation3 + $0xe8] sm:$0xff] %v1599
        %1632 = vst [vmem:[#allocation3 + $0x130] sm:$0xff] %v1600
        %1633 = vst [vmem:[#allocation3 + $0x178] sm:$0xff] %v1601
        %1634 = vst [vmem:[#allocation3 + $0x1c0] sm:$0xff] %v1602
        %1635 = vst [vmem:[#allocation3 + $0x208] sm:$0xff] %v1603
        %1636 = vst [vmem:[#allocation3 + $0x250] sm:$0xff] %v1604
        %1637 = vst [vmem:[#allocation3 + $0x298] sm:$0xff] %v1605
        %1638 = vst [vmem:[#allocation3 + $0x2e0] sm:$0xff] %v1606
        %1639 = vst [vmem:[#allocation3 + $0x328] sm:$0xff] %v1607
        %1640 = vst [vmem:[#allocation3 + $0x370] sm:$0xff] %v1608
        %1641 = vst [vmem:[#allocation3 + $0x3b8] sm:$0xff] %v1609
        %1642 = vst [vmem:[#allocation3 + $0x400] sm:$0xff] %v1610
        %1643 = vst [vmem:[#allocation3 + $0x448] sm:$0xff] %v1611
        %v1646 = vunpack.c.l.b16 %v848
        %v1647 = vunpack.c.l.b16 %v849
        %v1648 = vpack.c.b16 %v1647, %v1646
        %1650 = vst [vmem:[#allocation3 + $0x18] sm:$0xff] %v919
        %1651 = vst [vmem:[#allocation3 + $0x60] sm:$0xff] %v920
        %1652 = vst [vmem:[#allocation3 + $0xa8] sm:$0xff] %v921
        %1653 = vst [vmem:[#allocation3 + $0xf0] sm:$0xff] %v922
        %1654 = vst [vmem:[#allocation3 + $0x138] sm:$0xff] %v923
        %1655 = vst [vmem:[#allocation3 + $0x180] sm:$0xff] %v924
        %1656 = vst [vmem:[#allocation3 + $0x1c8] sm:$0xff] %v925
        %1657 = vst [vmem:[#allocation3 + $0x210] sm:$0xff] %v926
        %1658 = vst [vmem:[#allocation3 + $0x258] sm:$0xff] %v927
        %1659 = vst [vmem:[#allocation3 + $0x2a0] sm:$0xff] %v928
        %1660 = vst [vmem:[#allocation3 + $0x2e8] sm:$0xff] %v929
        %1661 = vst [vmem:[#allocation3 + $0x330] sm:$0xff] %v930
        %1662 = vst [vmem:[#allocation3 + $0x378] sm:$0xff] %v931
        %1663 = vst [vmem:[#allocation3 + $0x3c0] sm:$0xff] %v932
        %1664 = vst [vmem:[#allocation3 + $0x408] sm:$0xff] %v933
        %1665 = vst [vmem:[#allocation3 + $0x450] sm:$0xff] %v1648
        %v1667 = vshrl.u32 %v848, 16
        %v1669 = vrot.slane %v1667, 4
        %v1670 = vshll.u32 %v848, 16
        %v1672 = vrot.slane %v1670, 5
        %v1673 = vor.u32 %v1669, %v1672
        %v1674 = vrot.slane %v1673, 4
        %v1676 = vshll.u32 %v849, 16
        %v1678 = vrot.slane %v1676, 5
        %v1679 = vsel %vm968, %v1674, %v1678
        %v1680 = vshrl.u32 %v849, 16
        %v1682 = vrot.slane %v1680, 4
        %v1683 = vor.u32 %v1682, %v1678
        %v1684 = vrot.slane %v1683, 4
        %v1686 = vshll.u32 %v850, 16
        %v1688 = vrot.slane %v1686, 5
        %v1689 = vsel %vm968, %v1684, %v1688
        %v1690 = vunpack.c.l.b16 %v1679
        %v1691 = vunpack.c.l.b16 %v1689
        %v1692 = vpack.c.b16 %v1691, %v1690
        %1694 = vst [vmem:[#allocation3 + $0x20] sm:$0xff] %v1386
        %1695 = vst [vmem:[#allocation3 + $0x68] sm:$0xff] %v1387
        %1696 = vst [vmem:[#allocation3 + $0xb0] sm:$0xff] %v1388
        %1697 = vst [vmem:[#allocation3 + $0xf8] sm:$0xff] %v1389
        %1698 = vst [vmem:[#allocation3 + $0x140] sm:$0xff] %v1390
        %1699 = vst [vmem:[#allocation3 + $0x188] sm:$0xff] %v1391
        %1700 = vst [vmem:[#allocation3 + $0x1d0] sm:$0xff] %v1392
        %1701 = vst [vmem:[#allocation3 + $0x218] sm:$0xff] %v1393
        %1702 = vst [vmem:[#allocation3 + $0x260] sm:$0xff] %v1394
        %1703 = vst [vmem:[#allocation3 + $0x2a8] sm:$0xff] %v1395
        %1704 = vst [vmem:[#allocation3 + $0x2f0] sm:$0xff] %v1396
        %1705 = vst [vmem:[#allocation3 + $0x338] sm:$0xff] %v1397
        %1706 = vst [vmem:[#allocation3 + $0x380] sm:$0xff] %v1398
        %1707 = vst [vmem:[#allocation3 + $0x3c8] sm:$0xff] %v1399
        %1708 = vst [vmem:[#allocation3 + $0x410] sm:$0xff] %v1400
        %1709 = vst [vmem:[#allocation3 + $0x458] sm:$0xff] %v1692
        %v1711 = vrot.slane %v848, 5
        %v1712 = vrot.slane %v1711, 4
        %v1713 = vrot.slane %v849, 5
        %v1714 = vsel %vm1451, %v1712, %v1713
        %v1715 = vrot.slane %v1713, 4
        %v1716 = vrot.slane %v850, 5
        %v1717 = vsel %vm1451, %v1715, %v1716
        %v1718 = vunpack.c.l.b16 %v1714
        %v1719 = vunpack.c.l.b16 %v1717
        %v1720 = vpack.c.b16 %v1719, %v1718
        %1722 = vst [vmem:[#allocation3 + $0x28] sm:$0xff] %v1597
        %1723 = vst [vmem:[#allocation3 + $0x70] sm:$0xff] %v1598
        %1724 = vst [vmem:[#allocation3 + $0xb8] sm:$0xff] %v1599
        %1725 = vst [vmem:[#allocation3 + $0x100] sm:$0xff] %v1600
        %1726 = vst [vmem:[#allocation3 + $0x148] sm:$0xff] %v1601
        %1727 = vst [vmem:[#allocation3 + $0x190] sm:$0xff] %v1602
        %1728 = vst [vmem:[#allocation3 + $0x1d8] sm:$0xff] %v1603
        %1729 = vst [vmem:[#allocation3 + $0x220] sm:$0xff] %v1604
        %1730 = vst [vmem:[#allocation3 + $0x268] sm:$0xff] %v1605
        %1731 = vst [vmem:[#allocation3 + $0x2b0] sm:$0xff] %v1606
        %1732 = vst [vmem:[#allocation3 + $0x2f8] sm:$0xff] %v1607
        %1733 = vst [vmem:[#allocation3 + $0x340] sm:$0xff] %v1608
        %1734 = vst [vmem:[#allocation3 + $0x388] sm:$0xff] %v1609
        %1735 = vst [vmem:[#allocation3 + $0x3d0] sm:$0xff] %v1610
        %1736 = vst [vmem:[#allocation3 + $0x418] sm:$0xff] %v1611
        %1737 = vst [vmem:[#allocation3 + $0x460] sm:$0xff] %v1720
        %v1740 = vunpack.c.l.b16 %v851
        %v1741 = vunpack.c.l.b16 %v852
        %v1742 = vpack.c.b16 %v1741, %v1740
        %1744 = vst [vmem:[#allocation3 + $0x30] sm:$0xff] %v920
        %1745 = vst [vmem:[#allocation3 + $0x78] sm:$0xff] %v921
        %1746 = vst [vmem:[#allocation3 + $0xc0] sm:$0xff] %v922
        %1747 = vst [vmem:[#allocation3 + $0x108] sm:$0xff] %v923
        %1748 = vst [vmem:[#allocation3 + $0x150] sm:$0xff] %v924
        %1749 = vst [vmem:[#allocation3 + $0x198] sm:$0xff] %v925
        %1750 = vst [vmem:[#allocation3 + $0x1e0] sm:$0xff] %v926
        %1751 = vst [vmem:[#allocation3 + $0x228] sm:$0xff] %v927
        %1752 = vst [vmem:[#allocation3 + $0x270] sm:$0xff] %v928
        %1753 = vst [vmem:[#allocation3 + $0x2b8] sm:$0xff] %v929
        %1754 = vst [vmem:[#allocation3 + $0x300] sm:$0xff] %v930
        %1755 = vst [vmem:[#allocation3 + $0x348] sm:$0xff] %v931
        %1756 = vst [vmem:[#allocation3 + $0x390] sm:$0xff] %v932
        %1757 = vst [vmem:[#allocation3 + $0x3d8] sm:$0xff] %v933
        %1758 = vst [vmem:[#allocation3 + $0x420] sm:$0xff] %v1648
        %1759 = vst [vmem:[#allocation3 + $0x468] sm:$0xff] %v1742
        %v1761 = vshrl.u32 %v851, 16
        %v1763 = vrot.slane %v1761, 4
        %v1764 = vshll.u32 %v851, 16
        %v1766 = vrot.slane %v1764, 5
        %v1767 = vor.u32 %v1763, %v1766
        %v1768 = vrot.slane %v1767, 4
        %v1770 = vshll.u32 %v852, 16
        %v1772 = vrot.slane %v1770, 5
        %v1773 = vsel %vm968, %v1768, %v1772
        %v1774 = vshrl.u32 %v852, 16
        %v1776 = vrot.slane %v1774, 4
        %v1777 = vor.u32 %v1776, %v1772
        %v1778 = vrot.slane %v1777, 4
        %v1780 = vshll.u32 %v853, 16
        %v1782 = vrot.slane %v1780, 5
        %v1783 = vsel %vm968, %v1778, %v1782
        %v1784 = vunpack.c.l.b16 %v1773
        %v1785 = vunpack.c.l.b16 %v1783
        %v1786 = vpack.c.b16 %v1785, %v1784
        %1788 = vst [vmem:[#allocation3 + $0x38] sm:$0xff] %v1387
        %1789 = vst [vmem:[#allocation3 + $0x80] sm:$0xff] %v1388
        %1790 = vst [vmem:[#allocation3 + $0xc8] sm:$0xff] %v1389
        %1791 = vst [vmem:[#allocation3 + $0x110] sm:$0xff] %v1390
        %1792 = vst [vmem:[#allocation3 + $0x158] sm:$0xff] %v1391
        %1793 = vst [vmem:[#allocation3 + $0x1a0] sm:$0xff] %v1392
        %1794 = vst [vmem:[#allocation3 + $0x1e8] sm:$0xff] %v1393
        %1795 = vst [vmem:[#allocation3 + $0x230] sm:$0xff] %v1394
        %1796 = vst [vmem:[#allocation3 + $0x278] sm:$0xff] %v1395
        %1797 = vst [vmem:[#allocation3 + $0x2c0] sm:$0xff] %v1396
        %1798 = vst [vmem:[#allocation3 + $0x308] sm:$0xff] %v1397
        %1799 = vst [vmem:[#allocation3 + $0x350] sm:$0xff] %v1398
        %1800 = vst [vmem:[#allocation3 + $0x398] sm:$0xff] %v1399
        %1801 = vst [vmem:[#allocation3 + $0x3e0] sm:$0xff] %v1400
        %1802 = vst [vmem:[#allocation3 + $0x428] sm:$0xff] %v1692
        %1803 = vst [vmem:[#allocation3 + $0x470] sm:$0xff] %v1786
        %v1805 = vrot.slane %v851, 5
        %v1806 = vrot.slane %v1805, 4
        %v1807 = vrot.slane %v852, 5
        %v1808 = vsel %vm1451, %v1806, %v1807
        %v1809 = vrot.slane %v1807, 4
        %v1810 = vrot.slane %v853, 5
        %v1811 = vsel %vm1451, %v1809, %v1810
        %v1812 = vunpack.c.l.b16 %v1808
        %v1813 = vunpack.c.l.b16 %v1811
        %v1814 = vpack.c.b16 %v1813, %v1812
        %1816 = vst [vmem:[#allocation3 + $0x40] sm:$0xff] %v1598
        %1817 = vst [vmem:[#allocation3 + $0x88] sm:$0xff] %v1599
        %1818 = vst [vmem:[#allocation3 + $0xd0] sm:$0xff] %v1600
        %1819 = vst [vmem:[#allocation3 + $0x118] sm:$0xff] %v1601
        %1820 = vst [vmem:[#allocation3 + $0x160] sm:$0xff] %v1602
        %1821 = vst [vmem:[#allocation3 + $0x1a8] sm:$0xff] %v1603
        %1822 = vst [vmem:[#allocation3 + $0x1f0] sm:$0xff] %v1604
        %1823 = vst [vmem:[#allocation3 + $0x238] sm:$0xff] %v1605
        %1824 = vst [vmem:[#allocation3 + $0x280] sm:$0xff] %v1606
        %1825 = vst [vmem:[#allocation3 + $0x2c8] sm:$0xff] %v1607
        %1826 = vst [vmem:[#allocation3 + $0x310] sm:$0xff] %v1608
        %1827 = vst [vmem:[#allocation3 + $0x358] sm:$0xff] %v1609
        %1828 = vst [vmem:[#allocation3 + $0x3a0] sm:$0xff] %v1610
        %1829 = vst [vmem:[#allocation3 + $0x3e8] sm:$0xff] %v1611
        %1830 = vst [vmem:[#allocation3 + $0x430] sm:$0xff] %v1720
        %1831 = vst [vmem:[#allocation3 + $0x478] sm:$0xff] %v1814
        %v1832 = vld [vmem:[#allocation3] sm:$0xff]
        %v1833 = vld [vmem:[#allocation3 + $0x8] sm:$0xff]
        %v1834 = vld [vmem:[#allocation3 + $0x10] sm:$0xff]
        %v1835 = vld [vmem:[#allocation3 + $0x18] sm:$0xff]
        %v1836 = vld [vmem:[#allocation3 + $0x20] sm:$0xff]
        %v1837 = vld [vmem:[#allocation3 + $0x28] sm:$0xff]
        %v1838 = vld [vmem:[#allocation3 + $0x30] sm:$0xff]
        %v1839 = vld [vmem:[#allocation3 + $0x38] sm:$0xff]
        %v1840 = vld [vmem:[#allocation3 + $0x40] sm:$0xff]
        %v1841 = vld [vmem:[#allocation3 + $0x48] sm:$0xff]
        %v1842 = vld [vmem:[#allocation3 + $0x50] sm:$0xff]
        %v1843 = vld [vmem:[#allocation3 + $0x58] sm:$0xff]
        %v1844 = vld [vmem:[#allocation3 + $0x60] sm:$0xff]
        %v1845 = vld [vmem:[#allocation3 + $0x68] sm:$0xff]
        %v1846 = vld [vmem:[#allocation3 + $0x70] sm:$0xff]
        %v1847 = vld [vmem:[#allocation3 + $0x78] sm:$0xff]
        %v1848 = vld [vmem:[#allocation3 + $0x80] sm:$0xff]
        %v1849 = vld [vmem:[#allocation3 + $0x88] sm:$0xff]
        %v1850 = vld [vmem:[#allocation3 + $0x90] sm:$0xff]
        %v1851 = vld [vmem:[#allocation3 + $0x98] sm:$0xff]
        %v1852 = vld [vmem:[#allocation3 + $0xa0] sm:$0xff]
        %v1853 = vld [vmem:[#allocation3 + $0xa8] sm:$0xff]
        %v1854 = vld [vmem:[#allocation3 + $0xb0] sm:$0xff]
        %v1855 = vld [vmem:[#allocation3 + $0xb8] sm:$0xff]
        %v1856 = vld [vmem:[#allocation3 + $0xc0] sm:$0xff]
        %v1857 = vld [vmem:[#allocation3 + $0xc8] sm:$0xff]
        %v1858 = vld [vmem:[#allocation3 + $0xd0] sm:$0xff]
        %v1859 = vld [vmem:[#allocation3 + $0xd8] sm:$0xff]
        %v1860 = vld [vmem:[#allocation3 + $0xe0] sm:$0xff]
        %v1861 = vld [vmem:[#allocation3 + $0xe8] sm:$0xff]
        %v1862 = vld [vmem:[#allocation3 + $0xf0] sm:$0xff]
        %v1863 = vld [vmem:[#allocation3 + $0xf8] sm:$0xff]
        %v1864 = vld [vmem:[#allocation3 + $0x100] sm:$0xff]
        %v1865 = vld [vmem:[#allocation3 + $0x108] sm:$0xff]
        %v1866 = vld [vmem:[#allocation3 + $0x110] sm:$0xff]
        %v1867 = vld [vmem:[#allocation3 + $0x118] sm:$0xff]
        %v1868 = vld [vmem:[#allocation3 + $0x120] sm:$0xff]
        %v1869 = vld [vmem:[#allocation3 + $0x128] sm:$0xff]
        %v1870 = vld [vmem:[#allocation3 + $0x130] sm:$0xff]
        %v1871 = vld [vmem:[#allocation3 + $0x138] sm:$0xff]
        %v1872 = vld [vmem:[#allocation3 + $0x140] sm:$0xff]
        %v1873 = vld [vmem:[#allocation3 + $0x148] sm:$0xff]
        %v1874 = vld [vmem:[#allocation3 + $0x150] sm:$0xff]
        %v1875 = vld [vmem:[#allocation3 + $0x158] sm:$0xff]
        %v1876 = vld [vmem:[#allocation3 + $0x160] sm:$0xff]
        %v1877 = vld [vmem:[#allocation3 + $0x168] sm:$0xff]
        %v1878 = vld [vmem:[#allocation3 + $0x170] sm:$0xff]
        %v1879 = vld [vmem:[#allocation3 + $0x178] sm:$0xff]
        %v1880 = vld [vmem:[#allocation3 + $0x180] sm:$0xff]
        %v1881 = vld [vmem:[#allocation3 + $0x188] sm:$0xff]
        %v1882 = vld [vmem:[#allocation3 + $0x190] sm:$0xff]
        %v1883 = vld [vmem:[#allocation3 + $0x198] sm:$0xff]
        %v1884 = vld [vmem:[#allocation3 + $0x1a0] sm:$0xff]
        %v1885 = vld [vmem:[#allocation3 + $0x1a8] sm:$0xff]
        %v1886 = vld [vmem:[#allocation3 + $0x1b0] sm:$0xff]
        %v1887 = vld [vmem:[#allocation3 + $0x1b8] sm:$0xff]
        %v1888 = vld [vmem:[#allocation3 + $0x1c0] sm:$0xff]
        %v1889 = vld [vmem:[#allocation3 + $0x1c8] sm:$0xff]
        %v1890 = vld [vmem:[#allocation3 + $0x1d0] sm:$0xff]
        %v1891 = vld [vmem:[#allocation3 + $0x1d8] sm:$0xff]
        %v1892 = vld [vmem:[#allocation3 + $0x1e0] sm:$0xff]
        %v1893 = vld [vmem:[#allocation3 + $0x1e8] sm:$0xff]
        %v1894 = vld [vmem:[#allocation3 + $0x1f0] sm:$0xff]
        %v1895 = vld [vmem:[#allocation3 + $0x1f8] sm:$0xff]
        %v1896 = vld [vmem:[#allocation3 + $0x200] sm:$0xff]
        %v1897 = vld [vmem:[#allocation3 + $0x208] sm:$0xff]
        %v1898 = vld [vmem:[#allocation3 + $0x210] sm:$0xff]
        %v1899 = vld [vmem:[#allocation3 + $0x218] sm:$0xff]
        %v1900 = vld [vmem:[#allocation3 + $0x220] sm:$0xff]
        %v1901 = vld [vmem:[#allocation3 + $0x228] sm:$0xff]
        %v1902 = vld [vmem:[#allocation3 + $0x230] sm:$0xff]
        %v1903 = vld [vmem:[#allocation3 + $0x238] sm:$0xff]
        %v1904 = vld [vmem:[#allocation3 + $0x240] sm:$0xff]
        %v1905 = vld [vmem:[#allocation3 + $0x248] sm:$0xff]
        %v1906 = vld [vmem:[#allocation3 + $0x250] sm:$0xff]
        %v1907 = vld [vmem:[#allocation3 + $0x258] sm:$0xff]
        %v1908 = vld [vmem:[#allocation3 + $0x260] sm:$0xff]
        %v1909 = vld [vmem:[#allocation3 + $0x268] sm:$0xff]
        %v1910 = vld [vmem:[#allocation3 + $0x270] sm:$0xff]
        %v1911 = vld [vmem:[#allocation3 + $0x278] sm:$0xff]
        %v1912 = vld [vmem:[#allocation3 + $0x280] sm:$0xff]
        %v1913 = vld [vmem:[#allocation3 + $0x288] sm:$0xff]
        %v1914 = vld [vmem:[#allocation3 + $0x290] sm:$0xff]
        %v1915 = vld [vmem:[#allocation3 + $0x298] sm:$0xff]
        %v1916 = vld [vmem:[#allocation3 + $0x2a0] sm:$0xff]
        %v1917 = vld [vmem:[#allocation3 + $0x2a8] sm:$0xff]
        %v1918 = vld [vmem:[#allocation3 + $0x2b0] sm:$0xff]
        %v1919 = vld [vmem:[#allocation3 + $0x2b8] sm:$0xff]
        %v1920 = vld [vmem:[#allocation3 + $0x2c0] sm:$0xff]
        %v1921 = vld [vmem:[#allocation3 + $0x2c8] sm:$0xff]
        %v1922 = vld [vmem:[#allocation3 + $0x2d0] sm:$0xff]
        %v1923 = vld [vmem:[#allocation3 + $0x2d8] sm:$0xff]
        %v1924 = vld [vmem:[#allocation3 + $0x2e0] sm:$0xff]
        %v1925 = vld [vmem:[#allocation3 + $0x2e8] sm:$0xff]
        %v1926 = vld [vmem:[#allocation3 + $0x2f0] sm:$0xff]
        %v1927 = vld [vmem:[#allocation3 + $0x2f8] sm:$0xff]
        %v1928 = vld [vmem:[#allocation3 + $0x300] sm:$0xff]
        %v1929 = vld [vmem:[#allocation3 + $0x308] sm:$0xff]
        %v1930 = vld [vmem:[#allocation3 + $0x310] sm:$0xff]
        %v1931 = vld [vmem:[#allocation3 + $0x318] sm:$0xff]
        %v1932 = vld [vmem:[#allocation3 + $0x320] sm:$0xff]
        %v1933 = vld [vmem:[#allocation3 + $0x328] sm:$0xff]
        %v1934 = vld [vmem:[#allocation3 + $0x330] sm:$0xff]
        %v1935 = vld [vmem:[#allocation3 + $0x338] sm:$0xff]
        %v1936 = vld [vmem:[#allocation3 + $0x340] sm:$0xff]
        %v1937 = vld [vmem:[#allocation3 + $0x348] sm:$0xff]
        %v1938 = vld [vmem:[#allocation3 + $0x350] sm:$0xff]
        %v1939 = vld [vmem:[#allocation3 + $0x358] sm:$0xff]
        %v1940 = vld [vmem:[#allocation3 + $0x360] sm:$0xff]
        %v1941 = vld [vmem:[#allocation3 + $0x368] sm:$0xff]
        %v1942 = vld [vmem:[#allocation3 + $0x370] sm:$0xff]
        %v1943 = vld [vmem:[#allocation3 + $0x378] sm:$0xff]
        %v1944 = vld [vmem:[#allocation3 + $0x380] sm:$0xff]
        %v1945 = vld [vmem:[#allocation3 + $0x388] sm:$0xff]
        %v1946 = vld [vmem:[#allocation3 + $0x390] sm:$0xff]
        %v1947 = vld [vmem:[#allocation3 + $0x398] sm:$0xff]
        %v1948 = vld [vmem:[#allocation3 + $0x3a0] sm:$0xff]
        %v1949 = vld [vmem:[#allocation3 + $0x3a8] sm:$0xff]
        %v1950 = vld [vmem:[#allocation3 + $0x3b0] sm:$0xff]
        %v1951 = vld [vmem:[#allocation3 + $0x3b8] sm:$0xff]
        %v1952 = vld [vmem:[#allocation3 + $0x3c0] sm:$0xff]
        %v1953 = vld [vmem:[#allocation3 + $0x3c8] sm:$0xff]
        %v1954 = vld [vmem:[#allocation3 + $0x3d0] sm:$0xff]
        %v1955 = vld [vmem:[#allocation3 + $0x3d8] sm:$0xff]
        %v1956 = vld [vmem:[#allocation3 + $0x3e0] sm:$0xff]
        %v1957 = vld [vmem:[#allocation3 + $0x3e8] sm:$0xff]
        %v1958 = vld [vmem:[#allocation3 + $0x3f0] sm:$0xff]
        %v1959 = vld [vmem:[#allocation3 + $0x3f8] sm:$0xff]
        %v1960 = vld [vmem:[#allocation3 + $0x400] sm:$0xff]
        %v1961 = vld [vmem:[#allocation3 + $0x408] sm:$0xff]
        %v1962 = vld [vmem:[#allocation3 + $0x410] sm:$0xff]
        %v1963 = vld [vmem:[#allocation3 + $0x418] sm:$0xff]
        %v1964 = vld [vmem:[#allocation3 + $0x420] sm:$0xff]
        %v1965 = vld [vmem:[#allocation3 + $0x428] sm:$0xff]
        %v1966 = vld [vmem:[#allocation3 + $0x430] sm:$0xff]
        %v1967 = vld [vmem:[#allocation3 + $0x438] sm:$0xff]
        %v1968 = vld [vmem:[#allocation3 + $0x440] sm:$0xff]
        %v1969 = vld [vmem:[#allocation3 + $0x448] sm:$0xff]
        %v1970 = vld [vmem:[#allocation3 + $0x450] sm:$0xff]
        %v1971 = vld [vmem:[#allocation3 + $0x458] sm:$0xff]
        %v1972 = vld [vmem:[#allocation3 + $0x460] sm:$0xff]
        %v1973 = vld [vmem:[#allocation3 + $0x468] sm:$0xff]
        %v1974 = vld [vmem:[#allocation3 + $0x470] sm:$0xff]
        %v1975 = vld [vmem:[#allocation3 + $0x478] sm:$0xff]
        %v1976 = vld [vmem:[#allocation7] sm:$0xf]
        %v1977 = vld [vmem:[#allocation7 + $0x4] sm:$0xf]
        %v1978 = vld [vmem:[#allocation7 + $0x8] sm:$0xf]
        %v1979 = vld [vmem:[#allocation7 + $0xc] sm:$0xf]
        %v1980 = vld [vmem:[#allocation7 + $0x10] sm:$0xf]
        %v1981 = vld [vmem:[#allocation7 + $0x14] sm:$0xf]
        %v1982 = vld [vmem:[#allocation7 + $0x18] sm:$0xf]
        %v1983 = vld [vmem:[#allocation7 + $0x1c] sm:$0xf]
        %v1984 = vld [vmem:[#allocation7 + $0x20] sm:$0xf]
        %v1985 = vld [vmem:[#allocation7 + $0x24] sm:$0xf]
        %v1986 = vld [vmem:[#allocation7 + $0x28] sm:$0xf]
        %v1987 = vld [vmem:[#allocation7 + $0x2c] sm:$0xf]
        %v1988 = vld [vmem:[#allocation7 + $0x30] sm:$0xf]
        %v1989 = vld [vmem:[#allocation7 + $0x34] sm:$0xf]
        %v1990 = vld [vmem:[#allocation7 + $0x38] sm:$0xf]
        %v1991 = vld [vmem:[#allocation7 + $0x3c] sm:$0xf]
        %v1992 = vld [vmem:[#allocation7 + $0x40] sm:$0xf]
        %v1993 = vld [vmem:[#allocation7 + $0x44] sm:$0xf]
        %v1994 = vld [vmem:[#allocation7 + $0x48] sm:$0xf]
        %v1995 = vld [vmem:[#allocation7 + $0x4c] sm:$0xf]
        %v1996 = vld [vmem:[#allocation7 + $0x50] sm:$0xf]
        %v1997 = vld [vmem:[#allocation7 + $0x54] sm:$0xf]
        %v1998 = vld [vmem:[#allocation7 + $0x58] sm:$0xf]
        %v1999 = vld [vmem:[#allocation7 + $0x5c] sm:$0xf]
        %v2000 = vld [vmem:[#allocation7 + $0x60] sm:$0xf]
        %v2001 = vld [vmem:[#allocation7 + $0x64] sm:$0xf]
        %v2002 = vld [vmem:[#allocation7 + $0x68] sm:$0xf]
        %v2003 = vld [vmem:[#allocation7 + $0x6c] sm:$0xf]
        %v2004 = vld [vmem:[#allocation7 + $0x70] sm:$0xf]
        %v2005 = vld [vmem:[#allocation7 + $0x74] sm:$0xf]
        %v2006 = vld [vmem:[#allocation7 + $0x78] sm:$0xf]
        %v2007 = vld [vmem:[#allocation7 + $0x7c] sm:$0xf]
        %v2008 = vld [vmem:[#allocation7 + $0x80] sm:$0xf]
        %v2009 = vld [vmem:[#allocation7 + $0x84] sm:$0xf]
        %v2010 = vld [vmem:[#allocation7 + $0x88] sm:$0xf]
        %v2011 = vld [vmem:[#allocation7 + $0x8c] sm:$0xf]
        %v2012 = vld [vmem:[#allocation7 + $0x90] sm:$0xf]
        %v2013 = vld [vmem:[#allocation7 + $0x94] sm:$0xf]
        %v2014 = vld [vmem:[#allocation7 + $0x98] sm:$0xf]
        %v2015 = vld [vmem:[#allocation7 + $0x9c] sm:$0xf]
        %v2016 = vld [vmem:[#allocation7 + $0xa0] sm:$0xf]
        %v2017 = vld [vmem:[#allocation7 + $0xa4] sm:$0xf]
        %v2018 = vld [vmem:[#allocation7 + $0xa8] sm:$0xf]
        %v2019 = vld [vmem:[#allocation7 + $0xac] sm:$0xf]
        %v2020 = vld [vmem:[#allocation7 + $0xb0] sm:$0xf]
        %v2021 = vld [vmem:[#allocation7 + $0xb4] sm:$0xf]
        %v2022 = vld [vmem:[#allocation7 + $0xb8] sm:$0xf]
        %v2023 = vld [vmem:[#allocation7 + $0xbc] sm:$0xf]
        %v2024 = vld [vmem:[#allocation7 + $0xc0] sm:$0xf]
        %v2025 = vld [vmem:[#allocation7 + $0xc4] sm:$0xf]
        %v2026 = vld [vmem:[#allocation7 + $0xc8] sm:$0xf]
        %v2027 = vld [vmem:[#allocation7 + $0xcc] sm:$0xf]
        %v2028 = vld [vmem:[#allocation7 + $0xd0] sm:$0xf]
        %v2029 = vld [vmem:[#allocation7 + $0xd4] sm:$0xf]
        %v2030 = vld [vmem:[#allocation7 + $0xd8] sm:$0xf]
        %v2031 = vld [vmem:[#allocation7 + $0xdc] sm:$0xf]
        %v2032 = vld [vmem:[#allocation7 + $0xe0] sm:$0xf]
        %v2033 = vld [vmem:[#allocation7 + $0xe4] sm:$0xf]
        %v2034 = vld [vmem:[#allocation7 + $0xe8] sm:$0xf]
        %v2035 = vld [vmem:[#allocation7 + $0xec] sm:$0xf]
        %v2036 = vld [vmem:[#allocation7 + $0xf0] sm:$0xf]
        %v2037 = vld [vmem:[#allocation7 + $0xf4] sm:$0xf]
        %v2038 = vld [vmem:[#allocation7 + $0xf8] sm:$0xf]
        %v2039 = vld [vmem:[#allocation7 + $0xfc] sm:$0xf]
        %v2040 = vld [vmem:[#allocation7 + $0x100] sm:$0xf]
        %v2041 = vld [vmem:[#allocation7 + $0x104] sm:$0xf]
        %v2042 = vld [vmem:[#allocation7 + $0x108] sm:$0xf]
        %v2043 = vld [vmem:[#allocation7 + $0x10c] sm:$0xf]
        %v2044 = vld [vmem:[#allocation7 + $0x110] sm:$0xf]
        %v2045 = vld [vmem:[#allocation7 + $0x114] sm:$0xf]
        %v2046 = vld [vmem:[#allocation7 + $0x118] sm:$0xf]
        %v2047 = vld [vmem:[#allocation7 + $0x11c] sm:$0xf]
        %v2048 = vld [vmem:[#allocation7 + $0x120] sm:$0xf]
        %v2049 = vld [vmem:[#allocation7 + $0x124] sm:$0xf]
        %v2050 = vld [vmem:[#allocation7 + $0x128] sm:$0xf]
        %v2051 = vld [vmem:[#allocation7 + $0x12c] sm:$0xf]
        %v2052 = vld [vmem:[#allocation7 + $0x130] sm:$0xf]
        %v2053 = vld [vmem:[#allocation7 + $0x134] sm:$0xf]
        %v2054 = vld [vmem:[#allocation7 + $0x138] sm:$0xf]
        %v2055 = vld [vmem:[#allocation7 + $0x13c] sm:$0xf]
        %v2056 = vld [vmem:[#allocation7 + $0x140] sm:$0xf]
        %v2057 = vld [vmem:[#allocation7 + $0x144] sm:$0xf]
        %v2058 = vld [vmem:[#allocation7 + $0x148] sm:$0xf]
        %v2059 = vld [vmem:[#allocation7 + $0x14c] sm:$0xf]
        %v2060 = vld [vmem:[#allocation7 + $0x150] sm:$0xf]
        %v2061 = vld [vmem:[#allocation7 + $0x154] sm:$0xf]
        %v2062 = vld [vmem:[#allocation7 + $0x158] sm:$0xf]
        %v2063 = vld [vmem:[#allocation7 + $0x15c] sm:$0xf]
        %v2064 = vld [vmem:[#allocation7 + $0x160] sm:$0xf]
        %v2065 = vld [vmem:[#allocation7 + $0x164] sm:$0xf]
        %v2066 = vld [vmem:[#allocation7 + $0x168] sm:$0xf]
        %v2067 = vld [vmem:[#allocation7 + $0x16c] sm:$0xf]
        %v2068 = vld [vmem:[#allocation7 + $0x170] sm:$0xf]
        %v2069 = vld [vmem:[#allocation7 + $0x174] sm:$0xf]
        %v2070 = vld [vmem:[#allocation7 + $0x178] sm:$0xf]
        %v2071 = vld [vmem:[#allocation7 + $0x17c] sm:$0xf]
        %v2072 = vld [vmem:[#allocation7 + $0x180] sm:$0xf]
        %v2073 = vld [vmem:[#allocation7 + $0x184] sm:$0xf]
        %v2074 = vld [vmem:[#allocation7 + $0x188] sm:$0xf]
        %v2075 = vld [vmem:[#allocation7 + $0x18c] sm:$0xf]
        %v2076 = vld [vmem:[#allocation7 + $0x190] sm:$0xf]
        %v2077 = vld [vmem:[#allocation7 + $0x194] sm:$0xf]
        %v2078 = vld [vmem:[#allocation7 + $0x198] sm:$0xf]
        %v2079 = vld [vmem:[#allocation7 + $0x19c] sm:$0xf]
        %v2080 = vld [vmem:[#allocation7 + $0x1a0] sm:$0xf]
        %v2081 = vld [vmem:[#allocation7 + $0x1a4] sm:$0xf]
        %v2082 = vld [vmem:[#allocation7 + $0x1a8] sm:$0xf]
        %v2083 = vld [vmem:[#allocation7 + $0x1ac] sm:$0xf]
        %v2084 = vld [vmem:[#allocation7 + $0x1b0] sm:$0xf]
        %v2085 = vld [vmem:[#allocation7 + $0x1b4] sm:$0xf]
        %v2086 = vld [vmem:[#allocation7 + $0x1b8] sm:$0xf]
        %v2087 = vld [vmem:[#allocation7 + $0x1bc] sm:$0xf]
        %v2088 = vld [vmem:[#allocation7 + $0x1c0] sm:$0xf]
        %v2089 = vld [vmem:[#allocation7 + $0x1c4] sm:$0xf]
        %v2090 = vld [vmem:[#allocation7 + $0x1c8] sm:$0xf]
        %v2091 = vld [vmem:[#allocation7 + $0x1cc] sm:$0xf]
        %v2092 = vld [vmem:[#allocation7 + $0x1d0] sm:$0xf]
        %v2093 = vld [vmem:[#allocation7 + $0x1d4] sm:$0xf]
        %v2094 = vld [vmem:[#allocation7 + $0x1d8] sm:$0xf]
        %v2095 = vld [vmem:[#allocation7 + $0x1dc] sm:$0xf]
        %v2096 = vld [vmem:[#allocation7 + $0x1e0] sm:$0xf]
        %v2097 = vld [vmem:[#allocation7 + $0x1e4] sm:$0xf]
        %v2098 = vld [vmem:[#allocation7 + $0x1e8] sm:$0xf]
        %v2099 = vld [vmem:[#allocation7 + $0x1ec] sm:$0xf]
        %v2100 = vld [vmem:[#allocation7 + $0x1f0] sm:$0xf]
        %v2101 = vld [vmem:[#allocation7 + $0x1f4] sm:$0xf]
        %v2102 = vld [vmem:[#allocation7 + $0x1f8] sm:$0xf]
        %v2103 = vld [vmem:[#allocation7 + $0x1fc] sm:$0xf]
        %v2104 = vld [vmem:[#allocation7 + $0x200] sm:$0xf]
        %v2105 = vld [vmem:[#allocation7 + $0x204] sm:$0xf]
        %v2106 = vld [vmem:[#allocation7 + $0x208] sm:$0xf]
        %v2107 = vld [vmem:[#allocation7 + $0x20c] sm:$0xf]
        %v2108 = vld [vmem:[#allocation7 + $0x210] sm:$0xf]
        %v2109 = vld [vmem:[#allocation7 + $0x214] sm:$0xf]
        %v2110 = vld [vmem:[#allocation7 + $0x218] sm:$0xf]
        %v2111 = vld [vmem:[#allocation7 + $0x21c] sm:$0xf]
        %v2112 = vld [vmem:[#allocation7 + $0x220] sm:$0xf]
        %v2113 = vld [vmem:[#allocation7 + $0x224] sm:$0xf]
        %v2114 = vld [vmem:[#allocation7 + $0x228] sm:$0xf]
        %v2115 = vld [vmem:[#allocation7 + $0x22c] sm:$0xf]
        %v2116 = vld [vmem:[#allocation7 + $0x230] sm:$0xf]
        %v2117 = vld [vmem:[#allocation7 + $0x234] sm:$0xf]
        %v2118 = vld [vmem:[#allocation7 + $0x238] sm:$0xf]
        %v2119 = vld [vmem:[#allocation7 + $0x23c] sm:$0xf]
        %v2120 = vld [vmem:[%s2] sm:$0x1]
        %v2122 = vlaneseq
        %v2123 = vshrl.u32 %v2122, 7
        %v2124 = vsub.s32 0, %v2123
        %v2125 = vrot.slane %v2120, %v2124
        %v2271 = vunpack.c.l.b16 %v1976
        %v2272 = vunpack.c.l.b16 %v1977
        %v2273 = vunpack.c.l.b16 %v1978
        %v2274 = vunpack.c.l.b16 %v1979
        %v2275 = vunpack.c.l.b16 %v1980
        %v2276 = vunpack.c.l.b16 %v1981
        %v2277 = vunpack.c.l.b16 %v1982
        %v2278 = vunpack.c.l.b16 %v1983
        %v2279 = vunpack.c.l.b16 %v1984
        %v2280 = vunpack.c.l.b16 %v1985
        %v2281 = vunpack.c.l.b16 %v1986
        %v2282 = vunpack.c.l.b16 %v1987
        %v2283 = vunpack.c.l.b16 %v1988
        %v2284 = vunpack.c.l.b16 %v1989
        %v2285 = vunpack.c.l.b16 %v1990
        %v2286 = vunpack.c.l.b16 %v1991
        %v2287 = vunpack.c.l.b16 %v1992
        %v2288 = vunpack.c.l.b16 %v1993
        %v2289 = vunpack.c.l.b16 %v1994
        %v2290 = vunpack.c.l.b16 %v1995
        %v2291 = vunpack.c.l.b16 %v1996
        %v2292 = vunpack.c.l.b16 %v1997
        %v2293 = vunpack.c.l.b16 %v1998
        %v2294 = vunpack.c.l.b16 %v1999
        %v2295 = vunpack.c.l.b16 %v2000
        %v2296 = vunpack.c.l.b16 %v2001
        %v2297 = vunpack.c.l.b16 %v2002
        %v2298 = vunpack.c.l.b16 %v2003
        %v2299 = vunpack.c.l.b16 %v2004
        %v2300 = vunpack.c.l.b16 %v2005
        %v2301 = vunpack.c.l.b16 %v2006
        %v2302 = vunpack.c.l.b16 %v2007
        %v2303 = vunpack.c.l.b16 %v2008
        %v2304 = vunpack.c.l.b16 %v2009
        %v2305 = vunpack.c.l.b16 %v2010
        %v2306 = vunpack.c.l.b16 %v2011
        %v2307 = vunpack.c.l.b16 %v2012
        %v2308 = vunpack.c.l.b16 %v2013
        %v2309 = vunpack.c.l.b16 %v2014
        %v2310 = vunpack.c.l.b16 %v2015
        %v2311 = vunpack.c.l.b16 %v2016
        %v2312 = vunpack.c.l.b16 %v2017
        %v2313 = vunpack.c.l.b16 %v2018
        %v2314 = vunpack.c.l.b16 %v2019
        %v2315 = vunpack.c.l.b16 %v2020
        %v2316 = vunpack.c.l.b16 %v2021
        %v2317 = vunpack.c.l.b16 %v2022
        %v2318 = vunpack.c.l.b16 %v2023
        %v2319 = vunpack.c.l.b16 %v2024
        %v2320 = vunpack.c.l.b16 %v2025
        %v2321 = vunpack.c.l.b16 %v2026
        %v2322 = vunpack.c.l.b16 %v2027
        %v2323 = vunpack.c.l.b16 %v2028
        %v2324 = vunpack.c.l.b16 %v2029
        %v2325 = vunpack.c.l.b16 %v2030
        %v2326 = vunpack.c.l.b16 %v2031
        %v2327 = vunpack.c.l.b16 %v2032
        %v2328 = vunpack.c.l.b16 %v2033
        %v2329 = vunpack.c.l.b16 %v2034
        %v2330 = vunpack.c.l.b16 %v2035
        %v2331 = vunpack.c.l.b16 %v2036
        %v2332 = vunpack.c.l.b16 %v2037
        %v2333 = vunpack.c.l.b16 %v2038
        %v2334 = vunpack.c.l.b16 %v2039
        %v2335 = vunpack.c.l.b16 %v2040
        %v2336 = vunpack.c.l.b16 %v2041
        %v2337 = vunpack.c.l.b16 %v2042
        %v2338 = vunpack.c.l.b16 %v2043
        %v2339 = vunpack.c.l.b16 %v2044
        %v2340 = vunpack.c.l.b16 %v2045
        %v2341 = vunpack.c.l.b16 %v2046
        %v2342 = vunpack.c.l.b16 %v2047
        %v2343 = vunpack.c.l.b16 %v2048
        %v2344 = vunpack.c.l.b16 %v2049
        %v2345 = vunpack.c.l.b16 %v2050
        %v2346 = vunpack.c.l.b16 %v2051
        %v2347 = vunpack.c.l.b16 %v2052
        %v2348 = vunpack.c.l.b16 %v2053
        %v2349 = vunpack.c.l.b16 %v2054
        %v2350 = vunpack.c.l.b16 %v2055
        %v2351 = vunpack.c.l.b16 %v2056
        %v2352 = vunpack.c.l.b16 %v2057
        %v2353 = vunpack.c.l.b16 %v2058
        %v2354 = vunpack.c.l.b16 %v2059
        %v2355 = vunpack.c.l.b16 %v2060
        %v2356 = vunpack.c.l.b16 %v2061
        %v2357 = vunpack.c.l.b16 %v2062
        %v2358 = vunpack.c.l.b16 %v2063
        %v2359 = vunpack.c.l.b16 %v2064
        %v2360 = vunpack.c.l.b16 %v2065
        %v2361 = vunpack.c.l.b16 %v2066
        %v2362 = vunpack.c.l.b16 %v2067
        %v2363 = vunpack.c.l.b16 %v2068
        %v2364 = vunpack.c.l.b16 %v2069
        %v2365 = vunpack.c.l.b16 %v2070
        %v2366 = vunpack.c.l.b16 %v2071
        %v2367 = vunpack.c.l.b16 %v2072
        %v2368 = vunpack.c.l.b16 %v2073
        %v2369 = vunpack.c.l.b16 %v2074
        %v2370 = vunpack.c.l.b16 %v2075
        %v2371 = vunpack.c.l.b16 %v2076
        %v2372 = vunpack.c.l.b16 %v2077
        %v2373 = vunpack.c.l.b16 %v2078
        %v2374 = vunpack.c.l.b16 %v2079
        %v2375 = vunpack.c.l.b16 %v2080
        %v2376 = vunpack.c.l.b16 %v2081
        %v2377 = vunpack.c.l.b16 %v2082
        %v2378 = vunpack.c.l.b16 %v2083
        %v2379 = vunpack.c.l.b16 %v2084
        %v2380 = vunpack.c.l.b16 %v2085
        %v2381 = vunpack.c.l.b16 %v2086
        %v2382 = vunpack.c.l.b16 %v2087
        %v2383 = vunpack.c.l.b16 %v2088
        %v2384 = vunpack.c.l.b16 %v2089
        %v2385 = vunpack.c.l.b16 %v2090
        %v2386 = vunpack.c.l.b16 %v2091
        %v2387 = vunpack.c.l.b16 %v2092
        %v2388 = vunpack.c.l.b16 %v2093
        %v2389 = vunpack.c.l.b16 %v2094
        %v2390 = vunpack.c.l.b16 %v2095
        %v2391 = vunpack.c.l.b16 %v2096
        %v2392 = vunpack.c.l.b16 %v2097
        %v2393 = vunpack.c.l.b16 %v2098
        %v2394 = vunpack.c.l.b16 %v2099
        %v2395 = vunpack.c.l.b16 %v2100
        %v2396 = vunpack.c.l.b16 %v2101
        %v2397 = vunpack.c.l.b16 %v2102
        %v2398 = vunpack.c.l.b16 %v2103
        %v2399 = vunpack.c.l.b16 %v2104
        %v2400 = vunpack.c.l.b16 %v2105
        %v2401 = vunpack.c.l.b16 %v2106
        %v2402 = vunpack.c.l.b16 %v2107
        %v2403 = vunpack.c.l.b16 %v2108
        %v2404 = vunpack.c.l.b16 %v2109
        %v2405 = vunpack.c.l.b16 %v2110
        %v2406 = vunpack.c.l.b16 %v2111
        %v2407 = vunpack.c.l.b16 %v2112
        %v2408 = vunpack.c.l.b16 %v2113
        %v2409 = vunpack.c.l.b16 %v2114
        %v2410 = vunpack.c.l.b16 %v2115
        %v2411 = vunpack.c.l.b16 %v2116
        %v2412 = vunpack.c.l.b16 %v2117
        %v2413 = vunpack.c.l.b16 %v2118
        %v2414 = vunpack.c.l.b16 %v2119
        %v2415 = vpack.c.b16 %v2272, %v2271
        %v2416 = vpack.c.b16 %v2274, %v2273
        %v2417 = vpack.c.b16 %v2276, %v2275
        %v2418 = vpack.c.b16 %v2278, %v2277
        %v2419 = vpack.c.b16 %v2280, %v2279
        %v2420 = vpack.c.b16 %v2282, %v2281
        %v2421 = vpack.c.b16 %v2284, %v2283
        %v2422 = vpack.c.b16 %v2286, %v2285
        %v2423 = vpack.c.b16 %v2288, %v2287
        %v2424 = vpack.c.b16 %v2290, %v2289
        %v2425 = vpack.c.b16 %v2292, %v2291
        %v2426 = vpack.c.b16 %v2294, %v2293
        %v2427 = vpack.c.b16 %v2296, %v2295
        %v2428 = vpack.c.b16 %v2298, %v2297
        %v2429 = vpack.c.b16 %v2300, %v2299
        %v2430 = vpack.c.b16 %v2302, %v2301
        %v2431 = vpack.c.b16 %v2304, %v2303
        %v2432 = vpack.c.b16 %v2306, %v2305
        %v2433 = vpack.c.b16 %v2308, %v2307
        %v2434 = vpack.c.b16 %v2310, %v2309
        %v2435 = vpack.c.b16 %v2312, %v2311
        %v2436 = vpack.c.b16 %v2314, %v2313
        %v2437 = vpack.c.b16 %v2316, %v2315
        %v2438 = vpack.c.b16 %v2318, %v2317
        %v2439 = vpack.c.b16 %v2320, %v2319
        %v2440 = vpack.c.b16 %v2322, %v2321
        %v2441 = vpack.c.b16 %v2324, %v2323
        %v2442 = vpack.c.b16 %v2326, %v2325
        %v2443 = vpack.c.b16 %v2328, %v2327
        %v2444 = vpack.c.b16 %v2330, %v2329
        %v2445 = vpack.c.b16 %v2332, %v2331
        %v2446 = vpack.c.b16 %v2334, %v2333
        %v2447 = vpack.c.b16 %v2336, %v2335
        %v2448 = vpack.c.b16 %v2338, %v2337
        %v2449 = vpack.c.b16 %v2340, %v2339
        %v2450 = vpack.c.b16 %v2342, %v2341
        %v2451 = vpack.c.b16 %v2344, %v2343
        %v2452 = vpack.c.b16 %v2346, %v2345
        %v2453 = vpack.c.b16 %v2348, %v2347
        %v2454 = vpack.c.b16 %v2350, %v2349
        %v2455 = vpack.c.b16 %v2352, %v2351
        %v2456 = vpack.c.b16 %v2354, %v2353
        %v2457 = vpack.c.b16 %v2356, %v2355
        %v2458 = vpack.c.b16 %v2358, %v2357
        %v2459 = vpack.c.b16 %v2360, %v2359
        %v2460 = vpack.c.b16 %v2362, %v2361
        %v2461 = vpack.c.b16 %v2364, %v2363
        %v2462 = vpack.c.b16 %v2366, %v2365
        %v2463 = vpack.c.b16 %v2368, %v2367
        %v2464 = vpack.c.b16 %v2370, %v2369
        %v2465 = vpack.c.b16 %v2372, %v2371
        %v2466 = vpack.c.b16 %v2374, %v2373
        %v2467 = vpack.c.b16 %v2376, %v2375
        %v2468 = vpack.c.b16 %v2378, %v2377
        %v2469 = vpack.c.b16 %v2380, %v2379
        %v2470 = vpack.c.b16 %v2382, %v2381
        %v2471 = vpack.c.b16 %v2384, %v2383
        %v2472 = vpack.c.b16 %v2386, %v2385
        %v2473 = vpack.c.b16 %v2388, %v2387
        %v2474 = vpack.c.b16 %v2390, %v2389
        %v2475 = vpack.c.b16 %v2392, %v2391
        %v2476 = vpack.c.b16 %v2394, %v2393
        %v2477 = vpack.c.b16 %v2396, %v2395
        %v2478 = vpack.c.b16 %v2398, %v2397
        %v2479 = vpack.c.b16 %v2400, %v2399
        %v2480 = vpack.c.b16 %v2402, %v2401
        %v2481 = vpack.c.b16 %v2404, %v2403
        %v2482 = vpack.c.b16 %v2406, %v2405
        %v2483 = vpack.c.b16 %v2408, %v2407
        %v2484 = vpack.c.b16 %v2410, %v2409
        %v2485 = vpack.c.b16 %v2412, %v2411
        %v2486 = vpack.c.b16 %v2414, %v2413
        %2559 = vmatprep.subr.bf16.mxu0 0
        %2560 = vmatpush1.bf16.msra.mxu0 %v2415
        %2561 = vmatprep.subr.bf16.mxu0 0
        %2562 = vmatpush1.bf16.msra.mxu0 %v2416
        %2563 = vmatprep.subr.bf16.mxu0 0
        %2564 = vmatpush1.bf16.msra.mxu0 %v2417
        %2565 = vmatprep.subr.bf16.mxu0 0
        %2566 = vmatpush1.bf16.msra.mxu0 %v2418
        %2567 = vmatprep.subr.bf16.mxu0 0
        %2568 = vmatpush1.bf16.msra.mxu0 %v2419
        %2569 = vmatprep.subr.bf16.mxu0 0
        %2570 = vmatpush1.bf16.msra.mxu0 %v2420
        %2571 = vmatprep.subr.bf16.mxu0 0
        %2572 = vmatpush1.bf16.msra.mxu0 %v2421
        %2573 = vmatprep.subr.bf16.mxu0 0
        %2574 = vmatpush1.bf16.msra.mxu0 %v2422
        %2575 = vmatprep.subr.bf16.mxu0 0
        %2576 = vmatpush1.bf16.msra.mxu0 %v2423
        %2577 = vmatprep.subr.bf16.mxu0 0
        %2578 = vmatpush1.bf16.msra.mxu0 %v2424
        %2579 = vmatprep.subr.bf16.mxu0 0
        %2580 = vmatpush1.bf16.msra.mxu0 %v2425
        %2581 = vmatprep.subr.bf16.mxu0 0
        %2582 = vmatpush1.bf16.msra.mxu0 %v2426
        %2583 = vmatprep.subr.bf16.mxu0 0
        %2584 = vmatpush1.bf16.msra.mxu0 %v2427
        %2585 = vmatprep.subr.bf16.mxu0 0
        %2586 = vmatpush1.bf16.msra.mxu0 %v2428
        %2587 = vmatprep.subr.bf16.mxu0 0
        %2588 = vmatpush1.bf16.msra.mxu0 %v2429
        %2589 = vmatprep.subr.bf16.mxu0 0
        %2590 = vmatpush1.bf16.msra.mxu0 %v2430
        %2591 = vmatprep.mubr.bf16.mxu0 %v1833
        %2592 = vmatmul.mubr.bf16.gmra.mrb[0].mxu0 %v1832
        %v2593 = vpop.f32.mrb[0].mxu0
        %v2594 = vadd.f32 %v2125, %v2593
        %v2595 = vpop.f32.mrb[0].mxu0
        %v2596 = vpop.f32.mrb[0].mxu0
        %v2597 = vadd.f32 %v2125, %v2596
        %v2598 = vpop.f32.mrb[0].mxu0
        %2599 = vmatprep.mubr.bf16.mxu0 %v1842
        %2600 = vmatmul.mubr.bf16.gmra.mrb[0].mxu0 %v1841
        %v2601 = vpop.f32.mrb[0].mxu0
        %v2602 = vadd.f32 %v2125, %v2601
        %v2603 = vpop.f32.mrb[0].mxu0
        %v2604 = vpop.f32.mrb[0].mxu0
        %v2605 = vadd.f32 %v2125, %v2604
        %v2606 = vpop.f32.mrb[0].mxu0
        %2607 = vmatprep.mubr.bf16.mxu0 %v1851
        %2608 = vmatmul.mubr.bf16.gmra.mrb[0].mxu0 %v1850
        %v2609 = vpop.f32.mrb[0].mxu0
        %v2610 = vadd.f32 %v2125, %v2609
        %v2611 = vpop.f32.mrb[0].mxu0
        %v2612 = vpop.f32.mrb[0].mxu0
        %v2613 = vadd.f32 %v2125, %v2612
        %v2614 = vpop.f32.mrb[0].mxu0
        %2615 = vmatprep.mubr.bf16.mxu0 %v1860
        %2616 = vmatmul.mubr.bf16.gmra.mrb[0].mxu0 %v1859
        %v2617 = vpop.f32.mrb[0].mxu0
        %v2618 = vadd.f32 %v2125, %v2617
        %v2619 = vpop.f32.mrb[0].mxu0
        %v2620 = vpop.f32.mrb[0].mxu0
        %v2621 = vadd.f32 %v2125, %v2620
        %v2622 = vpop.f32.mrb[0].mxu0
        %2623 = vmatprep.mubr.bf16.mxu0 %v1869
        %2624 = vmatmul.mubr.bf16.gmra.mrb[0].mxu0 %v1868
        %v2625 = vpop.f32.mrb[0].mxu0
        %v2626 = vadd.f32 %v2125, %v2625
        %v2627 = vpop.f32.mrb[0].mxu0
        %v2628 = vpop.f32.mrb[0].mxu0
        %v2629 = vadd.f32 %v2125, %v2628
        %v2630 = vpop.f32.mrb[0].mxu0
        %2631 = vmatprep.mubr.bf16.mxu0 %v1878
        %2632 = vmatmul.mubr.bf16.gmra.mrb[0].mxu0 %v1877
        %v2633 = vpop.f32.mrb[0].mxu0
        %v2634 = vadd.f32 %v2125, %v2633
        %v2635 = vpop.f32.mrb[0].mxu0
        %v2636 = vpop.f32.mrb[0].mxu0
        %v2637 = vadd.f32 %v2125, %v2636
        %v2638 = vpop.f32.mrb[0].mxu0
        %2639 = vmatprep.mubr.bf16.mxu0 %v1887
        %2640 = vmatmul.mubr.bf16.gmra.mrb[0].mxu0 %v1886
        %v2641 = vpop.f32.mrb[0].mxu0
        %v2642 = vadd.f32 %v2125, %v2641
        %v2643 = vpop.f32.mrb[0].mxu0
        %v2644 = vpop.f32.mrb[0].mxu0
        %v2645 = vadd.f32 %v2125, %v2644
        %v2646 = vpop.f32.mrb[0].mxu0
        %2647 = vmatprep.mubr.bf16.mxu0 %v1896
        %2648 = vmatmul.mubr.bf16.gmra.mrb[0].mxu0 %v1895
        %v2649 = vpop.f32.mrb[0].mxu0
        %v2650 = vadd.f32 %v2125, %v2649
        %v2651 = vpop.f32.mrb[0].mxu0
        %v2652 = vpop.f32.mrb[0].mxu0
        %v2653 = vadd.f32 %v2125, %v2652
        %v2654 = vpop.f32.mrb[0].mxu0
        %2655 = vmatprep.mubr.bf16.mxu0 %v1905
        %2656 = vmatmul.mubr.bf16.gmra.mrb[0].mxu0 %v1904
        %v2657 = vpop.f32.mrb[0].mxu0
        %v2658 = vadd.f32 %v2125, %v2657
        %v2659 = vpop.f32.mrb[0].mxu0
        %v2660 = vpop.f32.mrb[0].mxu0
        %v2661 = vadd.f32 %v2125, %v2660
        %v2662 = vpop.f32.mrb[0].mxu0
        %2663 = vmatprep.mubr.bf16.mxu0 %v1914
        %2664 = vmatmul.mubr.bf16.gmra.mrb[0].mxu0 %v1913
        %v2665 = vpop.f32.mrb[0].mxu0
        %v2666 = vadd.f32 %v2125, %v2665
        %v2667 = vpop.f32.mrb[0].mxu0
        %v2668 = vpop.f32.mrb[0].mxu0
        %v2669 = vadd.f32 %v2125, %v2668
        %v2670 = vpop.f32.mrb[0].mxu0
        %2671 = vmatprep.mubr.bf16.mxu0 %v1923
        %2672 = vmatmul.mubr.bf16.gmra.mrb[0].mxu0 %v1922
        %v2673 = vpop.f32.mrb[0].mxu0
        %v2674 = vadd.f32 %v2125, %v2673
        %v2675 = vpop.f32.mrb[0].mxu0
        %v2676 = vpop.f32.mrb[0].mxu0
        %v2677 = vadd.f32 %v2125, %v2676
        %v2678 = vpop.f32.mrb[0].mxu0
        %2679 = vmatprep.mubr.bf16.mxu0 %v1932
        %2680 = vmatmul.mubr.bf16.gmra.mrb[0].mxu0 %v1931
        %v2681 = vpop.f32.mrb[0].mxu0
        %v2682 = vadd.f32 %v2125, %v2681
        %v2683 = vpop.f32.mrb[0].mxu0
        %v2684 = vpop.f32.mrb[0].mxu0
        %v2685 = vadd.f32 %v2125, %v2684
        %v2686 = vpop.f32.mrb[0].mxu0
        %2687 = vmatprep.mubr.bf16.mxu0 %v1941
        %2688 = vmatmul.mubr.bf16.gmra.mrb[0].mxu0 %v1940
        %v2689 = vpop.f32.mrb[0].mxu0
        %v2690 = vadd.f32 %v2125, %v2689
        %v2691 = vpop.f32.mrb[0].mxu0
        %v2692 = vpop.f32.mrb[0].mxu0
        %v2693 = vadd.f32 %v2125, %v2692
        %v2694 = vpop.f32.mrb[0].mxu0
        %2695 = vmatprep.mubr.bf16.mxu0 %v1950
        %2696 = vmatmul.mubr.bf16.gmra.mrb[0].mxu0 %v1949
        %v2697 = vpop.f32.mrb[0].mxu0
        %v2698 = vadd.f32 %v2125, %v2697
        %v2699 = vpop.f32.mrb[0].mxu0
        %v2700 = vpop.f32.mrb[0].mxu0
        %v2701 = vadd.f32 %v2125, %v2700
        %v2702 = vpop.f32.mrb[0].mxu0
        %2703 = vmatprep.mubr.bf16.mxu0 %v1959
        %2704 = vmatmul.mubr.bf16.gmra.mrb[0].mxu0 %v1958
        %v2705 = vpop.f32.mrb[0].mxu0
        %v2706 = vadd.f32 %v2125, %v2705
        %v2707 = vpop.f32.mrb[0].mxu0
        %v2708 = vpop.f32.mrb[0].mxu0
        %v2709 = vadd.f32 %v2125, %v2708
        %v2710 = vpop.f32.mrb[0].mxu0
        %2711 = vmatprep.mubr.bf16.mxu0 %v1968
        %2712 = vmatmul.mubr.bf16.gmra.mrb[0].mxu0 %v1967
        %v2713 = vpop.f32.mrb[0].mxu0
        %v2714 = vadd.f32 %v2125, %v2713
        %v2715 = vpop.f32.mrb[0].mxu0
        %v2716 = vpop.f32.mrb[0].mxu0
        %v2717 = vadd.f32 %v2125, %v2716
        %v2718 = vpop.f32.mrb[0].mxu0
        %2719 = vdwg.mxu0
        %2720 = vmatprep.subr.bf16.mxu0 0
        %2721 = vmatpush1.bf16.msra.mxu0 %v2431
        %2722 = vmatprep.subr.bf16.mxu0 0
        %2723 = vmatpush1.bf16.msra.mxu0 %v2432
        %2724 = vmatprep.subr.bf16.mxu0 0
        %2725 = vmatpush1.bf16.msra.mxu0 %v2433
        %2726 = vmatprep.subr.bf16.mxu0 0
        %2727 = vmatpush1.bf16.msra.mxu0 %v2434
        %2728 = vmatprep.subr.bf16.mxu0 0
        %2729 = vmatpush1.bf16.msra.mxu0 %v2435
        %2730 = vmatprep.subr.bf16.mxu0 0
        %2731 = vmatpush1.bf16.msra.mxu0 %v2436
        %2732 = vmatprep.subr.bf16.mxu0 0
        %2733 = vmatpush1.bf16.msra.mxu0 %v2437
        %2734 = vmatprep.subr.bf16.mxu0 0
        %2735 = vmatpush1.bf16.msra.mxu0 %v2438
        %2736 = vmatprep.subr.bf16.mxu0 0
        %2737 = vmatpush1.bf16.msra.mxu0 %v2439
        %2738 = vmatprep.subr.bf16.mxu0 0
        %2739 = vmatpush1.bf16.msra.mxu0 %v2440
        %2740 = vmatprep.subr.bf16.mxu0 0
        %2741 = vmatpush1.bf16.msra.mxu0 %v2441
        %2742 = vmatprep.subr.bf16.mxu0 0
        %2743 = vmatpush1.bf16.msra.mxu0 %v2442
        %2744 = vmatprep.subr.bf16.mxu0 0
        %2745 = vmatpush1.bf16.msra.mxu0 %v2443
        %2746 = vmatprep.subr.bf16.mxu0 0
        %2747 = vmatpush1.bf16.msra.mxu0 %v2444
        %2748 = vmatprep.subr.bf16.mxu0 0
        %2749 = vmatpush1.bf16.msra.mxu0 %v2445
        %2750 = vmatprep.subr.bf16.mxu0 0
        %2751 = vmatpush1.bf16.msra.mxu0 %v2446
        %2752 = vmatprep.mubr.bf16.mxu0 %v1835
        %2753 = vmatmul.mubr.bf16.gmra.mrb[0].mxu0 %v1834
        %v2754 = vpop.f32.mrb[0].mxu0
        %v2755 = vadd.f32 %v2594, %v2754
        %v2756 = vpop.f32.mrb[0].mxu0
        %v2757 = vpop.f32.mrb[0].mxu0
        %v2758 = vadd.f32 %v2597, %v2757
        %v2759 = vpop.f32.mrb[0].mxu0
        %2760 = vmatprep.mubr.bf16.mxu0 %v1844
        %2761 = vmatmul.mubr.bf16.gmra.mrb[0].mxu0 %v1843
        %v2762 = vpop.f32.mrb[0].mxu0
        %v2763 = vadd.f32 %v2602, %v2762
        %v2764 = vpop.f32.mrb[0].mxu0
        %v2765 = vpop.f32.mrb[0].mxu0
        %v2766 = vadd.f32 %v2605, %v2765
        %v2767 = vpop.f32.mrb[0].mxu0
        %2768 = vmatprep.mubr.bf16.mxu0 %v1853
        %2769 = vmatmul.mubr.bf16.gmra.mrb[0].mxu0 %v1852
        %v2770 = vpop.f32.mrb[0].mxu0
        %v2771 = vadd.f32 %v2610, %v2770
        %v2772 = vpop.f32.mrb[0].mxu0
        %v2773 = vpop.f32.mrb[0].mxu0
        %v2774 = vadd.f32 %v2613, %v2773
        %v2775 = vpop.f32.mrb[0].mxu0
        %2776 = vmatprep.mubr.bf16.mxu0 %v1862
        %2777 = vmatmul.mubr.bf16.gmra.mrb[0].mxu0 %v1861
        %v2778 = vpop.f32.mrb[0].mxu0
        %v2779 = vadd.f32 %v2618, %v2778
        %v2780 = vpop.f32.mrb[0].mxu0
        %v2781 = vpop.f32.mrb[0].mxu0
        %v2782 = vadd.f32 %v2621, %v2781
        %v2783 = vpop.f32.mrb[0].mxu0
        %2784 = vmatprep.mubr.bf16.mxu0 %v1871
        %2785 = vmatmul.mubr.bf16.gmra.mrb[0].mxu0 %v1870
        %v2786 = vpop.f32.mrb[0].mxu0
        %v2787 = vadd.f32 %v2626, %v2786
        %v2788 = vpop.f32.mrb[0].mxu0
        %v2789 = vpop.f32.mrb[0].mxu0
        %v2790 = vadd.f32 %v2629, %v2789
        %v2791 = vpop.f32.mrb[0].mxu0
        %2792 = vmatprep.mubr.bf16.mxu0 %v1880
        %2793 = vmatmul.mubr.bf16.gmra.mrb[0].mxu0 %v1879
        %v2794 = vpop.f32.mrb[0].mxu0
        %v2795 = vadd.f32 %v2634, %v2794
        %v2796 = vpop.f32.mrb[0].mxu0
        %v2797 = vpop.f32.mrb[0].mxu0
        %v2798 = vadd.f32 %v2637, %v2797
        %v2799 = vpop.f32.mrb[0].mxu0
        %2800 = vmatprep.mubr.bf16.mxu0 %v1889
        %2801 = vmatmul.mubr.bf16.gmra.mrb[0].mxu0 %v1888
        %v2802 = vpop.f32.mrb[0].mxu0
        %v2803 = vadd.f32 %v2642, %v2802
        %v2804 = vpop.f32.mrb[0].mxu0
        %v2805 = vpop.f32.mrb[0].mxu0
        %v2806 = vadd.f32 %v2645, %v2805
        %v2807 = vpop.f32.mrb[0].mxu0
        %2808 = vmatprep.mubr.bf16.mxu0 %v1898
        %2809 = vmatmul.mubr.bf16.gmra.mrb[0].mxu0 %v1897
        %v2810 = vpop.f32.mrb[0].mxu0
        %v2811 = vadd.f32 %v2650, %v2810
        %v2812 = vpop.f32.mrb[0].mxu0
        %v2813 = vpop.f32.mrb[0].mxu0
        %v2814 = vadd.f32 %v2653, %v2813
        %v2815 = vpop.f32.mrb[0].mxu0
        %2816 = vmatprep.mubr.bf16.mxu0 %v1907
        %2817 = vmatmul.mubr.bf16.gmra.mrb[0].mxu0 %v1906
        %v2818 = vpop.f32.mrb[0].mxu0
        %v2819 = vadd.f32 %v2658, %v2818
        %v2820 = vpop.f32.mrb[0].mxu0
        %v2821 = vpop.f32.mrb[0].mxu0
        %v2822 = vadd.f32 %v2661, %v2821
        %v2823 = vpop.f32.mrb[0].mxu0
        %2824 = vmatprep.mubr.bf16.mxu0 %v1916
        %2825 = vmatmul.mubr.bf16.gmra.mrb[0].mxu0 %v1915
        %v2826 = vpop.f32.mrb[0].mxu0
        %v2827 = vadd.f32 %v2666, %v2826
        %v2828 = vpop.f32.mrb[0].mxu0
        %v2829 = vpop.f32.mrb[0].mxu0
        %v2830 = vadd.f32 %v2669, %v2829
        %v2831 = vpop.f32.mrb[0].mxu0
        %2832 = vmatprep.mubr.bf16.mxu0 %v1925
        %2833 = vmatmul.mubr.bf16.gmra.mrb[0].mxu0 %v1924
        %v2834 = vpop.f32.mrb[0].mxu0
        %v2835 = vadd.f32 %v2674, %v2834
        %v2836 = vpop.f32.mrb[0].mxu0
        %v2837 = vpop.f32.mrb[0].mxu0
        %v2838 = vadd.f32 %v2677, %v2837
        %v2839 = vpop.f32.mrb[0].mxu0
        %2840 = vmatprep.mubr.bf16.mxu0 %v1934
        %2841 = vmatmul.mubr.bf16.gmra.mrb[0].mxu0 %v1933
        %v2842 = vpop.f32.mrb[0].mxu0
        %v2843 = vadd.f32 %v2682, %v2842
        %v2844 = vpop.f32.mrb[0].mxu0
        %v2845 = vpop.f32.mrb[0].mxu0
        %v2846 = vadd.f32 %v2685, %v2845
        %v2847 = vpop.f32.mrb[0].mxu0
        %2848 = vmatprep.mubr.bf16.mxu0 %v1943
        %2849 = vmatmul.mubr.bf16.gmra.mrb[0].mxu0 %v1942
        %v2850 = vpop.f32.mrb[0].mxu0
        %v2851 = vadd.f32 %v2690, %v2850
        %v2852 = vpop.f32.mrb[0].mxu0
        %v2853 = vpop.f32.mrb[0].mxu0
        %v2854 = vadd.f32 %v2693, %v2853
        %v2855 = vpop.f32.mrb[0].mxu0
        %2856 = vmatprep.mubr.bf16.mxu0 %v1952
        %2857 = vmatmul.mubr.bf16.gmra.mrb[0].mxu0 %v1951
        %v2858 = vpop.f32.mrb[0].mxu0
        %v2859 = vadd.f32 %v2698, %v2858
        %v2860 = vpop.f32.mrb[0].mxu0
        %v2861 = vpop.f32.mrb[0].mxu0
        %v2862 = vadd.f32 %v2701, %v2861
        %v2863 = vpop.f32.mrb[0].mxu0
        %2864 = vmatprep.mubr.bf16.mxu0 %v1961
        %2865 = vmatmul.mubr.bf16.gmra.mrb[0].mxu0 %v1960
        %v2866 = vpop.f32.mrb[0].mxu0
        %v2867 = vadd.f32 %v2706, %v2866
        %v2868 = vpop.f32.mrb[0].mxu0
        %v2869 = vpop.f32.mrb[0].mxu0
        %v2870 = vadd.f32 %v2709, %v2869
        %v2871 = vpop.f32.mrb[0].mxu0
        %2872 = vmatprep.mubr.bf16.mxu0 %v1970
        %2873 = vmatmul.mubr.bf16.gmra.mrb[0].mxu0 %v1969
        %v2874 = vpop.f32.mrb[0].mxu0
        %v2875 = vadd.f32 %v2714, %v2874
        %v2876 = vpop.f32.mrb[0].mxu0
        %v2877 = vpop.f32.mrb[0].mxu0
        %v2878 = vadd.f32 %v2717, %v2877
        %v2879 = vpop.f32.mrb[0].mxu0
        %2880 = vdwg.mxu0
        %2881 = vmatprep.subr.bf16.mxu0 0
        %2882 = vmatpush1.bf16.msra.mxu0 %v2447
        %2883 = vmatprep.subr.bf16.mxu0 0
        %2884 = vmatpush1.bf16.msra.mxu0 %v2448
        %2885 = vmatprep.subr.bf16.mxu0 0
        %2886 = vmatpush1.bf16.msra.mxu0 %v2449
        %2887 = vmatprep.subr.bf16.mxu0 0
        %2888 = vmatpush1.bf16.msra.mxu0 %v2450
        %2889 = vmatprep.subr.bf16.mxu0 0
        %2890 = vmatpush1.bf16.msra.mxu0 %v2451
        %2891 = vmatprep.subr.bf16.mxu0 0
        %2892 = vmatpush1.bf16.msra.mxu0 %v2452
        %2893 = vmatprep.subr.bf16.mxu0 0
        %2894 = vmatpush1.bf16.msra.mxu0 %v2453
        %2895 = vmatprep.subr.bf16.mxu0 0
        %2896 = vmatpush1.bf16.msra.mxu0 %v2454
        %2897 = vmatprep.subr.bf16.mxu0 0
        %2898 = vmatpush1.bf16.msra.mxu0 %v2455
        %2899 = vmatprep.subr.bf16.mxu0 0
        %2900 = vmatpush1.bf16.msra.mxu0 %v2456
        %2901 = vmatprep.subr.bf16.mxu0 0
        %2902 = vmatpush1.bf16.msra.mxu0 %v2457
        %2903 = vmatprep.subr.bf16.mxu0 0
        %2904 = vmatpush1.bf16.msra.mxu0 %v2458
        %2905 = vmatprep.subr.bf16.mxu0 0
        %2906 = vmatpush1.bf16.msra.mxu0 %v2459
        %2907 = vmatprep.subr.bf16.mxu0 0
        %2908 = vmatpush1.bf16.msra.mxu0 %v2460
        %2909 = vmatprep.subr.bf16.mxu0 0
        %2910 = vmatpush1.bf16.msra.mxu0 %v2461
        %2911 = vmatprep.subr.bf16.mxu0 0
        %2912 = vmatpush1.bf16.msra.mxu0 %v2462
        %2913 = vmatprep.mubr.bf16.mxu0 %v1837
        %2914 = vmatmul.mubr.bf16.gmra.mrb[0].mxu0 %v1836
        %v2915 = vpop.f32.mrb[0].mxu0
        %v2916 = vadd.f32 %v2755, %v2915
        %v2917 = vpop.f32.mrb[0].mxu0
        %v2918 = vpop.f32.mrb[0].mxu0
        %v2919 = vadd.f32 %v2758, %v2918
        %v2920 = vpop.f32.mrb[0].mxu0
        %2921 = vmatprep.mubr.bf16.mxu0 %v1846
        %2922 = vmatmul.mubr.bf16.gmra.mrb[0].mxu0 %v1845
        %v2923 = vpop.f32.mrb[0].mxu0
        %v2924 = vadd.f32 %v2763, %v2923
        %v2925 = vpop.f32.mrb[0].mxu0
        %v2926 = vpop.f32.mrb[0].mxu0
        %v2927 = vadd.f32 %v2766, %v2926
        %v2928 = vpop.f32.mrb[0].mxu0
        %2929 = vmatprep.mubr.bf16.mxu0 %v1855
        %2930 = vmatmul.mubr.bf16.gmra.mrb[0].mxu0 %v1854
        %v2931 = vpop.f32.mrb[0].mxu0
        %v2932 = vadd.f32 %v2771, %v2931
        %v2933 = vpop.f32.mrb[0].mxu0
        %v2934 = vpop.f32.mrb[0].mxu0
        %v2935 = vadd.f32 %v2774, %v2934
        %v2936 = vpop.f32.mrb[0].mxu0
        %2937 = vmatprep.mubr.bf16.mxu0 %v1864
        %2938 = vmatmul.mubr.bf16.gmra.mrb[0].mxu0 %v1863
        %v2939 = vpop.f32.mrb[0].mxu0
        %v2940 = vadd.f32 %v2779, %v2939
        %v2941 = vpop.f32.mrb[0].mxu0
        %v2942 = vpop.f32.mrb[0].mxu0
        %v2943 = vadd.f32 %v2782, %v2942
        %v2944 = vpop.f32.mrb[0].mxu0
        %2945 = vmatprep.mubr.bf16.mxu0 %v1873
        %2946 = vmatmul.mubr.bf16.gmra.mrb[0].mxu0 %v1872
        %v2947 = vpop.f32.mrb[0].mxu0
        %v2948 = vadd.f32 %v2787, %v2947
        %v2949 = vpop.f32.mrb[0].mxu0
        %v2950 = vpop.f32.mrb[0].mxu0
        %v2951 = vadd.f32 %v2790, %v2950
        %v2952 = vpop.f32.mrb[0].mxu0
        %2953 = vmatprep.mubr.bf16.mxu0 %v1882
        %2954 = vmatmul.mubr.bf16.gmra.mrb[0].mxu0 %v1881
        %v2955 = vpop.f32.mrb[0].mxu0
        %v2956 = vadd.f32 %v2795, %v2955
        %v2957 = vpop.f32.mrb[0].mxu0
        %v2958 = vpop.f32.mrb[0].mxu0
        %v2959 = vadd.f32 %v2798, %v2958
        %v2960 = vpop.f32.mrb[0].mxu0
        %2961 = vmatprep.mubr.bf16.mxu0 %v1891
        %2962 = vmatmul.mubr.bf16.gmra.mrb[0].mxu0 %v1890
        %v2963 = vpop.f32.mrb[0].mxu0
        %v2964 = vadd.f32 %v2803, %v2963
        %v2965 = vpop.f32.mrb[0].mxu0
        %v2966 = vpop.f32.mrb[0].mxu0
        %v2967 = vadd.f32 %v2806, %v2966
        %v2968 = vpop.f32.mrb[0].mxu0
        %2969 = vmatprep.mubr.bf16.mxu0 %v1900
        %2970 = vmatmul.mubr.bf16.gmra.mrb[0].mxu0 %v1899
        %v2971 = vpop.f32.mrb[0].mxu0
        %v2972 = vadd.f32 %v2811, %v2971
        %v2973 = vpop.f32.mrb[0].mxu0
        %v2974 = vpop.f32.mrb[0].mxu0
        %v2975 = vadd.f32 %v2814, %v2974
        %v2976 = vpop.f32.mrb[0].mxu0
        %2977 = vmatprep.mubr.bf16.mxu0 %v1909
        %2978 = vmatmul.mubr.bf16.gmra.mrb[0].mxu0 %v1908
        %v2979 = vpop.f32.mrb[0].mxu0
        %v2980 = vadd.f32 %v2819, %v2979
        %v2981 = vpop.f32.mrb[0].mxu0
        %v2982 = vpop.f32.mrb[0].mxu0
        %v2983 = vadd.f32 %v2822, %v2982
        %v2984 = vpop.f32.mrb[0].mxu0
        %2985 = vmatprep.mubr.bf16.mxu0 %v1918
        %2986 = vmatmul.mubr.bf16.gmra.mrb[0].mxu0 %v1917
        %v2987 = vpop.f32.mrb[0].mxu0
        %v2988 = vadd.f32 %v2827, %v2987
        %v2989 = vpop.f32.mrb[0].mxu0
        %v2990 = vpop.f32.mrb[0].mxu0
        %v2991 = vadd.f32 %v2830, %v2990
        %v2992 = vpop.f32.mrb[0].mxu0
        %2993 = vmatprep.mubr.bf16.mxu0 %v1927
        %2994 = vmatmul.mubr.bf16.gmra.mrb[0].mxu0 %v1926
        %v2995 = vpop.f32.mrb[0].mxu0
        %v2996 = vadd.f32 %v2835, %v2995
        %v2997 = vpop.f32.mrb[0].mxu0
        %v2998 = vpop.f32.mrb[0].mxu0
        %v2999 = vadd.f32 %v2838, %v2998
        %v3000 = vpop.f32.mrb[0].mxu0
        %3001 = vmatprep.mubr.bf16.mxu0 %v1936
        %3002 = vmatmul.mubr.bf16.gmra.mrb[0].mxu0 %v1935
        %v3003 = vpop.f32.mrb[0].mxu0
        %v3004 = vadd.f32 %v2843, %v3003
        %v3005 = vpop.f32.mrb[0].mxu0
        %v3006 = vpop.f32.mrb[0].mxu0
        %v3007 = vadd.f32 %v2846, %v3006
        %v3008 = vpop.f32.mrb[0].mxu0
        %3009 = vmatprep.mubr.bf16.mxu0 %v1945
        %3010 = vmatmul.mubr.bf16.gmra.mrb[0].mxu0 %v1944
        %v3011 = vpop.f32.mrb[0].mxu0
        %v3012 = vadd.f32 %v2851, %v3011
        %v3013 = vpop.f32.mrb[0].mxu0
        %v3014 = vpop.f32.mrb[0].mxu0
        %v3015 = vadd.f32 %v2854, %v3014
        %v3016 = vpop.f32.mrb[0].mxu0
        %3017 = vmatprep.mubr.bf16.mxu0 %v1954
        %3018 = vmatmul.mubr.bf16.gmra.mrb[0].mxu0 %v1953
        %v3019 = vpop.f32.mrb[0].mxu0
        %v3020 = vadd.f32 %v2859, %v3019
        %v3021 = vpop.f32.mrb[0].mxu0
        %v3022 = vpop.f32.mrb[0].mxu0
        %v3023 = vadd.f32 %v2862, %v3022
        %v3024 = vpop.f32.mrb[0].mxu0
        %3025 = vmatprep.mubr.bf16.mxu0 %v1963
        %3026 = vmatmul.mubr.bf16.gmra.mrb[0].mxu0 %v1962
        %v3027 = vpop.f32.mrb[0].mxu0
        %v3028 = vadd.f32 %v2867, %v3027
        %v3029 = vpop.f32.mrb[0].mxu0
        %v3030 = vpop.f32.mrb[0].mxu0
        %v3031 = vadd.f32 %v2870, %v3030
        %v3032 = vpop.f32.mrb[0].mxu0
        %3033 = vmatprep.mubr.bf16.mxu0 %v1972
        %3034 = vmatmul.mubr.bf16.gmra.mrb[0].mxu0 %v1971
        %v3035 = vpop.f32.mrb[0].mxu0
        %v3036 = vadd.f32 %v2875, %v3035
        %v3037 = vpop.f32.mrb[0].mxu0
        %v3038 = vpop.f32.mrb[0].mxu0
        %v3039 = vadd.f32 %v2878, %v3038
        %v3040 = vpop.f32.mrb[0].mxu0
        %3041 = vdwg.mxu0
        %3042 = vmatprep.subr.bf16.mxu0 0
        %3043 = vmatpush1.bf16.msra.mxu0 %v2463
        %3044 = vmatprep.subr.bf16.mxu0 0
        %3045 = vmatpush1.bf16.msra.mxu0 %v2464
        %3046 = vmatprep.subr.bf16.mxu0 0
        %3047 = vmatpush1.bf16.msra.mxu0 %v2465
        %3048 = vmatprep.subr.bf16.mxu0 0
        %3049 = vmatpush1.bf16.msra.mxu0 %v2466
        %3050 = vmatprep.subr.bf16.mxu0 0
        %3051 = vmatpush1.bf16.msra.mxu0 %v2467
        %3052 = vmatprep.subr.bf16.mxu0 0
        %3053 = vmatpush1.bf16.msra.mxu0 %v2468
        %3054 = vmatprep.subr.bf16.mxu0 0
        %3055 = vmatpush1.bf16.msra.mxu0 %v2469
        %3056 = vmatprep.subr.bf16.mxu0 0
        %3057 = vmatpush1.bf16.msra.mxu0 %v2470
        %3058 = vmatprep.subr.bf16.mxu0 0
        %3059 = vmatpush1.bf16.msra.mxu0 %v2471
        %3060 = vmatprep.subr.bf16.mxu0 0
        %3061 = vmatpush1.bf16.msra.mxu0 %v2472
        %3062 = vmatprep.subr.bf16.mxu0 0
        %3063 = vmatpush1.bf16.msra.mxu0 %v2473
        %3064 = vmatprep.subr.bf16.mxu0 0
        %3065 = vmatpush1.bf16.msra.mxu0 %v2474
        %3066 = vmatprep.subr.bf16.mxu0 0
        %3067 = vmatpush1.bf16.msra.mxu0 %v2475
        %3068 = vmatprep.subr.bf16.mxu0 0
        %3069 = vmatpush1.bf16.msra.mxu0 %v2476
        %3070 = vmatprep.subr.bf16.mxu0 0
        %3071 = vmatpush1.bf16.msra.mxu0 %v2477
        %3072 = vmatprep.subr.bf16.mxu0 0
        %3073 = vmatpush1.bf16.msra.mxu0 %v2478
        %3074 = vmatprep.mubr.bf16.mxu0 %v1839
        %3075 = vmatmul.mubr.bf16.gmra.mrb[0].mxu0 %v1838
        %v3076 = vpop.f32.mrb[0].mxu0
        %v3077 = vadd.f32 %v2916, %v3076
        %v3078 = vpop.f32.mrb[0].mxu0
        %v3079 = vpop.f32.mrb[0].mxu0
        %v3080 = vadd.f32 %v2919, %v3079
        %v3081 = vpop.f32.mrb[0].mxu0
        %3082 = vmatprep.mubr.bf16.mxu0 %v1848
        %3083 = vmatmul.mubr.bf16.gmra.mrb[0].mxu0 %v1847
        %v3084 = vpop.f32.mrb[0].mxu0
        %v3085 = vadd.f32 %v2924, %v3084
        %v3086 = vpop.f32.mrb[0].mxu0
        %v3087 = vpop.f32.mrb[0].mxu0
        %v3088 = vadd.f32 %v2927, %v3087
        %v3089 = vpop.f32.mrb[0].mxu0
        %3090 = vmatprep.mubr.bf16.mxu0 %v1857
        %3091 = vmatmul.mubr.bf16.gmra.mrb[0].mxu0 %v1856
        %v3092 = vpop.f32.mrb[0].mxu0
        %v3093 = vadd.f32 %v2932, %v3092
        %v3094 = vpop.f32.mrb[0].mxu0
        %v3095 = vpop.f32.mrb[0].mxu0
        %v3096 = vadd.f32 %v2935, %v3095
        %v3097 = vpop.f32.mrb[0].mxu0
        %3098 = vmatprep.mubr.bf16.mxu0 %v1866
        %3099 = vmatmul.mubr.bf16.gmra.mrb[0].mxu0 %v1865
        %v3100 = vpop.f32.mrb[0].mxu0
        %v3101 = vadd.f32 %v2940, %v3100
        %v3102 = vpop.f32.mrb[0].mxu0
        %v3103 = vpop.f32.mrb[0].mxu0
        %v3104 = vadd.f32 %v2943, %v3103
        %v3105 = vpop.f32.mrb[0].mxu0
        %3106 = vmatprep.mubr.bf16.mxu0 %v1875
        %3107 = vmatmul.mubr.bf16.gmra.mrb[0].mxu0 %v1874
        %v3108 = vpop.f32.mrb[0].mxu0
        %v3109 = vadd.f32 %v2948, %v3108
        %v3110 = vpop.f32.mrb[0].mxu0
        %v3111 = vpop.f32.mrb[0].mxu0
        %v3112 = vadd.f32 %v2951, %v3111
        %v3113 = vpop.f32.mrb[0].mxu0
        %3114 = vmatprep.mubr.bf16.mxu0 %v1884
        %3115 = vmatmul.mubr.bf16.gmra.mrb[0].mxu0 %v1883
        %v3116 = vpop.f32.mrb[0].mxu0
        %v3117 = vadd.f32 %v2956, %v3116
        %v3118 = vpop.f32.mrb[0].mxu0
        %v3119 = vpop.f32.mrb[0].mxu0
        %v3120 = vadd.f32 %v2959, %v3119
        %v3121 = vpop.f32.mrb[0].mxu0
        %3122 = vmatprep.mubr.bf16.mxu0 %v1893
        %3123 = vmatmul.mubr.bf16.gmra.mrb[0].mxu0 %v1892
        %v3124 = vpop.f32.mrb[0].mxu0
        %v3125 = vadd.f32 %v2964, %v3124
        %v3126 = vpop.f32.mrb[0].mxu0
        %v3127 = vpop.f32.mrb[0].mxu0
        %v3128 = vadd.f32 %v2967, %v3127
        %v3129 = vpop.f32.mrb[0].mxu0
        %3130 = vmatprep.mubr.bf16.mxu0 %v1902
        %3131 = vmatmul.mubr.bf16.gmra.mrb[0].mxu0 %v1901
        %v3132 = vpop.f32.mrb[0].mxu0
        %v3133 = vadd.f32 %v2972, %v3132
        %v3134 = vpop.f32.mrb[0].mxu0
        %v3135 = vpop.f32.mrb[0].mxu0
        %v3136 = vadd.f32 %v2975, %v3135
        %v3137 = vpop.f32.mrb[0].mxu0
        %3138 = vmatprep.mubr.bf16.mxu0 %v1911
        %3139 = vmatmul.mubr.bf16.gmra.mrb[0].mxu0 %v1910
        %v3140 = vpop.f32.mrb[0].mxu0
        %v3141 = vadd.f32 %v2980, %v3140
        %v3142 = vpop.f32.mrb[0].mxu0
        %v3143 = vpop.f32.mrb[0].mxu0
        %v3144 = vadd.f32 %v2983, %v3143
        %v3145 = vpop.f32.mrb[0].mxu0
        %3146 = vmatprep.mubr.bf16.mxu0 %v1920
        %3147 = vmatmul.mubr.bf16.gmra.mrb[0].mxu0 %v1919
        %v3148 = vpop.f32.mrb[0].mxu0
        %v3149 = vadd.f32 %v2988, %v3148
        %v3150 = vpop.f32.mrb[0].mxu0
        %v3151 = vpop.f32.mrb[0].mxu0
        %v3152 = vadd.f32 %v2991, %v3151
        %v3153 = vpop.f32.mrb[0].mxu0
        %3154 = vmatprep.mubr.bf16.mxu0 %v1929
        %3155 = vmatmul.mubr.bf16.gmra.mrb[0].mxu0 %v1928
        %v3156 = vpop.f32.mrb[0].mxu0
        %v3157 = vadd.f32 %v2996, %v3156
        %v3158 = vpop.f32.mrb[0].mxu0
        %v3159 = vpop.f32.mrb[0].mxu0
        %v3160 = vadd.f32 %v2999, %v3159
        %v3161 = vpop.f32.mrb[0].mxu0
        %3162 = vmatprep.mubr.bf16.mxu0 %v1938
        %3163 = vmatmul.mubr.bf16.gmra.mrb[0].mxu0 %v1937
        %v3164 = vpop.f32.mrb[0].mxu0
        %v3165 = vadd.f32 %v3004, %v3164
        %v3166 = vpop.f32.mrb[0].mxu0
        %v3167 = vpop.f32.mrb[0].mxu0
        %v3168 = vadd.f32 %v3007, %v3167
        %v3169 = vpop.f32.mrb[0].mxu0
        %3170 = vmatprep.mubr.bf16.mxu0 %v1947
        %3171 = vmatmul.mubr.bf16.gmra.mrb[0].mxu0 %v1946
        %v3172 = vpop.f32.mrb[0].mxu0
        %v3173 = vadd.f32 %v3012, %v3172
        %v3174 = vpop.f32.mrb[0].mxu0
        %v3175 = vpop.f32.mrb[0].mxu0
        %v3176 = vadd.f32 %v3015, %v3175
        %v3177 = vpop.f32.mrb[0].mxu0
        %3178 = vmatprep.mubr.bf16.mxu0 %v1956
        %3179 = vmatmul.mubr.bf16.gmra.mrb[0].mxu0 %v1955
        %v3180 = vpop.f32.mrb[0].mxu0
        %v3181 = vadd.f32 %v3020, %v3180
        %v3182 = vpop.f32.mrb[0].mxu0
        %v3183 = vpop.f32.mrb[0].mxu0
        %v3184 = vadd.f32 %v3023, %v3183
        %v3185 = vpop.f32.mrb[0].mxu0
        %3186 = vmatprep.mubr.bf16.mxu0 %v1965
        %3187 = vmatmul.mubr.bf16.gmra.mrb[0].mxu0 %v1964
        %v3188 = vpop.f32.mrb[0].mxu0
        %v3189 = vadd.f32 %v3028, %v3188
        %v3190 = vpop.f32.mrb[0].mxu0
        %v3191 = vpop.f32.mrb[0].mxu0
        %v3192 = vadd.f32 %v3031, %v3191
        %v3193 = vpop.f32.mrb[0].mxu0
        %3194 = vmatprep.mubr.bf16.mxu0 %v1974
        %3195 = vmatmul.mubr.bf16.gmra.mrb[0].mxu0 %v1973
        %v3196 = vpop.f32.mrb[0].mxu0
        %v3197 = vadd.f32 %v3036, %v3196
        %v3198 = vpop.f32.mrb[0].mxu0
        %v3199 = vpop.f32.mrb[0].mxu0
        %v3200 = vadd.f32 %v3039, %v3199
        %v3201 = vpop.f32.mrb[0].mxu0
        %3202 = vdwg.mxu0
        %3203 = vmatprep.subr.bf16.mxu0 0
        %3204 = vmatpush1.bf16.msra.mxu0 %v2479
        %3205 = vmatprep.subr.bf16.mxu0 0
        %3206 = vmatpush1.bf16.msra.mxu0 %v2480
        %3207 = vmatprep.subr.bf16.mxu0 0
        %3208 = vmatpush1.bf16.msra.mxu0 %v2481
        %3209 = vmatprep.subr.bf16.mxu0 0
        %3210 = vmatpush1.bf16.msra.mxu0 %v2482
        %3211 = vmatprep.subr.bf16.mxu0 0
        %3212 = vmatpush1.bf16.msra.mxu0 %v2483
        %3213 = vmatprep.subr.bf16.mxu0 0
        %3214 = vmatpush1.bf16.msra.mxu0 %v2484
        %3215 = vmatprep.subr.bf16.mxu0 0
        %3216 = vmatpush1.bf16.msra.mxu0 %v2485
        %3217 = vmatprep.subr.bf16.mxu0 0
        %3218 = vmatpush1.bf16.msra.mxu0 %v2486
        %3219 = vmatprep.subr.bf16.mxu0 0
        %3220 = vmatpush1.bf16.msra.mxu0 0
        %3221 = vmatprep.subr.bf16.mxu0 0
        %3222 = vmatpush1.bf16.msra.mxu0 0
        %3223 = vmatprep.subr.bf16.mxu0 0
        %3224 = vmatpush1.bf16.msra.mxu0 0
        %3225 = vmatprep.subr.bf16.mxu0 0
        %3226 = vmatpush1.bf16.msra.mxu0 0
        %3227 = vmatprep.subr.bf16.mxu0 0
        %3228 = vmatpush1.bf16.msra.mxu0 0
        %3229 = vmatprep.subr.bf16.mxu0 0
        %3230 = vmatpush1.bf16.msra.mxu0 0
        %3231 = vmatprep.subr.bf16.mxu0 0
        %3232 = vmatpush1.bf16.msra.mxu0 0
        %3233 = vmatprep.subr.bf16.mxu0 0
        %3234 = vmatpush1.bf16.msra.mxu0 0
        %3235 = vmatprep.mubr.bf16.mxu0 0
        %3236 = vmatmul.mubr.bf16.gmra.mrb[0].mxu0 %v1840
        %v3237 = vpop.f32.mrb[0].mxu0
        %v3238 = vadd.f32 %v3077, %v3237
        %v3239 = vpop.f32.mrb[0].mxu0
        %v3240 = vpop.f32.mrb[0].mxu0
        %v3241 = vadd.f32 %v3080, %v3240
        %v3242 = vpop.f32.mrb[0].mxu0
        %3243 = vmatprep.mubr.bf16.mxu0 0
        %3244 = vmatmul.mubr.bf16.gmra.mrb[0].mxu0 %v1849
        %v3245 = vpop.f32.mrb[0].mxu0
        %v3246 = vadd.f32 %v3085, %v3245
        %v3247 = vpop.f32.mrb[0].mxu0
        %v3248 = vpop.f32.mrb[0].mxu0
        %v3249 = vadd.f32 %v3088, %v3248
        %v3250 = vpop.f32.mrb[0].mxu0
        %3251 = vmatprep.mubr.bf16.mxu0 0
        %3252 = vmatmul.mubr.bf16.gmra.mrb[0].mxu0 %v1858
        %v3253 = vpop.f32.mrb[0].mxu0
        %v3254 = vadd.f32 %v3093, %v3253
        %v3255 = vpop.f32.mrb[0].mxu0
        %v3256 = vpop.f32.mrb[0].mxu0
        %v3257 = vadd.f32 %v3096, %v3256
        %v3258 = vpop.f32.mrb[0].mxu0
        %3259 = vmatprep.mubr.bf16.mxu0 0
        %3260 = vmatmul.mubr.bf16.gmra.mrb[0].mxu0 %v1867
        %v3261 = vpop.f32.mrb[0].mxu0
        %v3262 = vadd.f32 %v3101, %v3261
        %v3263 = vpop.f32.mrb[0].mxu0
        %v3264 = vpop.f32.mrb[0].mxu0
        %v3265 = vadd.f32 %v3104, %v3264
        %v3266 = vpop.f32.mrb[0].mxu0
        %3267 = vmatprep.mubr.bf16.mxu0 0
        %3268 = vmatmul.mubr.bf16.gmra.mrb[0].mxu0 %v1876
        %v3269 = vpop.f32.mrb[0].mxu0
        %v3270 = vadd.f32 %v3109, %v3269
        %v3271 = vpop.f32.mrb[0].mxu0
        %v3272 = vpop.f32.mrb[0].mxu0
        %v3273 = vadd.f32 %v3112, %v3272
        %v3274 = vpop.f32.mrb[0].mxu0
        %3275 = vmatprep.mubr.bf16.mxu0 0
        %3276 = vmatmul.mubr.bf16.gmra.mrb[0].mxu0 %v1885
        %v3277 = vpop.f32.mrb[0].mxu0
        %v3278 = vadd.f32 %v3117, %v3277
        %v3279 = vpop.f32.mrb[0].mxu0
        %v3280 = vpop.f32.mrb[0].mxu0
        %v3281 = vadd.f32 %v3120, %v3280
        %v3282 = vpop.f32.mrb[0].mxu0
        %3283 = vmatprep.mubr.bf16.mxu0 0
        %3284 = vmatmul.mubr.bf16.gmra.mrb[0].mxu0 %v1894
        %v3285 = vpop.f32.mrb[0].mxu0
        %v3286 = vadd.f32 %v3125, %v3285
        %v3287 = vpop.f32.mrb[0].mxu0
        %v3288 = vpop.f32.mrb[0].mxu0
        %v3289 = vadd.f32 %v3128, %v3288
        %v3290 = vpop.f32.mrb[0].mxu0
        %3291 = vmatprep.mubr.bf16.mxu0 0
        %3292 = vmatmul.mubr.bf16.gmra.mrb[0].mxu0 %v1903
        %v3293 = vpop.f32.mrb[0].mxu0
        %v3294 = vadd.f32 %v3133, %v3293
        %v3295 = vpop.f32.mrb[0].mxu0
        %v3296 = vpop.f32.mrb[0].mxu0
        %v3297 = vadd.f32 %v3136, %v3296
        %v3298 = vpop.f32.mrb[0].mxu0
        %3299 = vmatprep.mubr.bf16.mxu0 0
        %3300 = vmatmul.mubr.bf16.gmra.mrb[0].mxu0 %v1912
        %v3301 = vpop.f32.mrb[0].mxu0
        %v3302 = vadd.f32 %v3141, %v3301
        %v3303 = vpop.f32.mrb[0].mxu0
        %v3304 = vpop.f32.mrb[0].mxu0
        %v3305 = vadd.f32 %v3144, %v3304
        %v3306 = vpop.f32.mrb[0].mxu0
        %3307 = vmatprep.mubr.bf16.mxu0 0
        %3308 = vmatmul.mubr.bf16.gmra.mrb[0].mxu0 %v1921
        %v3309 = vpop.f32.mrb[0].mxu0
        %v3310 = vadd.f32 %v3149, %v3309
        %v3311 = vpop.f32.mrb[0].mxu0
        %v3312 = vpop.f32.mrb[0].mxu0
        %v3313 = vadd.f32 %v3152, %v3312
        %v3314 = vpop.f32.mrb[0].mxu0
        %3315 = vmatprep.mubr.bf16.mxu0 0
        %3316 = vmatmul.mubr.bf16.gmra.mrb[0].mxu0 %v1930
        %v3317 = vpop.f32.mrb[0].mxu0
        %v3318 = vadd.f32 %v3157, %v3317
        %v3319 = vpop.f32.mrb[0].mxu0
        %v3320 = vpop.f32.mrb[0].mxu0
        %v3321 = vadd.f32 %v3160, %v3320
        %v3322 = vpop.f32.mrb[0].mxu0
        %3323 = vmatprep.mubr.bf16.mxu0 0
        %3324 = vmatmul.mubr.bf16.gmra.mrb[0].mxu0 %v1939
        %v3325 = vpop.f32.mrb[0].mxu0
        %v3326 = vadd.f32 %v3165, %v3325
        %v3327 = vpop.f32.mrb[0].mxu0
        %v3328 = vpop.f32.mrb[0].mxu0
        %v3329 = vadd.f32 %v3168, %v3328
        %v3330 = vpop.f32.mrb[0].mxu0
        %3331 = vmatprep.mubr.bf16.mxu0 0
        %3332 = vmatmul.mubr.bf16.gmra.mrb[0].mxu0 %v1948
        %v3333 = vpop.f32.mrb[0].mxu0
        %v3334 = vadd.f32 %v3173, %v3333
        %v3335 = vpop.f32.mrb[0].mxu0
        %v3336 = vpop.f32.mrb[0].mxu0
        %v3337 = vadd.f32 %v3176, %v3336
        %v3338 = vpop.f32.mrb[0].mxu0
        %3339 = vmatprep.mubr.bf16.mxu0 0
        %3340 = vmatmul.mubr.bf16.gmra.mrb[0].mxu0 %v1957
        %v3341 = vpop.f32.mrb[0].mxu0
        %v3342 = vadd.f32 %v3181, %v3341
        %v3343 = vpop.f32.mrb[0].mxu0
        %v3344 = vpop.f32.mrb[0].mxu0
        %v3345 = vadd.f32 %v3184, %v3344
        %v3346 = vpop.f32.mrb[0].mxu0
        %3347 = vmatprep.mubr.bf16.mxu0 0
        %3348 = vmatmul.mubr.bf16.gmra.mrb[0].mxu0 %v1966
        %v3349 = vpop.f32.mrb[0].mxu0
        %v3350 = vadd.f32 %v3189, %v3349
        %v3351 = vpop.f32.mrb[0].mxu0
        %v3352 = vpop.f32.mrb[0].mxu0
        %v3353 = vadd.f32 %v3192, %v3352
        %v3354 = vpop.f32.mrb[0].mxu0
        %3355 = vmatprep.mubr.bf16.mxu0 0
        %3356 = vmatmul.mubr.bf16.gmra.mrb[0].mxu0 %v1975
        %v3357 = vpop.f32.mrb[0].mxu0
        %v3358 = vadd.f32 %v3197, %v3357
        %v3359 = vpop.f32.mrb[0].mxu0
        %v3360 = vpop.f32.mrb[0].mxu0
        %v3361 = vadd.f32 %v3200, %v3360
        %v3362 = vpop.f32.mrb[0].mxu0
        %3363 = vdwg.mxu0
        %v3364 = vmax.f32 %v3238, 0.0
        %v3365 = vmax.f32 %v3241, 0.0
        %v3366 = vmax.f32 %v3246, 0.0
        %v3367 = vmax.f32 %v3249, 0.0
        %v3368 = vmax.f32 %v3254, 0.0
        %v3369 = vmax.f32 %v3257, 0.0
        %v3370 = vmax.f32 %v3262, 0.0
        %v3371 = vmax.f32 %v3265, 0.0
        %v3372 = vmax.f32 %v3270, 0.0
        %v3373 = vmax.f32 %v3273, 0.0
        %v3374 = vmax.f32 %v3278, 0.0
        %v3375 = vmax.f32 %v3281, 0.0
        %v3376 = vmax.f32 %v3286, 0.0
        %v3377 = vmax.f32 %v3289, 0.0
        %v3378 = vmax.f32 %v3294, 0.0
        %v3379 = vmax.f32 %v3297, 0.0
        %v3380 = vmax.f32 %v3302, 0.0
        %v3381 = vmax.f32 %v3305, 0.0
        %v3382 = vmax.f32 %v3310, 0.0
        %v3383 = vmax.f32 %v3313, 0.0
        %v3384 = vmax.f32 %v3318, 0.0
        %v3385 = vmax.f32 %v3321, 0.0
        %v3386 = vmax.f32 %v3326, 0.0
        %v3387 = vmax.f32 %v3329, 0.0
        %v3388 = vmax.f32 %v3334, 0.0
        %v3389 = vmax.f32 %v3337, 0.0
        %v3390 = vmax.f32 %v3342, 0.0
        %v3391 = vmax.f32 %v3345, 0.0
        %v3392 = vmax.f32 %v3350, 0.0
        %v3393 = vmax.f32 %v3353, 0.0
        %v3394 = vmax.f32 %v3358, 0.0
        %v3395 = vmax.f32 %v3361, 0.0
        %v3396 = vpack.c.bf16 %v3365, %v3364
        %v3397 = vpack.c.bf16 %v3367, %v3366
        %v3398 = vpack.c.bf16 %v3369, %v3368
        %v3399 = vpack.c.bf16 %v3371, %v3370
        %v3400 = vpack.c.bf16 %v3373, %v3372
        %v3401 = vpack.c.bf16 %v3375, %v3374
        %v3402 = vpack.c.bf16 %v3377, %v3376
        %v3403 = vpack.c.bf16 %v3379, %v3378
        %v3404 = vpack.c.bf16 %v3381, %v3380
        %v3405 = vpack.c.bf16 %v3383, %v3382
        %v3406 = vpack.c.bf16 %v3385, %v3384
        %v3407 = vpack.c.bf16 %v3387, %v3386
        %v3408 = vpack.c.bf16 %v3389, %v3388
        %v3409 = vpack.c.bf16 %v3391, %v3390
        %v3410 = vpack.c.bf16 %v3393, %v3392
        %v3411 = vpack.c.bf16 %v3395, %v3394
        %v3428 = vunpack.c.l.b16 %v3396
        %v3429 = vunpack.c.h.b16 %v3396
        %v3430 = vunpack.c.l.b16 %v3397
        %v3431 = vunpack.c.h.b16 %v3397
        %v3432 = vunpack.c.l.b16 %v3398
        %v3433 = vunpack.c.h.b16 %v3398
        %v3434 = vunpack.c.l.b16 %v3399
        %v3435 = vunpack.c.h.b16 %v3399
        %v3436 = vunpack.c.l.b16 %v3400
        %v3437 = vunpack.c.h.b16 %v3400
        %v3438 = vunpack.c.l.b16 %v3401
        %v3439 = vunpack.c.h.b16 %v3401
        %v3440 = vunpack.c.l.b16 %v3402
        %v3441 = vunpack.c.h.b16 %v3402
        %v3442 = vunpack.c.l.b16 %v3403
        %v3443 = vunpack.c.h.b16 %v3403
        %v3444 = vunpack.c.l.b16 %v3404
        %v3445 = vunpack.c.h.b16 %v3404
        %v3446 = vunpack.c.l.b16 %v3405
        %v3447 = vunpack.c.h.b16 %v3405
        %v3448 = vunpack.c.l.b16 %v3406
        %v3449 = vunpack.c.h.b16 %v3406
        %v3450 = vunpack.c.l.b16 %v3407
        %v3451 = vunpack.c.h.b16 %v3407
        %v3452 = vunpack.c.l.b16 %v3408
        %v3453 = vunpack.c.h.b16 %v3408
        %v3454 = vunpack.c.l.b16 %v3409
        %v3455 = vunpack.c.h.b16 %v3409
        %v3456 = vunpack.c.l.b16 %v3410
        %v3457 = vunpack.c.h.b16 %v3410
        %v3458 = vunpack.c.l.b16 %v3411
        %v3459 = vunpack.c.h.b16 %v3411
        %v3460 = vpack.c.b16 %v3428, %v3428
        %v3461 = vpack.c.b16 %v3429, %v3429
        %v3462 = vpack.c.b16 %v3430, %v3430
        %v3463 = vpack.c.b16 %v3431, %v3431
        %v3464 = vpack.c.b16 %v3432, %v3432
        %v3465 = vpack.c.b16 %v3433, %v3433
        %v3466 = vpack.c.b16 %v3434, %v3434
        %v3467 = vpack.c.b16 %v3435, %v3435
        %v3468 = vpack.c.b16 %v3436, %v3436
        %v3469 = vpack.c.b16 %v3437, %v3437
        %v3470 = vpack.c.b16 %v3438, %v3438
        %v3471 = vpack.c.b16 %v3439, %v3439
        %v3472 = vpack.c.b16 %v3440, %v3440
        %v3473 = vpack.c.b16 %v3441, %v3441
        %v3474 = vpack.c.b16 %v3442, %v3442
        %v3475 = vpack.c.b16 %v3443, %v3443
        %v3476 = vpack.c.b16 %v3444, %v3444
        %v3477 = vpack.c.b16 %v3445, %v3445
        %v3478 = vpack.c.b16 %v3446, %v3446
        %v3479 = vpack.c.b16 %v3447, %v3447
        %v3480 = vpack.c.b16 %v3448, %v3448
        %v3481 = vpack.c.b16 %v3449, %v3449
        %v3482 = vpack.c.b16 %v3450, %v3450
        %v3483 = vpack.c.b16 %v3451, %v3451
        %v3484 = vpack.c.b16 %v3452, %v3452
        %v3485 = vpack.c.b16 %v3453, %v3453
        %v3486 = vpack.c.b16 %v3454, %v3454
        %v3487 = vpack.c.b16 %v3455, %v3455
        %v3488 = vpack.c.b16 %v3456, %v3456
        %v3489 = vpack.c.b16 %v3457, %v3457
        %v3490 = vpack.c.b16 %v3458, %v3458
        %v3491 = vpack.c.b16 %v3459, %v3459
        %v3493 = vshrl.u32 %v3460, 16
        %v3495 = vrot.slane %v3493, 7
        %v3496 = vshll.u32 %v3460, 16
        %v3498 = vor.u32 %v3495, %v3496
        %v3499 = vrot.slane %v3495, 4
        %v3501 = vshrl.u32 %v3461, 16
        %v3503 = vrot.slane %v3501, 7
        %v3504 = vshll.u32 %v3461, 16
        %v3506 = vor.u32 %v3503, %v3504
        %v3507 = vsel %vm361, %v3499, %v3506
        %v3508 = vrot.slane %v3503, 4
        %v3510 = vshrl.u32 %v3462, 16
        %v3512 = vrot.slane %v3510, 7
        %v3513 = vshll.u32 %v3462, 16
        %v3515 = vor.u32 %v3512, %v3513
        %v3516 = vrot.slane %v3512, 4
        %v3518 = vshrl.u32 %v3463, 16
        %v3520 = vrot.slane %v3518, 7
        %v3521 = vshll.u32 %v3463, 16
        %v3523 = vor.u32 %v3520, %v3521
        %v3524 = vsel %vm361, %v3516, %v3523
        %v3525 = vrot.slane %v3520, 4
        %v3527 = vshrl.u32 %v3464, 16
        %v3529 = vrot.slane %v3527, 7
        %v3530 = vshll.u32 %v3464, 16
        %v3532 = vor.u32 %v3529, %v3530
        %v3533 = vrot.slane %v3529, 4
        %v3535 = vshrl.u32 %v3465, 16
        %v3537 = vrot.slane %v3535, 7
        %v3538 = vshll.u32 %v3465, 16
        %v3540 = vor.u32 %v3537, %v3538
        %v3541 = vsel %vm361, %v3533, %v3540
        %v3542 = vrot.slane %v3537, 4
        %v3544 = vshrl.u32 %v3466, 16
        %v3546 = vrot.slane %v3544, 7
        %v3547 = vshll.u32 %v3466, 16
        %v3549 = vor.u32 %v3546, %v3547
        %v3550 = vrot.slane %v3546, 4
        %v3552 = vshrl.u32 %v3467, 16
        %v3554 = vrot.slane %v3552, 7
        %v3555 = vshll.u32 %v3467, 16
        %v3557 = vor.u32 %v3554, %v3555
        %v3558 = vsel %vm361, %v3550, %v3557
        %v3559 = vrot.slane %v3554, 4
        %v3561 = vshrl.u32 %v3468, 16
        %v3563 = vrot.slane %v3561, 7
        %v3564 = vshll.u32 %v3468, 16
        %v3566 = vor.u32 %v3563, %v3564
        %v3567 = vrot.slane %v3563, 4
        %v3569 = vshrl.u32 %v3469, 16
        %v3571 = vrot.slane %v3569, 7
        %v3572 = vshll.u32 %v3469, 16
        %v3574 = vor.u32 %v3571, %v3572
        %v3575 = vsel %vm361, %v3567, %v3574
        %v3576 = vrot.slane %v3571, 4
        %v3578 = vshrl.u32 %v3470, 16
        %v3580 = vrot.slane %v3578, 7
        %v3581 = vshll.u32 %v3470, 16
        %v3583 = vor.u32 %v3580, %v3581
        %v3584 = vrot.slane %v3580, 4
        %v3586 = vshrl.u32 %v3471, 16
        %v3588 = vrot.slane %v3586, 7
        %v3589 = vshll.u32 %v3471, 16
        %v3591 = vor.u32 %v3588, %v3589
        %v3592 = vsel %vm361, %v3584, %v3591
        %v3593 = vrot.slane %v3588, 4
        %v3595 = vshrl.u32 %v3472, 16
        %v3597 = vrot.slane %v3595, 7
        %v3598 = vshll.u32 %v3472, 16
        %v3600 = vor.u32 %v3597, %v3598
        %v3601 = vrot.slane %v3597, 4
        %v3603 = vshrl.u32 %v3473, 16
        %v3605 = vrot.slane %v3603, 7
        %v3606 = vshll.u32 %v3473, 16
        %v3608 = vor.u32 %v3605, %v3606
        %v3609 = vsel %vm361, %v3601, %v3608
        %v3610 = vrot.slane %v3605, 4
        %v3612 = vshrl.u32 %v3474, 16
        %v3614 = vrot.slane %v3612, 7
        %v3615 = vshll.u32 %v3474, 16
        %v3617 = vor.u32 %v3614, %v3615
        %v3618 = vrot.slane %v3614, 4
        %v3620 = vshrl.u32 %v3475, 16
        %v3622 = vrot.slane %v3620, 7
        %v3623 = vshll.u32 %v3475, 16
        %v3625 = vor.u32 %v3622, %v3623
        %v3626 = vsel %vm361, %v3618, %v3625
        %v3627 = vrot.slane %v3622, 4
        %v3629 = vshrl.u32 %v3476, 16
        %v3631 = vrot.slane %v3629, 7
        %v3632 = vshll.u32 %v3476, 16
        %v3634 = vor.u32 %v3631, %v3632
        %v3635 = vrot.slane %v3631, 4
        %v3637 = vshrl.u32 %v3477, 16
        %v3639 = vrot.slane %v3637, 7
        %v3640 = vshll.u32 %v3477, 16
        %v3642 = vor.u32 %v3639, %v3640
        %v3643 = vsel %vm361, %v3635, %v3642
        %v3644 = vrot.slane %v3639, 4
        %v3646 = vshrl.u32 %v3478, 16
        %v3648 = vrot.slane %v3646, 7
        %v3649 = vshll.u32 %v3478, 16
        %v3651 = vor.u32 %v3648, %v3649
        %v3652 = vrot.slane %v3648, 4
        %v3654 = vshrl.u32 %v3479, 16
        %v3656 = vrot.slane %v3654, 7
        %v3657 = vshll.u32 %v3479, 16
        %v3659 = vor.u32 %v3656, %v3657
        %v3660 = vsel %vm361, %v3652, %v3659
        %v3661 = vrot.slane %v3656, 4
        %v3663 = vshrl.u32 %v3480, 16
        %v3665 = vrot.slane %v3663, 7
        %v3666 = vshll.u32 %v3480, 16
        %v3668 = vor.u32 %v3665, %v3666
        %v3669 = vrot.slane %v3665, 4
        %v3671 = vshrl.u32 %v3481, 16
        %v3673 = vrot.slane %v3671, 7
        %v3674 = vshll.u32 %v3481, 16
        %v3676 = vor.u32 %v3673, %v3674
        %v3677 = vsel %vm361, %v3669, %v3676
        %v3678 = vrot.slane %v3673, 4
        %v3680 = vshrl.u32 %v3482, 16
        %v3682 = vrot.slane %v3680, 7
        %v3683 = vshll.u32 %v3482, 16
        %v3685 = vor.u32 %v3682, %v3683
        %v3686 = vrot.slane %v3682, 4
        %v3688 = vshrl.u32 %v3483, 16
        %v3690 = vrot.slane %v3688, 7
        %v3691 = vshll.u32 %v3483, 16
        %v3693 = vor.u32 %v3690, %v3691
        %v3694 = vsel %vm361, %v3686, %v3693
        %v3695 = vrot.slane %v3690, 4
        %v3697 = vshrl.u32 %v3484, 16
        %v3699 = vrot.slane %v3697, 7
        %v3700 = vshll.u32 %v3484, 16
        %v3702 = vor.u32 %v3699, %v3700
        %v3703 = vrot.slane %v3699, 4
        %v3705 = vshrl.u32 %v3485, 16
        %v3707 = vrot.slane %v3705, 7
        %v3708 = vshll.u32 %v3485, 16
        %v3710 = vor.u32 %v3707, %v3708
        %v3711 = vsel %vm361, %v3703, %v3710
        %v3712 = vrot.slane %v3707, 4
        %v3714 = vshrl.u32 %v3486, 16
        %v3716 = vrot.slane %v3714, 7
        %v3717 = vshll.u32 %v3486, 16
        %v3719 = vor.u32 %v3716, %v3717
        %v3720 = vrot.slane %v3716, 4
        %v3722 = vshrl.u32 %v3487, 16
        %v3724 = vrot.slane %v3722, 7
        %v3725 = vshll.u32 %v3487, 16
        %v3727 = vor.u32 %v3724, %v3725
        %v3728 = vsel %vm361, %v3720, %v3727
        %v3729 = vrot.slane %v3724, 4
        %v3731 = vshrl.u32 %v3488, 16
        %v3733 = vrot.slane %v3731, 7
        %v3734 = vshll.u32 %v3488, 16
        %v3736 = vor.u32 %v3733, %v3734
        %v3737 = vrot.slane %v3733, 4
        %v3739 = vshrl.u32 %v3489, 16
        %v3741 = vrot.slane %v3739, 7
        %v3742 = vshll.u32 %v3489, 16
        %v3744 = vor.u32 %v3741, %v3742
        %v3745 = vsel %vm361, %v3737, %v3744
        %v3746 = vrot.slane %v3741, 4
        %v3748 = vshrl.u32 %v3490, 16
        %v3750 = vrot.slane %v3748, 7
        %v3751 = vshll.u32 %v3490, 16
        %v3753 = vor.u32 %v3750, %v3751
        %v3754 = vrot.slane %v3750, 4
        %v3756 = vshrl.u32 %v3491, 16
        %v3758 = vrot.slane %v3756, 7
        %v3759 = vshll.u32 %v3491, 16
        %v3761 = vor.u32 %v3758, %v3759
        %v3762 = vsel %vm361, %v3754, %v3761
        %v3763 = vrot.slane %v3758, 4
        %v3812 = vld [vmem:[%s682] sm:$0xf]
        %v3813 = vsel %vm685, %v3498, %v3812
        %3814 = vst [vmem:[%s682] sm:$0xf] %v3813
        %3815 = vst [vmem:[%s682 + $0x4] sm:$0xf] %v3507
        %v3816 = vld [vmem:[%s682 + $0x8] sm:$0x1]
        %v3817 = vsel %vm691, %v3508, %v3816
        %3818 = vst [vmem:[%s682 + $0x8] sm:$0x1] %v3817
        %v3819 = vld [vmem:[%s682 + $0xc] sm:$0xf]
        %v3820 = vsel %vm685, %v3515, %v3819
        %3821 = vst [vmem:[%s682 + $0xc] sm:$0xf] %v3820
        %3822 = vst [vmem:[%s682 + $0x10] sm:$0xf] %v3524
        %v3823 = vld [vmem:[%s682 + $0x14] sm:$0x1]
        %v3824 = vsel %vm691, %v3525, %v3823
        %3825 = vst [vmem:[%s682 + $0x14] sm:$0x1] %v3824
        %v3826 = vld [vmem:[%s682 + $0x18] sm:$0xf]
        %v3827 = vsel %vm685, %v3532, %v3826
        %3828 = vst [vmem:[%s682 + $0x18] sm:$0xf] %v3827
        %3829 = vst [vmem:[%s682 + $0x1c] sm:$0xf] %v3541
        %v3830 = vld [vmem:[%s682 + $0x20] sm:$0x1]
        %v3831 = vsel %vm691, %v3542, %v3830
        %3832 = vst [vmem:[%s682 + $0x20] sm:$0x1] %v3831
        %v3833 = vld [vmem:[%s682 + $0x24] sm:$0xf]
        %v3834 = vsel %vm685, %v3549, %v3833
        %3835 = vst [vmem:[%s682 + $0x24] sm:$0xf] %v3834
        %3836 = vst [vmem:[%s682 + $0x28] sm:$0xf] %v3558
        %v3837 = vld [vmem:[%s682 + $0x2c] sm:$0x1]
        %v3838 = vsel %vm691, %v3559, %v3837
        %3839 = vst [vmem:[%s682 + $0x2c] sm:$0x1] %v3838
        %v3840 = vld [vmem:[%s682 + $0x30] sm:$0xf]
        %v3841 = vsel %vm685, %v3566, %v3840
        %3842 = vst [vmem:[%s682 + $0x30] sm:$0xf] %v3841
        %3843 = vst [vmem:[%s682 + $0x34] sm:$0xf] %v3575
        %v3844 = vld [vmem:[%s682 + $0x38] sm:$0x1]
        %v3845 = vsel %vm691, %v3576, %v3844
        %3846 = vst [vmem:[%s682 + $0x38] sm:$0x1] %v3845
        %v3847 = vld [vmem:[%s682 + $0x3c] sm:$0xf]
        %v3848 = vsel %vm685, %v3583, %v3847
        %3849 = vst [vmem:[%s682 + $0x3c] sm:$0xf] %v3848
        %3850 = vst [vmem:[%s682 + $0x40] sm:$0xf] %v3592
        %v3851 = vld [vmem:[%s682 + $0x44] sm:$0x1]
        %v3852 = vsel %vm691, %v3593, %v3851
        %3853 = vst [vmem:[%s682 + $0x44] sm:$0x1] %v3852
        %v3854 = vld [vmem:[%s682 + $0x48] sm:$0xf]
        %v3855 = vsel %vm685, %v3600, %v3854
        %3856 = vst [vmem:[%s682 + $0x48] sm:$0xf] %v3855
        %3857 = vst [vmem:[%s682 + $0x4c] sm:$0xf] %v3609
        %v3858 = vld [vmem:[%s682 + $0x50] sm:$0x1]
        %v3859 = vsel %vm691, %v3610, %v3858
        %3860 = vst [vmem:[%s682 + $0x50] sm:$0x1] %v3859
        %v3861 = vld [vmem:[%s682 + $0x54] sm:$0xf]
        %v3862 = vsel %vm685, %v3617, %v3861
        %3863 = vst [vmem:[%s682 + $0x54] sm:$0xf] %v3862
        %3864 = vst [vmem:[%s682 + $0x58] sm:$0xf] %v3626
        %v3865 = vld [vmem:[%s682 + $0x5c] sm:$0x1]
        %v3866 = vsel %vm691, %v3627, %v3865
        %3867 = vst [vmem:[%s682 + $0x5c] sm:$0x1] %v3866
        %v3868 = vld [vmem:[%s682 + $0x60] sm:$0xf]
        %v3869 = vsel %vm685, %v3634, %v3868
        %3870 = vst [vmem:[%s682 + $0x60] sm:$0xf] %v3869
        %3871 = vst [vmem:[%s682 + $0x64] sm:$0xf] %v3643
        %v3872 = vld [vmem:[%s682 + $0x68] sm:$0x1]
        %v3873 = vsel %vm691, %v3644, %v3872
        %3874 = vst [vmem:[%s682 + $0x68] sm:$0x1] %v3873
        %v3875 = vld [vmem:[%s682 + $0x6c] sm:$0xf]
        %v3876 = vsel %vm685, %v3651, %v3875
        %3877 = vst [vmem:[%s682 + $0x6c] sm:$0xf] %v3876
        %3878 = vst [vmem:[%s682 + $0x70] sm:$0xf] %v3660
        %v3879 = vld [vmem:[%s682 + $0x74] sm:$0x1]
        %v3880 = vsel %vm691, %v3661, %v3879
        %3881 = vst [vmem:[%s682 + $0x74] sm:$0x1] %v3880
        %v3882 = vld [vmem:[%s682 + $0x78] sm:$0xf]
        %v3883 = vsel %vm685, %v3668, %v3882
        %3884 = vst [vmem:[%s682 + $0x78] sm:$0xf] %v3883
        %3885 = vst [vmem:[%s682 + $0x7c] sm:$0xf] %v3677
        %v3886 = vld [vmem:[%s682 + $0x80] sm:$0x1]
        %v3887 = vsel %vm691, %v3678, %v3886
        %3888 = vst [vmem:[%s682 + $0x80] sm:$0x1] %v3887
        %v3889 = vld [vmem:[%s682 + $0x84] sm:$0xf]
        %v3890 = vsel %vm685, %v3685, %v3889
        %3891 = vst [vmem:[%s682 + $0x84] sm:$0xf] %v3890
        %3892 = vst [vmem:[%s682 + $0x88] sm:$0xf] %v3694
        %v3893 = vld [vmem:[%s682 + $0x8c] sm:$0x1]
        %v3894 = vsel %vm691, %v3695, %v3893
        %3895 = vst [vmem:[%s682 + $0x8c] sm:$0x1] %v3894
        %v3896 = vld [vmem:[%s682 + $0x90] sm:$0xf]
        %v3897 = vsel %vm685, %v3702, %v3896
        %3898 = vst [vmem:[%s682 + $0x90] sm:$0xf] %v3897
        %3899 = vst [vmem:[%s682 + $0x94] sm:$0xf] %v3711
        %v3900 = vld [vmem:[%s682 + $0x98] sm:$0x1]
        %v3901 = vsel %vm691, %v3712, %v3900
        %3902 = vst [vmem:[%s682 + $0x98] sm:$0x1] %v3901
        %v3903 = vld [vmem:[%s682 + $0x9c] sm:$0xf]
        %v3904 = vsel %vm685, %v3719, %v3903
        %3905 = vst [vmem:[%s682 + $0x9c] sm:$0xf] %v3904
        %3906 = vst [vmem:[%s682 + $0xa0] sm:$0xf] %v3728
        %v3907 = vld [vmem:[%s682 + $0xa4] sm:$0x1]
        %v3908 = vsel %vm691, %v3729, %v3907
        %3909 = vst [vmem:[%s682 + $0xa4] sm:$0x1] %v3908
        %v3910 = vld [vmem:[%s682 + $0xa8] sm:$0xf]
        %v3911 = vsel %vm685, %v3736, %v3910
        %3912 = vst [vmem:[%s682 + $0xa8] sm:$0xf] %v3911
        %3913 = vst [vmem:[%s682 + $0xac] sm:$0xf] %v3745
        %v3914 = vld [vmem:[%s682 + $0xb0] sm:$0x1]
        %v3915 = vsel %vm691, %v3746, %v3914
        %3916 = vst [vmem:[%s682 + $0xb0] sm:$0x1] %v3915
        %v3917 = vld [vmem:[%s682 + $0xb4] sm:$0xf]
        %v3918 = vsel %vm685, %v3753, %v3917
        %3919 = vst [vmem:[%s682 + $0xb4] sm:$0xf] %v3918
        %3920 = vst [vmem:[%s682 + $0xb8] sm:$0xf] %v3762
        %v3921 = vld [vmem:[%s682 + $0xbc] sm:$0x1]
        %v3922 = vsel %vm691, %v3763, %v3921
        %3923 = vst [vmem:[%s682 + $0xbc] sm:$0x1] %v3922
        %v3924 = vld [vmem:[#allocation2] sm:$0xf]
        %v3925 = vld [vmem:[#allocation2 + $0x4] sm:$0xf]
        %v3926 = vld [vmem:[#allocation2 + $0x8] sm:$0x1]
        %v3927 = vld [vmem:[#allocation2 + $0xc] sm:$0xf]
        %v3928 = vld [vmem:[#allocation2 + $0x10] sm:$0xf]
        %v3929 = vld [vmem:[#allocation2 + $0x14] sm:$0x1]
        %v3930 = vld [vmem:[#allocation2 + $0x18] sm:$0xf]
        %v3931 = vld [vmem:[#allocation2 + $0x1c] sm:$0xf]
        %v3932 = vld [vmem:[#allocation2 + $0x20] sm:$0x1]
        %v3933 = vld [vmem:[#allocation2 + $0x24] sm:$0xf]
        %v3934 = vld [vmem:[#allocation2 + $0x28] sm:$0xf]
        %v3935 = vld [vmem:[#allocation2 + $0x2c] sm:$0x1]
        %v3936 = vld [vmem:[#allocation2 + $0x30] sm:$0xf]
        %v3937 = vld [vmem:[#allocation2 + $0x34] sm:$0xf]
        %v3938 = vld [vmem:[#allocation2 + $0x38] sm:$0x1]
        %v3939 = vld [vmem:[#allocation2 + $0x3c] sm:$0xf]
        %v3940 = vld [vmem:[#allocation2 + $0x40] sm:$0xf]
        %v3941 = vld [vmem:[#allocation2 + $0x44] sm:$0x1]
        %v3942 = vld [vmem:[#allocation2 + $0x48] sm:$0xf]
        %v3943 = vld [vmem:[#allocation2 + $0x4c] sm:$0xf]
        %v3944 = vld [vmem:[#allocation2 + $0x50] sm:$0x1]
        %v3945 = vld [vmem:[#allocation2 + $0x54] sm:$0xf]
        %v3946 = vld [vmem:[#allocation2 + $0x58] sm:$0xf]
        %v3947 = vld [vmem:[#allocation2 + $0x5c] sm:$0x1]
        %v3948 = vld [vmem:[#allocation2 + $0x60] sm:$0xf]
        %v3949 = vld [vmem:[#allocation2 + $0x64] sm:$0xf]
        %v3950 = vld [vmem:[#allocation2 + $0x68] sm:$0x1]
        %v3951 = vld [vmem:[#allocation2 + $0x6c] sm:$0xf]
        %v3952 = vld [vmem:[#allocation2 + $0x70] sm:$0xf]
        %v3953 = vld [vmem:[#allocation2 + $0x74] sm:$0x1]
        %v3954 = vld [vmem:[#allocation2 + $0x78] sm:$0xf]
        %v3955 = vld [vmem:[#allocation2 + $0x7c] sm:$0xf]
        %v3956 = vld [vmem:[#allocation2 + $0x80] sm:$0x1]
        %v3957 = vld [vmem:[#allocation2 + $0x84] sm:$0xf]
        %v3958 = vld [vmem:[#allocation2 + $0x88] sm:$0xf]
        %v3959 = vld [vmem:[#allocation2 + $0x8c] sm:$0x1]
        %v3960 = vld [vmem:[#allocation2 + $0x90] sm:$0xf]
        %v3961 = vld [vmem:[#allocation2 + $0x94] sm:$0xf]
        %v3962 = vld [vmem:[#allocation2 + $0x98] sm:$0x1]
        %v3963 = vld [vmem:[#allocation2 + $0x9c] sm:$0xf]
        %v3964 = vld [vmem:[#allocation2 + $0xa0] sm:$0xf]
        %v3965 = vld [vmem:[#allocation2 + $0xa4] sm:$0x1]
        %v3966 = vld [vmem:[#allocation2 + $0xa8] sm:$0xf]
        %v3967 = vld [vmem:[#allocation2 + $0xac] sm:$0xf]
        %v3968 = vld [vmem:[#allocation2 + $0xb0] sm:$0x1]
        %v3969 = vld [vmem:[#allocation2 + $0xb4] sm:$0xf]
        %v3970 = vld [vmem:[#allocation2 + $0xb8] sm:$0xf]
        %v3971 = vld [vmem:[#allocation2 + $0xbc] sm:$0x1]
        %v3972 = vld [vmem:[#allocation2 + $0xc0] sm:$0xf]
        %v3973 = vld [vmem:[#allocation2 + $0xc4] sm:$0xf]
        %v3974 = vld [vmem:[#allocation2 + $0xc8] sm:$0x1]
        %v3975 = vld [vmem:[#allocation2 + $0xcc] sm:$0xf]
        %v3976 = vld [vmem:[#allocation2 + $0xd0] sm:$0xf]
        %v3977 = vld [vmem:[#allocation2 + $0xd4] sm:$0x1]
        %v4010 = vunpack.c.l.b16 %v3924
        %v4011 = vunpack.c.l.b16 %v3925
        %v4012 = vunpack.c.l.b16 %v3927
        %v4013 = vunpack.c.l.b16 %v3928
        %v4014 = vunpack.c.l.b16 %v3930
        %v4015 = vunpack.c.l.b16 %v3931
        %v4016 = vunpack.c.l.b16 %v3933
        %v4017 = vunpack.c.l.b16 %v3934
        %v4018 = vunpack.c.l.b16 %v3936
        %v4019 = vunpack.c.l.b16 %v3937
        %v4020 = vunpack.c.l.b16 %v3939
        %v4021 = vunpack.c.l.b16 %v3940
        %v4022 = vunpack.c.l.b16 %v3942
        %v4023 = vunpack.c.l.b16 %v3943
        %v4024 = vunpack.c.l.b16 %v3945
        %v4025 = vunpack.c.l.b16 %v3946
        %v4026 = vunpack.c.l.b16 %v3948
        %v4027 = vunpack.c.l.b16 %v3949
        %v4028 = vunpack.c.l.b16 %v3951
        %v4029 = vunpack.c.l.b16 %v3952
        %v4030 = vunpack.c.l.b16 %v3954
        %v4031 = vunpack.c.l.b16 %v3955
        %v4032 = vunpack.c.l.b16 %v3957
        %v4033 = vunpack.c.l.b16 %v3958
        %v4034 = vunpack.c.l.b16 %v3960
        %v4035 = vunpack.c.l.b16 %v3961
        %v4036 = vunpack.c.l.b16 %v3963
        %v4037 = vunpack.c.l.b16 %v3964
        %v4038 = vunpack.c.l.b16 %v3966
        %v4039 = vunpack.c.l.b16 %v3967
        %v4040 = vunpack.c.l.b16 %v3969
        %v4041 = vunpack.c.l.b16 %v3970
        %v4042 = vpack.c.b16 %v4011, %v4010
        %v4043 = vpack.c.b16 %v4013, %v4012
        %v4044 = vpack.c.b16 %v4015, %v4014
        %v4045 = vpack.c.b16 %v4017, %v4016
        %v4046 = vpack.c.b16 %v4019, %v4018
        %v4047 = vpack.c.b16 %v4021, %v4020
        %v4048 = vpack.c.b16 %v4023, %v4022
        %v4049 = vpack.c.b16 %v4025, %v4024
        %v4050 = vpack.c.b16 %v4027, %v4026
        %v4051 = vpack.c.b16 %v4029, %v4028
        %v4052 = vpack.c.b16 %v4031, %v4030
        %v4053 = vpack.c.b16 %v4033, %v4032
        %v4054 = vpack.c.b16 %v4035, %v4034
        %v4055 = vpack.c.b16 %v4037, %v4036
        %v4056 = vpack.c.b16 %v4039, %v4038
        %v4057 = vpack.c.b16 %v4041, %v4040
        %4074 = vst [vmem:[#allocation3] sm:$0xff] %v4042
        %4075 = vst [vmem:[#allocation3 + $0x48] sm:$0xff] %v4043
        %4076 = vst [vmem:[#allocation3 + $0x90] sm:$0xff] %v4044
        %4077 = vst [vmem:[#allocation3 + $0xd8] sm:$0xff] %v4045
        %4078 = vst [vmem:[#allocation3 + $0x120] sm:$0xff] %v4046
        %4079 = vst [vmem:[#allocation3 + $0x168] sm:$0xff] %v4047
        %4080 = vst [vmem:[#allocation3 + $0x1b0] sm:$0xff] %v4048
        %4081 = vst [vmem:[#allocation3 + $0x1f8] sm:$0xff] %v4049
        %4082 = vst [vmem:[#allocation3 + $0x240] sm:$0xff] %v4050
        %4083 = vst [vmem:[#allocation3 + $0x288] sm:$0xff] %v4051
        %4084 = vst [vmem:[#allocation3 + $0x2d0] sm:$0xff] %v4052
        %4085 = vst [vmem:[#allocation3 + $0x318] sm:$0xff] %v4053
        %4086 = vst [vmem:[#allocation3 + $0x360] sm:$0xff] %v4054
        %4087 = vst [vmem:[#allocation3 + $0x3a8] sm:$0xff] %v4055
        %4088 = vst [vmem:[#allocation3 + $0x3f0] sm:$0xff] %v4056
        %4089 = vst [vmem:[#allocation3 + $0x438] sm:$0xff] %v4057
        %v4091 = vshrl.u32 %v3924, 16
        %v4093 = vrot.slane %v4091, 4
        %v4094 = vshll.u32 %v3924, 16
        %v4096 = vrot.slane %v4094, 5
        %v4097 = vor.u32 %v4093, %v4096
        %v4098 = vrot.slane %v4097, 4
        %v4100 = vshll.u32 %v3925, 16
        %v4102 = vrot.slane %v4100, 5
        %v4103 = vsel %vm968, %v4098, %v4102
        %v4104 = vshrl.u32 %v3925, 16
        %v4106 = vrot.slane %v4104, 4
        %v4107 = vor.u32 %v4106, %v4102
        %v4108 = vrot.slane %v4107, 4
        %v4110 = vshll.u32 %v3926, 16
        %v4112 = vrot.slane %v4110, 5
        %v4113 = vsel %vm968, %v4108, %v4112
        %v4115 = vshrl.u32 %v3927, 16
        %v4117 = vrot.slane %v4115, 4
        %v4118 = vshll.u32 %v3927, 16
        %v4120 = vrot.slane %v4118, 5
        %v4121 = vor.u32 %v4117, %v4120
        %v4122 = vrot.slane %v4121, 4
        %v4124 = vshll.u32 %v3928, 16
        %v4126 = vrot.slane %v4124, 5
        %v4127 = vsel %vm968, %v4122, %v4126
        %v4128 = vshrl.u32 %v3928, 16
        %v4130 = vrot.slane %v4128, 4
        %v4131 = vor.u32 %v4130, %v4126
        %v4132 = vrot.slane %v4131, 4
        %v4134 = vshll.u32 %v3929, 16
        %v4136 = vrot.slane %v4134, 5
        %v4137 = vsel %vm968, %v4132, %v4136
        %v4139 = vshrl.u32 %v3930, 16
        %v4141 = vrot.slane %v4139, 4
        %v4142 = vshll.u32 %v3930, 16
        %v4144 = vrot.slane %v4142, 5
        %v4145 = vor.u32 %v4141, %v4144
        %v4146 = vrot.slane %v4145, 4
        %v4148 = vshll.u32 %v3931, 16
        %v4150 = vrot.slane %v4148, 5
        %v4151 = vsel %vm968, %v4146, %v4150
        %v4152 = vshrl.u32 %v3931, 16
        %v4154 = vrot.slane %v4152, 4
        %v4155 = vor.u32 %v4154, %v4150
        %v4156 = vrot.slane %v4155, 4
        %v4158 = vshll.u32 %v3932, 16
        %v4160 = vrot.slane %v4158, 5
        %v4161 = vsel %vm968, %v4156, %v4160
        %v4163 = vshrl.u32 %v3933, 16
        %v4165 = vrot.slane %v4163, 4
        %v4166 = vshll.u32 %v3933, 16
        %v4168 = vrot.slane %v4166, 5
        %v4169 = vor.u32 %v4165, %v4168
        %v4170 = vrot.slane %v4169, 4
        %v4172 = vshll.u32 %v3934, 16
        %v4174 = vrot.slane %v4172, 5
        %v4175 = vsel %vm968, %v4170, %v4174
        %v4176 = vshrl.u32 %v3934, 16
        %v4178 = vrot.slane %v4176, 4
        %v4179 = vor.u32 %v4178, %v4174
        %v4180 = vrot.slane %v4179, 4
        %v4182 = vshll.u32 %v3935, 16
        %v4184 = vrot.slane %v4182, 5
        %v4185 = vsel %vm968, %v4180, %v4184
        %v4187 = vshrl.u32 %v3936, 16
        %v4189 = vrot.slane %v4187, 4
        %v4190 = vshll.u32 %v3936, 16
        %v4192 = vrot.slane %v4190, 5
        %v4193 = vor.u32 %v4189, %v4192
        %v4194 = vrot.slane %v4193, 4
        %v4196 = vshll.u32 %v3937, 16
        %v4198 = vrot.slane %v4196, 5
        %v4199 = vsel %vm968, %v4194, %v4198
        %v4200 = vshrl.u32 %v3937, 16
        %v4202 = vrot.slane %v4200, 4
        %v4203 = vor.u32 %v4202, %v4198
        %v4204 = vrot.slane %v4203, 4
        %v4206 = vshll.u32 %v3938, 16
        %v4208 = vrot.slane %v4206, 5
        %v4209 = vsel %vm968, %v4204, %v4208
        %v4211 = vshrl.u32 %v3939, 16
        %v4213 = vrot.slane %v4211, 4
        %v4214 = vshll.u32 %v3939, 16
        %v4216 = vrot.slane %v4214, 5
        %v4217 = vor.u32 %v4213, %v4216
        %v4218 = vrot.slane %v4217, 4
        %v4220 = vshll.u32 %v3940, 16
        %v4222 = vrot.slane %v4220, 5
        %v4223 = vsel %vm968, %v4218, %v4222
        %v4224 = vshrl.u32 %v3940, 16
        %v4226 = vrot.slane %v4224, 4
        %v4227 = vor.u32 %v4226, %v4222
        %v4228 = vrot.slane %v4227, 4
        %v4230 = vshll.u32 %v3941, 16
        %v4232 = vrot.slane %v4230, 5
        %v4233 = vsel %vm968, %v4228, %v4232
        %v4235 = vshrl.u32 %v3942, 16
        %v4237 = vrot.slane %v4235, 4
        %v4238 = vshll.u32 %v3942, 16
        %v4240 = vrot.slane %v4238, 5
        %v4241 = vor.u32 %v4237, %v4240
        %v4242 = vrot.slane %v4241, 4
        %v4244 = vshll.u32 %v3943, 16
        %v4246 = vrot.slane %v4244, 5
        %v4247 = vsel %vm968, %v4242, %v4246
        %v4248 = vshrl.u32 %v3943, 16
        %v4250 = vrot.slane %v4248, 4
        %v4251 = vor.u32 %v4250, %v4246
        %v4252 = vrot.slane %v4251, 4
        %v4254 = vshll.u32 %v3944, 16
        %v4256 = vrot.slane %v4254, 5
        %v4257 = vsel %vm968, %v4252, %v4256
        %v4259 = vshrl.u32 %v3945, 16
        %v4261 = vrot.slane %v4259, 4
        %v4262 = vshll.u32 %v3945, 16
        %v4264 = vrot.slane %v4262, 5
        %v4265 = vor.u32 %v4261, %v4264
        %v4266 = vrot.slane %v4265, 4
        %v4268 = vshll.u32 %v3946, 16
        %v4270 = vrot.slane %v4268, 5
        %v4271 = vsel %vm968, %v4266, %v4270
        %v4272 = vshrl.u32 %v3946, 16
        %v4274 = vrot.slane %v4272, 4
        %v4275 = vor.u32 %v4274, %v4270
        %v4276 = vrot.slane %v4275, 4
        %v4278 = vshll.u32 %v3947, 16
        %v4280 = vrot.slane %v4278, 5
        %v4281 = vsel %vm968, %v4276, %v4280
        %v4283 = vshrl.u32 %v3948, 16
        %v4285 = vrot.slane %v4283, 4
        %v4286 = vshll.u32 %v3948, 16
        %v4288 = vrot.slane %v4286, 5
        %v4289 = vor.u32 %v4285, %v4288
        %v4290 = vrot.slane %v4289, 4
        %v4292 = vshll.u32 %v3949, 16
        %v4294 = vrot.slane %v4292, 5
        %v4295 = vsel %vm968, %v4290, %v4294
        %v4296 = vshrl.u32 %v3949, 16
        %v4298 = vrot.slane %v4296, 4
        %v4299 = vor.u32 %v4298, %v4294
        %v4300 = vrot.slane %v4299, 4
        %v4302 = vshll.u32 %v3950, 16
        %v4304 = vrot.slane %v4302, 5
        %v4305 = vsel %vm968, %v4300, %v4304
        %v4307 = vshrl.u32 %v3951, 16
        %v4309 = vrot.slane %v4307, 4
        %v4310 = vshll.u32 %v3951, 16
        %v4312 = vrot.slane %v4310, 5
        %v4313 = vor.u32 %v4309, %v4312
        %v4314 = vrot.slane %v4313, 4
        %v4316 = vshll.u32 %v3952, 16
        %v4318 = vrot.slane %v4316, 5
        %v4319 = vsel %vm968, %v4314, %v4318
        %v4320 = vshrl.u32 %v3952, 16
        %v4322 = vrot.slane %v4320, 4
        %v4323 = vor.u32 %v4322, %v4318
        %v4324 = vrot.slane %v4323, 4
        %v4326 = vshll.u32 %v3953, 16
        %v4328 = vrot.slane %v4326, 5
        %v4329 = vsel %vm968, %v4324, %v4328
        %v4331 = vshrl.u32 %v3954, 16
        %v4333 = vrot.slane %v4331, 4
        %v4334 = vshll.u32 %v3954, 16
        %v4336 = vrot.slane %v4334, 5
        %v4337 = vor.u32 %v4333, %v4336
        %v4338 = vrot.slane %v4337, 4
        %v4340 = vshll.u32 %v3955, 16
        %v4342 = vrot.slane %v4340, 5
        %v4343 = vsel %vm968, %v4338, %v4342
        %v4344 = vshrl.u32 %v3955, 16
        %v4346 = vrot.slane %v4344, 4
        %v4347 = vor.u32 %v4346, %v4342
        %v4348 = vrot.slane %v4347, 4
        %v4350 = vshll.u32 %v3956, 16
        %v4352 = vrot.slane %v4350, 5
        %v4353 = vsel %vm968, %v4348, %v4352
        %v4355 = vshrl.u32 %v3957, 16
        %v4357 = vrot.slane %v4355, 4
        %v4358 = vshll.u32 %v3957, 16
        %v4360 = vrot.slane %v4358, 5
        %v4361 = vor.u32 %v4357, %v4360
        %v4362 = vrot.slane %v4361, 4
        %v4364 = vshll.u32 %v3958, 16
        %v4366 = vrot.slane %v4364, 5
        %v4367 = vsel %vm968, %v4362, %v4366
        %v4368 = vshrl.u32 %v3958, 16
        %v4370 = vrot.slane %v4368, 4
        %v4371 = vor.u32 %v4370, %v4366
        %v4372 = vrot.slane %v4371, 4
        %v4374 = vshll.u32 %v3959, 16
        %v4376 = vrot.slane %v4374, 5
        %v4377 = vsel %vm968, %v4372, %v4376
        %v4379 = vshrl.u32 %v3960, 16
        %v4381 = vrot.slane %v4379, 4
        %v4382 = vshll.u32 %v3960, 16
        %v4384 = vrot.slane %v4382, 5
        %v4385 = vor.u32 %v4381, %v4384
        %v4386 = vrot.slane %v4385, 4
        %v4388 = vshll.u32 %v3961, 16
        %v4390 = vrot.slane %v4388, 5
        %v4391 = vsel %vm968, %v4386, %v4390
        %v4392 = vshrl.u32 %v3961, 16
        %v4394 = vrot.slane %v4392, 4
        %v4395 = vor.u32 %v4394, %v4390
        %v4396 = vrot.slane %v4395, 4
        %v4398 = vshll.u32 %v3962, 16
        %v4400 = vrot.slane %v4398, 5
        %v4401 = vsel %vm968, %v4396, %v4400
        %v4403 = vshrl.u32 %v3963, 16
        %v4405 = vrot.slane %v4403, 4
        %v4406 = vshll.u32 %v3963, 16
        %v4408 = vrot.slane %v4406, 5
        %v4409 = vor.u32 %v4405, %v4408
        %v4410 = vrot.slane %v4409, 4
        %v4412 = vshll.u32 %v3964, 16
        %v4414 = vrot.slane %v4412, 5
        %v4415 = vsel %vm968, %v4410, %v4414
        %v4416 = vshrl.u32 %v3964, 16
        %v4418 = vrot.slane %v4416, 4
        %v4419 = vor.u32 %v4418, %v4414
        %v4420 = vrot.slane %v4419, 4
        %v4422 = vshll.u32 %v3965, 16
        %v4424 = vrot.slane %v4422, 5
        %v4425 = vsel %vm968, %v4420, %v4424
        %v4427 = vshrl.u32 %v3966, 16
        %v4429 = vrot.slane %v4427, 4
        %v4430 = vshll.u32 %v3966, 16
        %v4432 = vrot.slane %v4430, 5
        %v4433 = vor.u32 %v4429, %v4432
        %v4434 = vrot.slane %v4433, 4
        %v4436 = vshll.u32 %v3967, 16
        %v4438 = vrot.slane %v4436, 5
        %v4439 = vsel %vm968, %v4434, %v4438
        %v4440 = vshrl.u32 %v3967, 16
        %v4442 = vrot.slane %v4440, 4
        %v4443 = vor.u32 %v4442, %v4438
        %v4444 = vrot.slane %v4443, 4
        %v4446 = vshll.u32 %v3968, 16
        %v4448 = vrot.slane %v4446, 5
        %v4449 = vsel %vm968, %v4444, %v4448
        %v4451 = vshrl.u32 %v3969, 16
        %v4453 = vrot.slane %v4451, 4
        %v4454 = vshll.u32 %v3969, 16
        %v4456 = vrot.slane %v4454, 5
        %v4457 = vor.u32 %v4453, %v4456
        %v4458 = vrot.slane %v4457, 4
        %v4460 = vshll.u32 %v3970, 16
        %v4462 = vrot.slane %v4460, 5
        %v4463 = vsel %vm968, %v4458, %v4462
        %v4464 = vshrl.u32 %v3970, 16
        %v4466 = vrot.slane %v4464, 4
        %v4467 = vor.u32 %v4466, %v4462
        %v4468 = vrot.slane %v4467, 4
        %v4470 = vshll.u32 %v3971, 16
        %v4472 = vrot.slane %v4470, 5
        %v4473 = vsel %vm968, %v4468, %v4472
        %v4474 = vunpack.c.l.b16 %v4103
        %v4475 = vunpack.c.l.b16 %v4113
        %v4476 = vunpack.c.l.b16 %v4127
        %v4477 = vunpack.c.l.b16 %v4137
        %v4478 = vunpack.c.l.b16 %v4151
        %v4479 = vunpack.c.l.b16 %v4161
        %v4480 = vunpack.c.l.b16 %v4175
        %v4481 = vunpack.c.l.b16 %v4185
        %v4482 = vunpack.c.l.b16 %v4199
        %v4483 = vunpack.c.l.b16 %v4209
        %v4484 = vunpack.c.l.b16 %v4223
        %v4485 = vunpack.c.l.b16 %v4233
        %v4486 = vunpack.c.l.b16 %v4247
        %v4487 = vunpack.c.l.b16 %v4257
        %v4488 = vunpack.c.l.b16 %v4271
        %v4489 = vunpack.c.l.b16 %v4281
        %v4490 = vunpack.c.l.b16 %v4295
        %v4491 = vunpack.c.l.b16 %v4305
        %v4492 = vunpack.c.l.b16 %v4319
        %v4493 = vunpack.c.l.b16 %v4329
        %v4494 = vunpack.c.l.b16 %v4343
        %v4495 = vunpack.c.l.b16 %v4353
        %v4496 = vunpack.c.l.b16 %v4367
        %v4497 = vunpack.c.l.b16 %v4377
        %v4498 = vunpack.c.l.b16 %v4391
        %v4499 = vunpack.c.l.b16 %v4401
        %v4500 = vunpack.c.l.b16 %v4415
        %v4501 = vunpack.c.l.b16 %v4425
        %v4502 = vunpack.c.l.b16 %v4439
        %v4503 = vunpack.c.l.b16 %v4449
        %v4504 = vunpack.c.l.b16 %v4463
        %v4505 = vunpack.c.l.b16 %v4473
        %v4506 = vpack.c.b16 %v4475, %v4474
        %v4507 = vpack.c.b16 %v4477, %v4476
        %v4508 = vpack.c.b16 %v4479, %v4478
        %v4509 = vpack.c.b16 %v4481, %v4480
        %v4510 = vpack.c.b16 %v4483, %v4482
        %v4511 = vpack.c.b16 %v4485, %v4484
        %v4512 = vpack.c.b16 %v4487, %v4486
        %v4513 = vpack.c.b16 %v4489, %v4488
        %v4514 = vpack.c.b16 %v4491, %v4490
        %v4515 = vpack.c.b16 %v4493, %v4492
        %v4516 = vpack.c.b16 %v4495, %v4494
        %v4517 = vpack.c.b16 %v4497, %v4496
        %v4518 = vpack.c.b16 %v4499, %v4498
        %v4519 = vpack.c.b16 %v4501, %v4500
        %v4520 = vpack.c.b16 %v4503, %v4502
        %v4521 = vpack.c.b16 %v4505, %v4504
        %4538 = vst [vmem:[#allocation3 + $0x8] sm:$0xff] %v4506
        %4539 = vst [vmem:[#allocation3 + $0x50] sm:$0xff] %v4507
        %4540 = vst [vmem:[#allocation3 + $0x98] sm:$0xff] %v4508
        %4541 = vst [vmem:[#allocation3 + $0xe0] sm:$0xff] %v4509
        %4542 = vst [vmem:[#allocation3 + $0x128] sm:$0xff] %v4510
        %4543 = vst [vmem:[#allocation3 + $0x170] sm:$0xff] %v4511
        %4544 = vst [vmem:[#allocation3 + $0x1b8] sm:$0xff] %v4512
        %4545 = vst [vmem:[#allocation3 + $0x200] sm:$0xff] %v4513
        %4546 = vst [vmem:[#allocation3 + $0x248] sm:$0xff] %v4514
        %4547 = vst [vmem:[#allocation3 + $0x290] sm:$0xff] %v4515
        %4548 = vst [vmem:[#allocation3 + $0x2d8] sm:$0xff] %v4516
        %4549 = vst [vmem:[#allocation3 + $0x320] sm:$0xff] %v4517
        %4550 = vst [vmem:[#allocation3 + $0x368] sm:$0xff] %v4518
        %4551 = vst [vmem:[#allocation3 + $0x3b0] sm:$0xff] %v4519
        %4552 = vst [vmem:[#allocation3 + $0x3f8] sm:$0xff] %v4520
        %4553 = vst [vmem:[#allocation3 + $0x440] sm:$0xff] %v4521
        %v4570 = vrot.slane %v3924, 5
        %v4571 = vrot.slane %v4570, 4
        %v4572 = vrot.slane %v3925, 5
        %v4573 = vsel %vm1451, %v4571, %v4572
        %v4574 = vrot.slane %v4572, 4
        %v4575 = vrot.slane %v3926, 5
        %v4576 = vsel %vm1451, %v4574, %v4575
        %v4577 = vrot.slane %v3927, 5
        %v4578 = vrot.slane %v4577, 4
        %v4579 = vrot.slane %v3928, 5
        %v4580 = vsel %vm1451, %v4578, %v4579
        %v4581 = vrot.slane %v4579, 4
        %v4582 = vrot.slane %v3929, 5
        %v4583 = vsel %vm1451, %v4581, %v4582
        %v4584 = vrot.slane %v3930, 5
        %v4585 = vrot.slane %v4584, 4
        %v4586 = vrot.slane %v3931, 5
        %v4587 = vsel %vm1451, %v4585, %v4586
        %v4588 = vrot.slane %v4586, 4
        %v4589 = vrot.slane %v3932, 5
        %v4590 = vsel %vm1451, %v4588, %v4589
        %v4591 = vrot.slane %v3933, 5
        %v4592 = vrot.slane %v4591, 4
        %v4593 = vrot.slane %v3934, 5
        %v4594 = vsel %vm1451, %v4592, %v4593
        %v4595 = vrot.slane %v4593, 4
        %v4596 = vrot.slane %v3935, 5
        %v4597 = vsel %vm1451, %v4595, %v4596
        %v4598 = vrot.slane %v3936, 5
        %v4599 = vrot.slane %v4598, 4
        %v4600 = vrot.slane %v3937, 5
        %v4601 = vsel %vm1451, %v4599, %v4600
        %v4602 = vrot.slane %v4600, 4
        %v4603 = vrot.slane %v3938, 5
        %v4604 = vsel %vm1451, %v4602, %v4603
        %v4605 = vrot.slane %v3939, 5
        %v4606 = vrot.slane %v4605, 4
        %v4607 = vrot.slane %v3940, 5
        %v4608 = vsel %vm1451, %v4606, %v4607
        %v4609 = vrot.slane %v4607, 4
        %v4610 = vrot.slane %v3941, 5
        %v4611 = vsel %vm1451, %v4609, %v4610
        %v4612 = vrot.slane %v3942, 5
        %v4613 = vrot.slane %v4612, 4
        %v4614 = vrot.slane %v3943, 5
        %v4615 = vsel %vm1451, %v4613, %v4614
        %v4616 = vrot.slane %v4614, 4
        %v4617 = vrot.slane %v3944, 5
        %v4618 = vsel %vm1451, %v4616, %v4617
        %v4619 = vrot.slane %v3945, 5
        %v4620 = vrot.slane %v4619, 4
        %v4621 = vrot.slane %v3946, 5
        %v4622 = vsel %vm1451, %v4620, %v4621
        %v4623 = vrot.slane %v4621, 4
        %v4624 = vrot.slane %v3947, 5
        %v4625 = vsel %vm1451, %v4623, %v4624
        %v4626 = vrot.slane %v3948, 5
        %v4627 = vrot.slane %v4626, 4
        %v4628 = vrot.slane %v3949, 5
        %v4629 = vsel %vm1451, %v4627, %v4628
        %v4630 = vrot.slane %v4628, 4
        %v4631 = vrot.slane %v3950, 5
        %v4632 = vsel %vm1451, %v4630, %v4631
        %v4633 = vrot.slane %v3951, 5
        %v4634 = vrot.slane %v4633, 4
        %v4635 = vrot.slane %v3952, 5
        %v4636 = vsel %vm1451, %v4634, %v4635
        %v4637 = vrot.slane %v4635, 4
        %v4638 = vrot.slane %v3953, 5
        %v4639 = vsel %vm1451, %v4637, %v4638
        %v4640 = vrot.slane %v3954, 5
        %v4641 = vrot.slane %v4640, 4
        %v4642 = vrot.slane %v3955, 5
        %v4643 = vsel %vm1451, %v4641, %v4642
        %v4644 = vrot.slane %v4642, 4
        %v4645 = vrot.slane %v3956, 5
        %v4646 = vsel %vm1451, %v4644, %v4645
        %v4647 = vrot.slane %v3957, 5
        %v4648 = vrot.slane %v4647, 4
        %v4649 = vrot.slane %v3958, 5
        %v4650 = vsel %vm1451, %v4648, %v4649
        %v4651 = vrot.slane %v4649, 4
        %v4652 = vrot.slane %v3959, 5
        %v4653 = vsel %vm1451, %v4651, %v4652
        %v4654 = vrot.slane %v3960, 5
        %v4655 = vrot.slane %v4654, 4
        %v4656 = vrot.slane %v3961, 5
        %v4657 = vsel %vm1451, %v4655, %v4656
        %v4658 = vrot.slane %v4656, 4
        %v4659 = vrot.slane %v3962, 5
        %v4660 = vsel %vm1451, %v4658, %v4659
        %v4661 = vrot.slane %v3963, 5
        %v4662 = vrot.slane %v4661, 4
        %v4663 = vrot.slane %v3964, 5
        %v4664 = vsel %vm1451, %v4662, %v4663
        %v4665 = vrot.slane %v4663, 4
        %v4666 = vrot.slane %v3965, 5
        %v4667 = vsel %vm1451, %v4665, %v4666
        %v4668 = vrot.slane %v3966, 5
        %v4669 = vrot.slane %v4668, 4
        %v4670 = vrot.slane %v3967, 5
        %v4671 = vsel %vm1451, %v4669, %v4670
        %v4672 = vrot.slane %v4670, 4
        %v4673 = vrot.slane %v3968, 5
        %v4674 = vsel %vm1451, %v4672, %v4673
        %v4675 = vrot.slane %v3969, 5
        %v4676 = vrot.slane %v4675, 4
        %v4677 = vrot.slane %v3970, 5
        %v4678 = vsel %vm1451, %v4676, %v4677
        %v4679 = vrot.slane %v4677, 4
        %v4680 = vrot.slane %v3971, 5
        %v4681 = vsel %vm1451, %v4679, %v4680
        %v4682 = vunpack.c.l.b16 %v4573
        %v4683 = vunpack.c.l.b16 %v4576
        %v4684 = vunpack.c.l.b16 %v4580
        %v4685 = vunpack.c.l.b16 %v4583
        %v4686 = vunpack.c.l.b16 %v4587
        %v4687 = vunpack.c.l.b16 %v4590
        %v4688 = vunpack.c.l.b16 %v4594
        %v4689 = vunpack.c.l.b16 %v4597
        %v4690 = vunpack.c.l.b16 %v4601
        %v4691 = vunpack.c.l.b16 %v4604
        %v4692 = vunpack.c.l.b16 %v4608
        %v4693 = vunpack.c.l.b16 %v4611
        %v4694 = vunpack.c.l.b16 %v4615
        %v4695 = vunpack.c.l.b16 %v4618
        %v4696 = vunpack.c.l.b16 %v4622
        %v4697 = vunpack.c.l.b16 %v4625
        %v4698 = vunpack.c.l.b16 %v4629
        %v4699 = vunpack.c.l.b16 %v4632
        %v4700 = vunpack.c.l.b16 %v4636
        %v4701 = vunpack.c.l.b16 %v4639
        %v4702 = vunpack.c.l.b16 %v4643
        %v4703 = vunpack.c.l.b16 %v4646
        %v4704 = vunpack.c.l.b16 %v4650
        %v4705 = vunpack.c.l.b16 %v4653
        %v4706 = vunpack.c.l.b16 %v4657
        %v4707 = vunpack.c.l.b16 %v4660
        %v4708 = vunpack.c.l.b16 %v4664
        %v4709 = vunpack.c.l.b16 %v4667
        %v4710 = vunpack.c.l.b16 %v4671
        %v4711 = vunpack.c.l.b16 %v4674
        %v4712 = vunpack.c.l.b16 %v4678
        %v4713 = vunpack.c.l.b16 %v4681
        %v4714 = vpack.c.b16 %v4683, %v4682
        %v4715 = vpack.c.b16 %v4685, %v4684
        %v4716 = vpack.c.b16 %v4687, %v4686
        %v4717 = vpack.c.b16 %v4689, %v4688
        %v4718 = vpack.c.b16 %v4691, %v4690
        %v4719 = vpack.c.b16 %v4693, %v4692
        %v4720 = vpack.c.b16 %v4695, %v4694
        %v4721 = vpack.c.b16 %v4697, %v4696
        %v4722 = vpack.c.b16 %v4699, %v4698
        %v4723 = vpack.c.b16 %v4701, %v4700
        %v4724 = vpack.c.b16 %v4703, %v4702
        %v4725 = vpack.c.b16 %v4705, %v4704
        %v4726 = vpack.c.b16 %v4707, %v4706
        %v4727 = vpack.c.b16 %v4709, %v4708
        %v4728 = vpack.c.b16 %v4711, %v4710
        %v4729 = vpack.c.b16 %v4713, %v4712
        %4746 = vst [vmem:[#allocation3 + $0x10] sm:$0xff] %v4714
        %4747 = vst [vmem:[#allocation3 + $0x58] sm:$0xff] %v4715
        %4748 = vst [vmem:[#allocation3 + $0xa0] sm:$0xff] %v4716
        %4749 = vst [vmem:[#allocation3 + $0xe8] sm:$0xff] %v4717
        %4750 = vst [vmem:[#allocation3 + $0x130] sm:$0xff] %v4718
        %4751 = vst [vmem:[#allocation3 + $0x178] sm:$0xff] %v4719
        %4752 = vst [vmem:[#allocation3 + $0x1c0] sm:$0xff] %v4720
        %4753 = vst [vmem:[#allocation3 + $0x208] sm:$0xff] %v4721
        %4754 = vst [vmem:[#allocation3 + $0x250] sm:$0xff] %v4722
        %4755 = vst [vmem:[#allocation3 + $0x298] sm:$0xff] %v4723
        %4756 = vst [vmem:[#allocation3 + $0x2e0] sm:$0xff] %v4724
        %4757 = vst [vmem:[#allocation3 + $0x328] sm:$0xff] %v4725
        %4758 = vst [vmem:[#allocation3 + $0x370] sm:$0xff] %v4726
        %4759 = vst [vmem:[#allocation3 + $0x3b8] sm:$0xff] %v4727
        %4760 = vst [vmem:[#allocation3 + $0x400] sm:$0xff] %v4728
        %4761 = vst [vmem:[#allocation3 + $0x448] sm:$0xff] %v4729
        %v4764 = vunpack.c.l.b16 %v3972
        %v4765 = vunpack.c.l.b16 %v3973
        %v4766 = vpack.c.b16 %v4765, %v4764
        %4768 = vst [vmem:[#allocation3 + $0x18] sm:$0xff] %v4043
        %4769 = vst [vmem:[#allocation3 + $0x60] sm:$0xff] %v4044
        %4770 = vst [vmem:[#allocation3 + $0xa8] sm:$0xff] %v4045
        %4771 = vst [vmem:[#allocation3 + $0xf0] sm:$0xff] %v4046
        %4772 = vst [vmem:[#allocation3 + $0x138] sm:$0xff] %v4047
        %4773 = vst [vmem:[#allocation3 + $0x180] sm:$0xff] %v4048
        %4774 = vst [vmem:[#allocation3 + $0x1c8] sm:$0xff] %v4049
        %4775 = vst [vmem:[#allocation3 + $0x210] sm:$0xff] %v4050
        %4776 = vst [vmem:[#allocation3 + $0x258] sm:$0xff] %v4051
        %4777 = vst [vmem:[#allocation3 + $0x2a0] sm:$0xff] %v4052
        %4778 = vst [vmem:[#allocation3 + $0x2e8] sm:$0xff] %v4053
        %4779 = vst [vmem:[#allocation3 + $0x330] sm:$0xff] %v4054
        %4780 = vst [vmem:[#allocation3 + $0x378] sm:$0xff] %v4055
        %4781 = vst [vmem:[#allocation3 + $0x3c0] sm:$0xff] %v4056
        %4782 = vst [vmem:[#allocation3 + $0x408] sm:$0xff] %v4057
        %4783 = vst [vmem:[#allocation3 + $0x450] sm:$0xff] %v4766
        %v4785 = vshrl.u32 %v3972, 16
        %v4787 = vrot.slane %v4785, 4
        %v4788 = vshll.u32 %v3972, 16
        %v4790 = vrot.slane %v4788, 5
        %v4791 = vor.u32 %v4787, %v4790
        %v4792 = vrot.slane %v4791, 4
        %v4794 = vshll.u32 %v3973, 16
        %v4796 = vrot.slane %v4794, 5
        %v4797 = vsel %vm968, %v4792, %v4796
        %v4798 = vshrl.u32 %v3973, 16
        %v4800 = vrot.slane %v4798, 4
        %v4801 = vor.u32 %v4800, %v4796
        %v4802 = vrot.slane %v4801, 4
        %v4804 = vshll.u32 %v3974, 16
        %v4806 = vrot.slane %v4804, 5
        %v4807 = vsel %vm968, %v4802, %v4806
        %v4808 = vunpack.c.l.b16 %v4797
        %v4809 = vunpack.c.l.b16 %v4807
        %v4810 = vpack.c.b16 %v4809, %v4808
        %4812 = vst [vmem:[#allocation3 + $0x20] sm:$0xff] %v4507
        %4813 = vst [vmem:[#allocation3 + $0x68] sm:$0xff] %v4508
        %4814 = vst [vmem:[#allocation3 + $0xb0] sm:$0xff] %v4509
        %4815 = vst [vmem:[#allocation3 + $0xf8] sm:$0xff] %v4510
        %4816 = vst [vmem:[#allocation3 + $0x140] sm:$0xff] %v4511
        %4817 = vst [vmem:[#allocation3 + $0x188] sm:$0xff] %v4512
        %4818 = vst [vmem:[#allocation3 + $0x1d0] sm:$0xff] %v4513
        %4819 = vst [vmem:[#allocation3 + $0x218] sm:$0xff] %v4514
        %4820 = vst [vmem:[#allocation3 + $0x260] sm:$0xff] %v4515
        %4821 = vst [vmem:[#allocation3 + $0x2a8] sm:$0xff] %v4516
        %4822 = vst [vmem:[#allocation3 + $0x2f0] sm:$0xff] %v4517
        %4823 = vst [vmem:[#allocation3 + $0x338] sm:$0xff] %v4518
        %4824 = vst [vmem:[#allocation3 + $0x380] sm:$0xff] %v4519
        %4825 = vst [vmem:[#allocation3 + $0x3c8] sm:$0xff] %v4520
        %4826 = vst [vmem:[#allocation3 + $0x410] sm:$0xff] %v4521
        %4827 = vst [vmem:[#allocation3 + $0x458] sm:$0xff] %v4810
        %v4829 = vrot.slane %v3972, 5
        %v4830 = vrot.slane %v4829, 4
        %v4831 = vrot.slane %v3973, 5
        %v4832 = vsel %vm1451, %v4830, %v4831
        %v4833 = vrot.slane %v4831, 4
        %v4834 = vrot.slane %v3974, 5
        %v4835 = vsel %vm1451, %v4833, %v4834
        %v4836 = vunpack.c.l.b16 %v4832
        %v4837 = vunpack.c.l.b16 %v4835
        %v4838 = vpack.c.b16 %v4837, %v4836
        %4840 = vst [vmem:[#allocation3 + $0x28] sm:$0xff] %v4715
        %4841 = vst [vmem:[#allocation3 + $0x70] sm:$0xff] %v4716
        %4842 = vst [vmem:[#allocation3 + $0xb8] sm:$0xff] %v4717
        %4843 = vst [vmem:[#allocation3 + $0x100] sm:$0xff] %v4718
        %4844 = vst [vmem:[#allocation3 + $0x148] sm:$0xff] %v4719
        %4845 = vst [vmem:[#allocation3 + $0x190] sm:$0xff] %v4720
        %4846 = vst [vmem:[#allocation3 + $0x1d8] sm:$0xff] %v4721
        %4847 = vst [vmem:[#allocation3 + $0x220] sm:$0xff] %v4722
        %4848 = vst [vmem:[#allocation3 + $0x268] sm:$0xff] %v4723
        %4849 = vst [vmem:[#allocation3 + $0x2b0] sm:$0xff] %v4724
        %4850 = vst [vmem:[#allocation3 + $0x2f8] sm:$0xff] %v4725
        %4851 = vst [vmem:[#allocation3 + $0x340] sm:$0xff] %v4726
        %4852 = vst [vmem:[#allocation3 + $0x388] sm:$0xff] %v4727
        %4853 = vst [vmem:[#allocation3 + $0x3d0] sm:$0xff] %v4728
        %4854 = vst [vmem:[#allocation3 + $0x418] sm:$0xff] %v4729
        %4855 = vst [vmem:[#allocation3 + $0x460] sm:$0xff] %v4838
        %v4858 = vunpack.c.l.b16 %v3975
        %v4859 = vunpack.c.l.b16 %v3976
        %v4860 = vpack.c.b16 %v4859, %v4858
        %4862 = vst [vmem:[#allocation3 + $0x30] sm:$0xff] %v4044
        %4863 = vst [vmem:[#allocation3 + $0x78] sm:$0xff] %v4045
        %4864 = vst [vmem:[#allocation3 + $0xc0] sm:$0xff] %v4046
        %4865 = vst [vmem:[#allocation3 + $0x108] sm:$0xff] %v4047
        %4866 = vst [vmem:[#allocation3 + $0x150] sm:$0xff] %v4048
        %4867 = vst [vmem:[#allocation3 + $0x198] sm:$0xff] %v4049
        %4868 = vst [vmem:[#allocation3 + $0x1e0] sm:$0xff] %v4050
        %4869 = vst [vmem:[#allocation3 + $0x228] sm:$0xff] %v4051
        %4870 = vst [vmem:[#allocation3 + $0x270] sm:$0xff] %v4052
        %4871 = vst [vmem:[#allocation3 + $0x2b8] sm:$0xff] %v4053
        %4872 = vst [vmem:[#allocation3 + $0x300] sm:$0xff] %v4054
        %4873 = vst [vmem:[#allocation3 + $0x348] sm:$0xff] %v4055
        %4874 = vst [vmem:[#allocation3 + $0x390] sm:$0xff] %v4056
        %4875 = vst [vmem:[#allocation3 + $0x3d8] sm:$0xff] %v4057
        %4876 = vst [vmem:[#allocation3 + $0x420] sm:$0xff] %v4766
        %4877 = vst [vmem:[#allocation3 + $0x468] sm:$0xff] %v4860
        %v4879 = vshrl.u32 %v3975, 16
        %v4881 = vrot.slane %v4879, 4
        %v4882 = vshll.u32 %v3975, 16
        %v4884 = vrot.slane %v4882, 5
        %v4885 = vor.u32 %v4881, %v4884
        %v4886 = vrot.slane %v4885, 4
        %v4888 = vshll.u32 %v3976, 16
        %v4890 = vrot.slane %v4888, 5
        %v4891 = vsel %vm968, %v4886, %v4890
        %v4892 = vshrl.u32 %v3976, 16
        %v4894 = vrot.slane %v4892, 4
        %v4895 = vor.u32 %v4894, %v4890
        %v4896 = vrot.slane %v4895, 4
        %v4898 = vshll.u32 %v3977, 16
        %v4900 = vrot.slane %v4898, 5
        %v4901 = vsel %vm968, %v4896, %v4900
        %v4902 = vunpack.c.l.b16 %v4891
        %v4903 = vunpack.c.l.b16 %v4901
        %v4904 = vpack.c.b16 %v4903, %v4902
        %4906 = vst [vmem:[#allocation3 + $0x38] sm:$0xff] %v4508
        %4907 = vst [vmem:[#allocation3 + $0x80] sm:$0xff] %v4509
        %4908 = vst [vmem:[#allocation3 + $0xc8] sm:$0xff] %v4510
        %4909 = vst [vmem:[#allocation3 + $0x110] sm:$0xff] %v4511
        %4910 = vst [vmem:[#allocation3 + $0x158] sm:$0xff] %v4512
        %4911 = vst [vmem:[#allocation3 + $0x1a0] sm:$0xff] %v4513
        %4912 = vst [vmem:[#allocation3 + $0x1e8] sm:$0xff] %v4514
        %4913 = vst [vmem:[#allocation3 + $0x230] sm:$0xff] %v4515
        %4914 = vst [vmem:[#allocation3 + $0x278] sm:$0xff] %v4516
        %4915 = vst [vmem:[#allocation3 + $0x2c0] sm:$0xff] %v4517
        %4916 = vst [vmem:[#allocation3 + $0x308] sm:$0xff] %v4518
        %4917 = vst [vmem:[#allocation3 + $0x350] sm:$0xff] %v4519
        %4918 = vst [vmem:[#allocation3 + $0x398] sm:$0xff] %v4520
        %4919 = vst [vmem:[#allocation3 + $0x3e0] sm:$0xff] %v4521
        %4920 = vst [vmem:[#allocation3 + $0x428] sm:$0xff] %v4810
        %4921 = vst [vmem:[#allocation3 + $0x470] sm:$0xff] %v4904
        %v4923 = vrot.slane %v3975, 5
        %v4924 = vrot.slane %v4923, 4
        %v4925 = vrot.slane %v3976, 5
        %v4926 = vsel %vm1451, %v4924, %v4925
        %v4927 = vrot.slane %v4925, 4
        %v4928 = vrot.slane %v3977, 5
        %v4929 = vsel %vm1451, %v4927, %v4928
        %v4930 = vunpack.c.l.b16 %v4926
        %v4931 = vunpack.c.l.b16 %v4929
        %v4932 = vpack.c.b16 %v4931, %v4930
        %4934 = vst [vmem:[#allocation3 + $0x40] sm:$0xff] %v4716
        %4935 = vst [vmem:[#allocation3 + $0x88] sm:$0xff] %v4717
        %4936 = vst [vmem:[#allocation3 + $0xd0] sm:$0xff] %v4718
        %4937 = vst [vmem:[#allocation3 + $0x118] sm:$0xff] %v4719
        %4938 = vst [vmem:[#allocation3 + $0x160] sm:$0xff] %v4720
        %4939 = vst [vmem:[#allocation3 + $0x1a8] sm:$0xff] %v4721
        %4940 = vst [vmem:[#allocation3 + $0x1f0] sm:$0xff] %v4722
        %4941 = vst [vmem:[#allocation3 + $0x238] sm:$0xff] %v4723
        %4942 = vst [vmem:[#allocation3 + $0x280] sm:$0xff] %v4724
        %4943 = vst [vmem:[#allocation3 + $0x2c8] sm:$0xff] %v4725
        %4944 = vst [vmem:[#allocation3 + $0x310] sm:$0xff] %v4726
        %4945 = vst [vmem:[#allocation3 + $0x358] sm:$0xff] %v4727
        %4946 = vst [vmem:[#allocation3 + $0x3a0] sm:$0xff] %v4728
        %4947 = vst [vmem:[#allocation3 + $0x3e8] sm:$0xff] %v4729
        %4948 = vst [vmem:[#allocation3 + $0x430] sm:$0xff] %v4838
        %4949 = vst [vmem:[#allocation3 + $0x478] sm:$0xff] %v4932
        %v4950 = vld [vmem:[#allocation3] sm:$0xff]
        %v4951 = vld [vmem:[#allocation3 + $0x8] sm:$0xff]
        %v4952 = vld [vmem:[#allocation3 + $0x10] sm:$0xff]
        %v4953 = vld [vmem:[#allocation3 + $0x18] sm:$0xff]
        %v4954 = vld [vmem:[#allocation3 + $0x20] sm:$0xff]
        %v4955 = vld [vmem:[#allocation3 + $0x28] sm:$0xff]
        %v4956 = vld [vmem:[#allocation3 + $0x30] sm:$0xff]
        %v4957 = vld [vmem:[#allocation3 + $0x38] sm:$0xff]
        %v4958 = vld [vmem:[#allocation3 + $0x40] sm:$0xff]
        %v4959 = vld [vmem:[#allocation3 + $0x48] sm:$0xff]
        %v4960 = vld [vmem:[#allocation3 + $0x50] sm:$0xff]
        %v4961 = vld [vmem:[#allocation3 + $0x58] sm:$0xff]
        %v4962 = vld [vmem:[#allocation3 + $0x60] sm:$0xff]
        %v4963 = vld [vmem:[#allocation3 + $0x68] sm:$0xff]
        %v4964 = vld [vmem:[#allocation3 + $0x70] sm:$0xff]
        %v4965 = vld [vmem:[#allocation3 + $0x78] sm:$0xff]
        %v4966 = vld [vmem:[#allocation3 + $0x80] sm:$0xff]
        %v4967 = vld [vmem:[#allocation3 + $0x88] sm:$0xff]
        %v4968 = vld [vmem:[#allocation3 + $0x90] sm:$0xff]
        %v4969 = vld [vmem:[#allocation3 + $0x98] sm:$0xff]
        %v4970 = vld [vmem:[#allocation3 + $0xa0] sm:$0xff]
        %v4971 = vld [vmem:[#allocation3 + $0xa8] sm:$0xff]
        %v4972 = vld [vmem:[#allocation3 + $0xb0] sm:$0xff]
        %v4973 = vld [vmem:[#allocation3 + $0xb8] sm:$0xff]
        %v4974 = vld [vmem:[#allocation3 + $0xc0] sm:$0xff]
        %v4975 = vld [vmem:[#allocation3 + $0xc8] sm:$0xff]
        %v4976 = vld [vmem:[#allocation3 + $0xd0] sm:$0xff]
        %v4977 = vld [vmem:[#allocation3 + $0xd8] sm:$0xff]
        %v4978 = vld [vmem:[#allocation3 + $0xe0] sm:$0xff]
        %v4979 = vld [vmem:[#allocation3 + $0xe8] sm:$0xff]
        %v4980 = vld [vmem:[#allocation3 + $0xf0] sm:$0xff]
        %v4981 = vld [vmem:[#allocation3 + $0xf8] sm:$0xff]
        %v4982 = vld [vmem:[#allocation3 + $0x100] sm:$0xff]
        %v4983 = vld [vmem:[#allocation3 + $0x108] sm:$0xff]
        %v4984 = vld [vmem:[#allocation3 + $0x110] sm:$0xff]
        %v4985 = vld [vmem:[#allocation3 + $0x118] sm:$0xff]
        %v4986 = vld [vmem:[#allocation3 + $0x120] sm:$0xff]
        %v4987 = vld [vmem:[#allocation3 + $0x128] sm:$0xff]
        %v4988 = vld [vmem:[#allocation3 + $0x130] sm:$0xff]
        %v4989 = vld [vmem:[#allocation3 + $0x138] sm:$0xff]
        %v4990 = vld [vmem:[#allocation3 + $0x140] sm:$0xff]
        %v4991 = vld [vmem:[#allocation3 + $0x148] sm:$0xff]
        %v4992 = vld [vmem:[#allocation3 + $0x150] sm:$0xff]
        %v4993 = vld [vmem:[#allocation3 + $0x158] sm:$0xff]
        %v4994 = vld [vmem:[#allocation3 + $0x160] sm:$0xff]
        %v4995 = vld [vmem:[#allocation3 + $0x168] sm:$0xff]
        %v4996 = vld [vmem:[#allocation3 + $0x170] sm:$0xff]
        %v4997 = vld [vmem:[#allocation3 + $0x178] sm:$0xff]
        %v4998 = vld [vmem:[#allocation3 + $0x180] sm:$0xff]
        %v4999 = vld [vmem:[#allocation3 + $0x188] sm:$0xff]
        %v5000 = vld [vmem:[#allocation3 + $0x190] sm:$0xff]
        %v5001 = vld [vmem:[#allocation3 + $0x198] sm:$0xff]
        %v5002 = vld [vmem:[#allocation3 + $0x1a0] sm:$0xff]
        %v5003 = vld [vmem:[#allocation3 + $0x1a8] sm:$0xff]
        %v5004 = vld [vmem:[#allocation3 + $0x1b0] sm:$0xff]
        %v5005 = vld [vmem:[#allocation3 + $0x1b8] sm:$0xff]
        %v5006 = vld [vmem:[#allocation3 + $0x1c0] sm:$0xff]
        %v5007 = vld [vmem:[#allocation3 + $0x1c8] sm:$0xff]
        %v5008 = vld [vmem:[#allocation3 + $0x1d0] sm:$0xff]
        %v5009 = vld [vmem:[#allocation3 + $0x1d8] sm:$0xff]
        %v5010 = vld [vmem:[#allocation3 + $0x1e0] sm:$0xff]
        %v5011 = vld [vmem:[#allocation3 + $0x1e8] sm:$0xff]
        %v5012 = vld [vmem:[#allocation3 + $0x1f0] sm:$0xff]
        %v5013 = vld [vmem:[#allocation3 + $0x1f8] sm:$0xff]
        %v5014 = vld [vmem:[#allocation3 + $0x200] sm:$0xff]
        %v5015 = vld [vmem:[#allocation3 + $0x208] sm:$0xff]
        %v5016 = vld [vmem:[#allocation3 + $0x210] sm:$0xff]
        %v5017 = vld [vmem:[#allocation3 + $0x218] sm:$0xff]
        %v5018 = vld [vmem:[#allocation3 + $0x220] sm:$0xff]
        %v5019 = vld [vmem:[#allocation3 + $0x228] sm:$0xff]
        %v5020 = vld [vmem:[#allocation3 + $0x230] sm:$0xff]
        %v5021 = vld [vmem:[#allocation3 + $0x238] sm:$0xff]
        %v5022 = vld [vmem:[#allocation3 + $0x240] sm:$0xff]
        %v5023 = vld [vmem:[#allocation3 + $0x248] sm:$0xff]
        %v5024 = vld [vmem:[#allocation3 + $0x250] sm:$0xff]
        %v5025 = vld [vmem:[#allocation3 + $0x258] sm:$0xff]
        %v5026 = vld [vmem:[#allocation3 + $0x260] sm:$0xff]
        %v5027 = vld [vmem:[#allocation3 + $0x268] sm:$0xff]
        %v5028 = vld [vmem:[#allocation3 + $0x270] sm:$0xff]
        %v5029 = vld [vmem:[#allocation3 + $0x278] sm:$0xff]
        %v5030 = vld [vmem:[#allocation3 + $0x280] sm:$0xff]
        %v5031 = vld [vmem:[#allocation3 + $0x288] sm:$0xff]
        %v5032 = vld [vmem:[#allocation3 + $0x290] sm:$0xff]
        %v5033 = vld [vmem:[#allocation3 + $0x298] sm:$0xff]
        %v5034 = vld [vmem:[#allocation3 + $0x2a0] sm:$0xff]
        %v5035 = vld [vmem:[#allocation3 + $0x2a8] sm:$0xff]
        %v5036 = vld [vmem:[#allocation3 + $0x2b0] sm:$0xff]
        %v5037 = vld [vmem:[#allocation3 + $0x2b8] sm:$0xff]
        %v5038 = vld [vmem:[#allocation3 + $0x2c0] sm:$0xff]
        %v5039 = vld [vmem:[#allocation3 + $0x2c8] sm:$0xff]
        %v5040 = vld [vmem:[#allocation3 + $0x2d0] sm:$0xff]
        %v5041 = vld [vmem:[#allocation3 + $0x2d8] sm:$0xff]
        %v5042 = vld [vmem:[#allocation3 + $0x2e0] sm:$0xff]
        %v5043 = vld [vmem:[#allocation3 + $0x2e8] sm:$0xff]
        %v5044 = vld [vmem:[#allocation3 + $0x2f0] sm:$0xff]
        %v5045 = vld [vmem:[#allocation3 + $0x2f8] sm:$0xff]
        %v5046 = vld [vmem:[#allocation3 + $0x300] sm:$0xff]
        %v5047 = vld [vmem:[#allocation3 + $0x308] sm:$0xff]
        %v5048 = vld [vmem:[#allocation3 + $0x310] sm:$0xff]
        %v5049 = vld [vmem:[#allocation3 + $0x318] sm:$0xff]
        %v5050 = vld [vmem:[#allocation3 + $0x320] sm:$0xff]
        %v5051 = vld [vmem:[#allocation3 + $0x328] sm:$0xff]
        %v5052 = vld [vmem:[#allocation3 + $0x330] sm:$0xff]
        %v5053 = vld [vmem:[#allocation3 + $0x338] sm:$0xff]
        %v5054 = vld [vmem:[#allocation3 + $0x340] sm:$0xff]
        %v5055 = vld [vmem:[#allocation3 + $0x348] sm:$0xff]
        %v5056 = vld [vmem:[#allocation3 + $0x350] sm:$0xff]
        %v5057 = vld [vmem:[#allocation3 + $0x358] sm:$0xff]
        %v5058 = vld [vmem:[#allocation3 + $0x360] sm:$0xff]
        %v5059 = vld [vmem:[#allocation3 + $0x368] sm:$0xff]
        %v5060 = vld [vmem:[#allocation3 + $0x370] sm:$0xff]
        %v5061 = vld [vmem:[#allocation3 + $0x378] sm:$0xff]
        %v5062 = vld [vmem:[#allocation3 + $0x380] sm:$0xff]
        %v5063 = vld [vmem:[#allocation3 + $0x388] sm:$0xff]
        %v5064 = vld [vmem:[#allocation3 + $0x390] sm:$0xff]
        %v5065 = vld [vmem:[#allocation3 + $0x398] sm:$0xff]
        %v5066 = vld [vmem:[#allocation3 + $0x3a0] sm:$0xff]
        %v5067 = vld [vmem:[#allocation3 + $0x3a8] sm:$0xff]
        %v5068 = vld [vmem:[#allocation3 + $0x3b0] sm:$0xff]
        %v5069 = vld [vmem:[#allocation3 + $0x3b8] sm:$0xff]
        %v5070 = vld [vmem:[#allocation3 + $0x3c0] sm:$0xff]
        %v5071 = vld [vmem:[#allocation3 + $0x3c8] sm:$0xff]
        %v5072 = vld [vmem:[#allocation3 + $0x3d0] sm:$0xff]
        %v5073 = vld [vmem:[#allocation3 + $0x3d8] sm:$0xff]
        %v5074 = vld [vmem:[#allocation3 + $0x3e0] sm:$0xff]
        %v5075 = vld [vmem:[#allocation3 + $0x3e8] sm:$0xff]
        %v5076 = vld [vmem:[#allocation3 + $0x3f0] sm:$0xff]
        %v5077 = vld [vmem:[#allocation3 + $0x3f8] sm:$0xff]
        %v5078 = vld [vmem:[#allocation3 + $0x400] sm:$0xff]
        %v5079 = vld [vmem:[#allocation3 + $0x408] sm:$0xff]
        %v5080 = vld [vmem:[#allocation3 + $0x410] sm:$0xff]
        %v5081 = vld [vmem:[#allocation3 + $0x418] sm:$0xff]
        %v5082 = vld [vmem:[#allocation3 + $0x420] sm:$0xff]
        %v5083 = vld [vmem:[#allocation3 + $0x428] sm:$0xff]
        %v5084 = vld [vmem:[#allocation3 + $0x430] sm:$0xff]
        %v5085 = vld [vmem:[#allocation3 + $0x438] sm:$0xff]
        %v5086 = vld [vmem:[#allocation3 + $0x440] sm:$0xff]
        %v5087 = vld [vmem:[#allocation3 + $0x448] sm:$0xff]
        %v5088 = vld [vmem:[#allocation3 + $0x450] sm:$0xff]
        %v5089 = vld [vmem:[#allocation3 + $0x458] sm:$0xff]
        %v5090 = vld [vmem:[#allocation3 + $0x460] sm:$0xff]
        %v5091 = vld [vmem:[#allocation3 + $0x468] sm:$0xff]
        %v5092 = vld [vmem:[#allocation3 + $0x470] sm:$0xff]
        %v5093 = vld [vmem:[#allocation3 + $0x478] sm:$0xff]
        %v5094 = vld [vmem:[#allocation9] sm:$0xf]
        %v5095 = vld [vmem:[#allocation9 + $0x4] sm:$0xf]
        %v5096 = vld [vmem:[#allocation9 + $0x8] sm:$0xf]
        %v5097 = vld [vmem:[#allocation9 + $0xc] sm:$0xf]
        %v5098 = vld [vmem:[#allocation9 + $0x10] sm:$0xf]
        %v5099 = vld [vmem:[#allocation9 + $0x14] sm:$0xf]
        %v5100 = vld [vmem:[#allocation9 + $0x18] sm:$0xf]
        %v5101 = vld [vmem:[#allocation9 + $0x1c] sm:$0xf]
        %v5102 = vld [vmem:[#allocation9 + $0x20] sm:$0xf]
        %v5103 = vld [vmem:[#allocation9 + $0x24] sm:$0xf]
        %v5104 = vld [vmem:[#allocation9 + $0x28] sm:$0xf]
        %v5105 = vld [vmem:[#allocation9 + $0x2c] sm:$0xf]
        %v5106 = vld [vmem:[#allocation9 + $0x30] sm:$0xf]
        %v5107 = vld [vmem:[#allocation9 + $0x34] sm:$0xf]
        %v5108 = vld [vmem:[#allocation9 + $0x38] sm:$0xf]
        %v5109 = vld [vmem:[#allocation9 + $0x3c] sm:$0xf]
        %v5110 = vld [vmem:[#allocation9 + $0x40] sm:$0xf]
        %v5111 = vld [vmem:[#allocation9 + $0x44] sm:$0xf]
        %v5112 = vld [vmem:[#allocation9 + $0x48] sm:$0xf]
        %v5113 = vld [vmem:[#allocation9 + $0x4c] sm:$0xf]
        %v5114 = vld [vmem:[#allocation9 + $0x50] sm:$0xf]
        %v5115 = vld [vmem:[#allocation9 + $0x54] sm:$0xf]
        %v5116 = vld [vmem:[#allocation9 + $0x58] sm:$0xf]
        %v5117 = vld [vmem:[#allocation9 + $0x5c] sm:$0xf]
        %v5118 = vld [vmem:[#allocation9 + $0x60] sm:$0xf]
        %v5119 = vld [vmem:[#allocation9 + $0x64] sm:$0xf]
        %v5120 = vld [vmem:[#allocation9 + $0x68] sm:$0xf]
        %v5121 = vld [vmem:[#allocation9 + $0x6c] sm:$0xf]
        %v5122 = vld [vmem:[#allocation9 + $0x70] sm:$0xf]
        %v5123 = vld [vmem:[#allocation9 + $0x74] sm:$0xf]
        %v5124 = vld [vmem:[#allocation9 + $0x78] sm:$0xf]
        %v5125 = vld [vmem:[#allocation9 + $0x7c] sm:$0xf]
        %v5126 = vld [vmem:[#allocation9 + $0x80] sm:$0xf]
        %v5127 = vld [vmem:[#allocation9 + $0x84] sm:$0xf]
        %v5128 = vld [vmem:[#allocation9 + $0x88] sm:$0xf]
        %v5129 = vld [vmem:[#allocation9 + $0x8c] sm:$0xf]
        %v5130 = vld [vmem:[#allocation9 + $0x90] sm:$0xf]
        %v5131 = vld [vmem:[#allocation9 + $0x94] sm:$0xf]
        %v5132 = vld [vmem:[#allocation9 + $0x98] sm:$0xf]
        %v5133 = vld [vmem:[#allocation9 + $0x9c] sm:$0xf]
        %v5134 = vld [vmem:[#allocation9 + $0xa0] sm:$0xf]
        %v5135 = vld [vmem:[#allocation9 + $0xa4] sm:$0xf]
        %v5136 = vld [vmem:[#allocation9 + $0xa8] sm:$0xf]
        %v5137 = vld [vmem:[#allocation9 + $0xac] sm:$0xf]
        %v5138 = vld [vmem:[#allocation9 + $0xb0] sm:$0xf]
        %v5139 = vld [vmem:[#allocation9 + $0xb4] sm:$0xf]
        %v5140 = vld [vmem:[#allocation9 + $0xb8] sm:$0xf]
        %v5141 = vld [vmem:[#allocation9 + $0xbc] sm:$0xf]
        %v5142 = vld [vmem:[#allocation9 + $0xc0] sm:$0xf]
        %v5143 = vld [vmem:[#allocation9 + $0xc4] sm:$0xf]
        %v5144 = vld [vmem:[#allocation9 + $0xc8] sm:$0xf]
        %v5145 = vld [vmem:[#allocation9 + $0xcc] sm:$0xf]
        %v5146 = vld [vmem:[#allocation9 + $0xd0] sm:$0xf]
        %v5147 = vld [vmem:[#allocation9 + $0xd4] sm:$0xf]
        %v5148 = vld [vmem:[#allocation9 + $0xd8] sm:$0xf]
        %v5149 = vld [vmem:[#allocation9 + $0xdc] sm:$0xf]
        %v5150 = vld [vmem:[#allocation9 + $0xe0] sm:$0xf]
        %v5151 = vld [vmem:[#allocation9 + $0xe4] sm:$0xf]
        %v5152 = vld [vmem:[#allocation9 + $0xe8] sm:$0xf]
        %v5153 = vld [vmem:[#allocation9 + $0xec] sm:$0xf]
        %v5154 = vld [vmem:[#allocation9 + $0xf0] sm:$0xf]
        %v5155 = vld [vmem:[#allocation9 + $0xf4] sm:$0xf]
        %v5156 = vld [vmem:[#allocation9 + $0xf8] sm:$0xf]
        %v5157 = vld [vmem:[#allocation9 + $0xfc] sm:$0xf]
        %v5158 = vld [vmem:[#allocation9 + $0x100] sm:$0xf]
        %v5159 = vld [vmem:[#allocation9 + $0x104] sm:$0xf]
        %v5160 = vld [vmem:[#allocation9 + $0x108] sm:$0xf]
        %v5161 = vld [vmem:[#allocation9 + $0x10c] sm:$0xf]
        %v5162 = vld [vmem:[#allocation9 + $0x110] sm:$0xf]
        %v5163 = vld [vmem:[#allocation9 + $0x114] sm:$0xf]
        %v5164 = vld [vmem:[#allocation9 + $0x118] sm:$0xf]
        %v5165 = vld [vmem:[#allocation9 + $0x11c] sm:$0xf]
        %v5166 = vld [vmem:[#allocation9 + $0x120] sm:$0xf]
        %v5167 = vld [vmem:[#allocation9 + $0x124] sm:$0xf]
        %v5168 = vld [vmem:[#allocation9 + $0x128] sm:$0xf]
        %v5169 = vld [vmem:[#allocation9 + $0x12c] sm:$0xf]
        %v5170 = vld [vmem:[#allocation9 + $0x130] sm:$0xf]
        %v5171 = vld [vmem:[#allocation9 + $0x134] sm:$0xf]
        %v5172 = vld [vmem:[#allocation9 + $0x138] sm:$0xf]
        %v5173 = vld [vmem:[#allocation9 + $0x13c] sm:$0xf]
        %v5174 = vld [vmem:[#allocation9 + $0x140] sm:$0xf]
        %v5175 = vld [vmem:[#allocation9 + $0x144] sm:$0xf]
        %v5176 = vld [vmem:[#allocation9 + $0x148] sm:$0xf]
        %v5177 = vld [vmem:[#allocation9 + $0x14c] sm:$0xf]
        %v5178 = vld [vmem:[#allocation9 + $0x150] sm:$0xf]
        %v5179 = vld [vmem:[#allocation9 + $0x154] sm:$0xf]
        %v5180 = vld [vmem:[#allocation9 + $0x158] sm:$0xf]
        %v5181 = vld [vmem:[#allocation9 + $0x15c] sm:$0xf]
        %v5182 = vld [vmem:[#allocation9 + $0x160] sm:$0xf]
        %v5183 = vld [vmem:[#allocation9 + $0x164] sm:$0xf]
        %v5184 = vld [vmem:[#allocation9 + $0x168] sm:$0xf]
        %v5185 = vld [vmem:[#allocation9 + $0x16c] sm:$0xf]
        %v5186 = vld [vmem:[#allocation9 + $0x170] sm:$0xf]
        %v5187 = vld [vmem:[#allocation9 + $0x174] sm:$0xf]
        %v5188 = vld [vmem:[#allocation9 + $0x178] sm:$0xf]
        %v5189 = vld [vmem:[#allocation9 + $0x17c] sm:$0xf]
        %v5190 = vld [vmem:[#allocation9 + $0x180] sm:$0xf]
        %v5191 = vld [vmem:[#allocation9 + $0x184] sm:$0xf]
        %v5192 = vld [vmem:[#allocation9 + $0x188] sm:$0xf]
        %v5193 = vld [vmem:[#allocation9 + $0x18c] sm:$0xf]
        %v5194 = vld [vmem:[#allocation9 + $0x190] sm:$0xf]
        %v5195 = vld [vmem:[#allocation9 + $0x194] sm:$0xf]
        %v5196 = vld [vmem:[#allocation9 + $0x198] sm:$0xf]
        %v5197 = vld [vmem:[#allocation9 + $0x19c] sm:$0xf]
        %v5198 = vld [vmem:[#allocation9 + $0x1a0] sm:$0xf]
        %v5199 = vld [vmem:[#allocation9 + $0x1a4] sm:$0xf]
        %v5200 = vld [vmem:[#allocation9 + $0x1a8] sm:$0xf]
        %v5201 = vld [vmem:[#allocation9 + $0x1ac] sm:$0xf]
        %v5202 = vld [vmem:[#allocation9 + $0x1b0] sm:$0xf]
        %v5203 = vld [vmem:[#allocation9 + $0x1b4] sm:$0xf]
        %v5204 = vld [vmem:[#allocation9 + $0x1b8] sm:$0xf]
        %v5205 = vld [vmem:[#allocation9 + $0x1bc] sm:$0xf]
        %v5206 = vld [vmem:[#allocation9 + $0x1c0] sm:$0xf]
        %v5207 = vld [vmem:[#allocation9 + $0x1c4] sm:$0xf]
        %v5208 = vld [vmem:[#allocation9 + $0x1c8] sm:$0xf]
        %v5209 = vld [vmem:[#allocation9 + $0x1cc] sm:$0xf]
        %v5210 = vld [vmem:[#allocation9 + $0x1d0] sm:$0xf]
        %v5211 = vld [vmem:[#allocation9 + $0x1d4] sm:$0xf]
        %v5212 = vld [vmem:[#allocation9 + $0x1d8] sm:$0xf]
        %v5213 = vld [vmem:[#allocation9 + $0x1dc] sm:$0xf]
        %v5214 = vld [vmem:[#allocation9 + $0x1e0] sm:$0xf]
        %v5215 = vld [vmem:[#allocation9 + $0x1e4] sm:$0xf]
        %v5216 = vld [vmem:[#allocation9 + $0x1e8] sm:$0xf]
        %v5217 = vld [vmem:[#allocation9 + $0x1ec] sm:$0xf]
        %v5218 = vld [vmem:[#allocation9 + $0x1f0] sm:$0xf]
        %v5219 = vld [vmem:[#allocation9 + $0x1f4] sm:$0xf]
        %v5220 = vld [vmem:[#allocation9 + $0x1f8] sm:$0xf]
        %v5221 = vld [vmem:[#allocation9 + $0x1fc] sm:$0xf]
        %v5222 = vld [vmem:[#allocation9 + $0x200] sm:$0xf]
        %v5223 = vld [vmem:[#allocation9 + $0x204] sm:$0xf]
        %v5224 = vld [vmem:[#allocation9 + $0x208] sm:$0xf]
        %v5225 = vld [vmem:[#allocation9 + $0x20c] sm:$0xf]
        %v5226 = vld [vmem:[#allocation9 + $0x210] sm:$0xf]
        %v5227 = vld [vmem:[#allocation9 + $0x214] sm:$0xf]
        %v5228 = vld [vmem:[#allocation9 + $0x218] sm:$0xf]
        %v5229 = vld [vmem:[#allocation9 + $0x21c] sm:$0xf]
        %v5230 = vld [vmem:[#allocation9 + $0x220] sm:$0xf]
        %v5231 = vld [vmem:[#allocation9 + $0x224] sm:$0xf]
        %v5232 = vld [vmem:[#allocation9 + $0x228] sm:$0xf]
        %v5233 = vld [vmem:[#allocation9 + $0x22c] sm:$0xf]
        %v5234 = vld [vmem:[#allocation9 + $0x230] sm:$0xf]
        %v5235 = vld [vmem:[#allocation9 + $0x234] sm:$0xf]
        %v5236 = vld [vmem:[#allocation9 + $0x238] sm:$0xf]
        %v5237 = vld [vmem:[#allocation9 + $0x23c] sm:$0xf]
        %v5238 = vld [vmem:[%s4] sm:$0x1]
        %v5240 = vlaneseq
        %v5241 = vshrl.u32 %v5240, 7
        %v5242 = vsub.s32 0, %v5241
        %v5243 = vrot.slane %v5238, %v5242
        %v5389 = vunpack.c.l.b16 %v5094
        %v5390 = vunpack.c.l.b16 %v5095
        %v5391 = vunpack.c.l.b16 %v5096
        %v5392 = vunpack.c.l.b16 %v5097
        %v5393 = vunpack.c.l.b16 %v5098
        %v5394 = vunpack.c.l.b16 %v5099
        %v5395 = vunpack.c.l.b16 %v5100
        %v5396 = vunpack.c.l.b16 %v5101
        %v5397 = vunpack.c.l.b16 %v5102
        %v5398 = vunpack.c.l.b16 %v5103
        %v5399 = vunpack.c.l.b16 %v5104
        %v5400 = vunpack.c.l.b16 %v5105
        %v5401 = vunpack.c.l.b16 %v5106
        %v5402 = vunpack.c.l.b16 %v5107
        %v5403 = vunpack.c.l.b16 %v5108
        %v5404 = vunpack.c.l.b16 %v5109
        %v5405 = vunpack.c.l.b16 %v5110
        %v5406 = vunpack.c.l.b16 %v5111
        %v5407 = vunpack.c.l.b16 %v5112
        %v5408 = vunpack.c.l.b16 %v5113
        %v5409 = vunpack.c.l.b16 %v5114
        %v5410 = vunpack.c.l.b16 %v5115
        %v5411 = vunpack.c.l.b16 %v5116
        %v5412 = vunpack.c.l.b16 %v5117
        %v5413 = vunpack.c.l.b16 %v5118
        %v5414 = vunpack.c.l.b16 %v5119
        %v5415 = vunpack.c.l.b16 %v5120
        %v5416 = vunpack.c.l.b16 %v5121
        %v5417 = vunpack.c.l.b16 %v5122
        %v5418 = vunpack.c.l.b16 %v5123
        %v5419 = vunpack.c.l.b16 %v5124
        %v5420 = vunpack.c.l.b16 %v5125
        %v5421 = vunpack.c.l.b16 %v5126
        %v5422 = vunpack.c.l.b16 %v5127
        %v5423 = vunpack.c.l.b16 %v5128
        %v5424 = vunpack.c.l.b16 %v5129
        %v5425 = vunpack.c.l.b16 %v5130
        %v5426 = vunpack.c.l.b16 %v5131
        %v5427 = vunpack.c.l.b16 %v5132
        %v5428 = vunpack.c.l.b16 %v5133
        %v5429 = vunpack.c.l.b16 %v5134
        %v5430 = vunpack.c.l.b16 %v5135
        %v5431 = vunpack.c.l.b16 %v5136
        %v5432 = vunpack.c.l.b16 %v5137
        %v5433 = vunpack.c.l.b16 %v5138
        %v5434 = vunpack.c.l.b16 %v5139
        %v5435 = vunpack.c.l.b16 %v5140
        %v5436 = vunpack.c.l.b16 %v5141
        %v5437 = vunpack.c.l.b16 %v5142
        %v5438 = vunpack.c.l.b16 %v5143
        %v5439 = vunpack.c.l.b16 %v5144
        %v5440 = vunpack.c.l.b16 %v5145
        %v5441 = vunpack.c.l.b16 %v5146
        %v5442 = vunpack.c.l.b16 %v5147
        %v5443 = vunpack.c.l.b16 %v5148
        %v5444 = vunpack.c.l.b16 %v5149
        %v5445 = vunpack.c.l.b16 %v5150
        %v5446 = vunpack.c.l.b16 %v5151
        %v5447 = vunpack.c.l.b16 %v5152
        %v5448 = vunpack.c.l.b16 %v5153
        %v5449 = vunpack.c.l.b16 %v5154
        %v5450 = vunpack.c.l.b16 %v5155
        %v5451 = vunpack.c.l.b16 %v5156
        %v5452 = vunpack.c.l.b16 %v5157
        %v5453 = vunpack.c.l.b16 %v5158
        %v5454 = vunpack.c.l.b16 %v5159
        %v5455 = vunpack.c.l.b16 %v5160
        %v5456 = vunpack.c.l.b16 %v5161
        %v5457 = vunpack.c.l.b16 %v5162
        %v5458 = vunpack.c.l.b16 %v5163
        %v5459 = vunpack.c.l.b16 %v5164
        %v5460 = vunpack.c.l.b16 %v5165
        %v5461 = vunpack.c.l.b16 %v5166
        %v5462 = vunpack.c.l.b16 %v5167
        %v5463 = vunpack.c.l.b16 %v5168
        %v5464 = vunpack.c.l.b16 %v5169
        %v5465 = vunpack.c.l.b16 %v5170
        %v5466 = vunpack.c.l.b16 %v5171
        %v5467 = vunpack.c.l.b16 %v5172
        %v5468 = vunpack.c.l.b16 %v5173
        %v5469 = vunpack.c.l.b16 %v5174
        %v5470 = vunpack.c.l.b16 %v5175
        %v5471 = vunpack.c.l.b16 %v5176
        %v5472 = vunpack.c.l.b16 %v5177
        %v5473 = vunpack.c.l.b16 %v5178
        %v5474 = vunpack.c.l.b16 %v5179
        %v5475 = vunpack.c.l.b16 %v5180
        %v5476 = vunpack.c.l.b16 %v5181
        %v5477 = vunpack.c.l.b16 %v5182
        %v5478 = vunpack.c.l.b16 %v5183
        %v5479 = vunpack.c.l.b16 %v5184
        %v5480 = vunpack.c.l.b16 %v5185
        %v5481 = vunpack.c.l.b16 %v5186
        %v5482 = vunpack.c.l.b16 %v5187
        %v5483 = vunpack.c.l.b16 %v5188
        %v5484 = vunpack.c.l.b16 %v5189
        %v5485 = vunpack.c.l.b16 %v5190
        %v5486 = vunpack.c.l.b16 %v5191
        %v5487 = vunpack.c.l.b16 %v5192
        %v5488 = vunpack.c.l.b16 %v5193
        %v5489 = vunpack.c.l.b16 %v5194
        %v5490 = vunpack.c.l.b16 %v5195
        %v5491 = vunpack.c.l.b16 %v5196
        %v5492 = vunpack.c.l.b16 %v5197
        %v5493 = vunpack.c.l.b16 %v5198
        %v5494 = vunpack.c.l.b16 %v5199
        %v5495 = vunpack.c.l.b16 %v5200
        %v5496 = vunpack.c.l.b16 %v5201
        %v5497 = vunpack.c.l.b16 %v5202
        %v5498 = vunpack.c.l.b16 %v5203
        %v5499 = vunpack.c.l.b16 %v5204
        %v5500 = vunpack.c.l.b16 %v5205
        %v5501 = vunpack.c.l.b16 %v5206
        %v5502 = vunpack.c.l.b16 %v5207
        %v5503 = vunpack.c.l.b16 %v5208
        %v5504 = vunpack.c.l.b16 %v5209
        %v5505 = vunpack.c.l.b16 %v5210
        %v5506 = vunpack.c.l.b16 %v5211
        %v5507 = vunpack.c.l.b16 %v5212
        %v5508 = vunpack.c.l.b16 %v5213
        %v5509 = vunpack.c.l.b16 %v5214
        %v5510 = vunpack.c.l.b16 %v5215
        %v5511 = vunpack.c.l.b16 %v5216
        %v5512 = vunpack.c.l.b16 %v5217
        %v5513 = vunpack.c.l.b16 %v5218
        %v5514 = vunpack.c.l.b16 %v5219
        %v5515 = vunpack.c.l.b16 %v5220
        %v5516 = vunpack.c.l.b16 %v5221
        %v5517 = vunpack.c.l.b16 %v5222
        %v5518 = vunpack.c.l.b16 %v5223
        %v5519 = vunpack.c.l.b16 %v5224
        %v5520 = vunpack.c.l.b16 %v5225
        %v5521 = vunpack.c.l.b16 %v5226
        %v5522 = vunpack.c.l.b16 %v5227
        %v5523 = vunpack.c.l.b16 %v5228
        %v5524 = vunpack.c.l.b16 %v5229
        %v5525 = vunpack.c.l.b16 %v5230
        %v5526 = vunpack.c.l.b16 %v5231
        %v5527 = vunpack.c.l.b16 %v5232
        %v5528 = vunpack.c.l.b16 %v5233
        %v5529 = vunpack.c.l.b16 %v5234
        %v5530 = vunpack.c.l.b16 %v5235
        %v5531 = vunpack.c.l.b16 %v5236
        %v5532 = vunpack.c.l.b16 %v5237
        %v5533 = vpack.c.b16 %v5390, %v5389
        %v5534 = vpack.c.b16 %v5392, %v5391
        %v5535 = vpack.c.b16 %v5394, %v5393
        %v5536 = vpack.c.b16 %v5396, %v5395
        %v5537 = vpack.c.b16 %v5398, %v5397
        %v5538 = vpack.c.b16 %v5400, %v5399
        %v5539 = vpack.c.b16 %v5402, %v5401
        %v5540 = vpack.c.b16 %v5404, %v5403
        %v5541 = vpack.c.b16 %v5406, %v5405
        %v5542 = vpack.c.b16 %v5408, %v5407
        %v5543 = vpack.c.b16 %v5410, %v5409
        %v5544 = vpack.c.b16 %v5412, %v5411
        %v5545 = vpack.c.b16 %v5414, %v5413
        %v5546 = vpack.c.b16 %v5416, %v5415
        %v5547 = vpack.c.b16 %v5418, %v5417
        %v5548 = vpack.c.b16 %v5420, %v5419
        %v5549 = vpack.c.b16 %v5422, %v5421
        %v5550 = vpack.c.b16 %v5424, %v5423
        %v5551 = vpack.c.b16 %v5426, %v5425
        %v5552 = vpack.c.b16 %v5428, %v5427
        %v5553 = vpack.c.b16 %v5430, %v5429
        %v5554 = vpack.c.b16 %v5432, %v5431
        %v5555 = vpack.c.b16 %v5434, %v5433
        %v5556 = vpack.c.b16 %v5436, %v5435
        %v5557 = vpack.c.b16 %v5438, %v5437
        %v5558 = vpack.c.b16 %v5440, %v5439
        %v5559 = vpack.c.b16 %v5442, %v5441
        %v5560 = vpack.c.b16 %v5444, %v5443
        %v5561 = vpack.c.b16 %v5446, %v5445
        %v5562 = vpack.c.b16 %v5448, %v5447
        %v5563 = vpack.c.b16 %v5450, %v5449
        %v5564 = vpack.c.b16 %v5452, %v5451
        %v5565 = vpack.c.b16 %v5454, %v5453
        %v5566 = vpack.c.b16 %v5456, %v5455
        %v5567 = vpack.c.b16 %v5458, %v5457
        %v5568 = vpack.c.b16 %v5460, %v5459
        %v5569 = vpack.c.b16 %v5462, %v5461
        %v5570 = vpack.c.b16 %v5464, %v5463
        %v5571 = vpack.c.b16 %v5466, %v5465
        %v5572 = vpack.c.b16 %v5468, %v5467
        %v5573 = vpack.c.b16 %v5470, %v5469
        %v5574 = vpack.c.b16 %v5472, %v5471
        %v5575 = vpack.c.b16 %v5474, %v5473
        %v5576 = vpack.c.b16 %v5476, %v5475
        %v5577 = vpack.c.b16 %v5478, %v5477
        %v5578 = vpack.c.b16 %v5480, %v5479
        %v5579 = vpack.c.b16 %v5482, %v5481
        %v5580 = vpack.c.b16 %v5484, %v5483
        %v5581 = vpack.c.b16 %v5486, %v5485
        %v5582 = vpack.c.b16 %v5488, %v5487
        %v5583 = vpack.c.b16 %v5490, %v5489
        %v5584 = vpack.c.b16 %v5492, %v5491
        %v5585 = vpack.c.b16 %v5494, %v5493
        %v5586 = vpack.c.b16 %v5496, %v5495
        %v5587 = vpack.c.b16 %v5498, %v5497
        %v5588 = vpack.c.b16 %v5500, %v5499
        %v5589 = vpack.c.b16 %v5502, %v5501
        %v5590 = vpack.c.b16 %v5504, %v5503
        %v5591 = vpack.c.b16 %v5506, %v5505
        %v5592 = vpack.c.b16 %v5508, %v5507
        %v5593 = vpack.c.b16 %v5510, %v5509
        %v5594 = vpack.c.b16 %v5512, %v5511
        %v5595 = vpack.c.b16 %v5514, %v5513
        %v5596 = vpack.c.b16 %v5516, %v5515
        %v5597 = vpack.c.b16 %v5518, %v5517
        %v5598 = vpack.c.b16 %v5520, %v5519
        %v5599 = vpack.c.b16 %v5522, %v5521
        %v5600 = vpack.c.b16 %v5524, %v5523
        %v5601 = vpack.c.b16 %v5526, %v5525
        %v5602 = vpack.c.b16 %v5528, %v5527
        %v5603 = vpack.c.b16 %v5530, %v5529
        %v5604 = vpack.c.b16 %v5532, %v5531
        %5677 = vmatprep.subr.bf16.mxu0 0
        %5678 = vmatpush1.bf16.msra.mxu0 %v5533
        %5679 = vmatprep.subr.bf16.mxu0 0
        %5680 = vmatpush1.bf16.msra.mxu0 %v5534
        %5681 = vmatprep.subr.bf16.mxu0 0
        %5682 = vmatpush1.bf16.msra.mxu0 %v5535
        %5683 = vmatprep.subr.bf16.mxu0 0
        %5684 = vmatpush1.bf16.msra.mxu0 %v5536
        %5685 = vmatprep.subr.bf16.mxu0 0
        %5686 = vmatpush1.bf16.msra.mxu0 %v5537
        %5687 = vmatprep.subr.bf16.mxu0 0
        %5688 = vmatpush1.bf16.msra.mxu0 %v5538
        %5689 = vmatprep.subr.bf16.mxu0 0
        %5690 = vmatpush1.bf16.msra.mxu0 %v5539
        %5691 = vmatprep.subr.bf16.mxu0 0
        %5692 = vmatpush1.bf16.msra.mxu0 %v5540
        %5693 = vmatprep.subr.bf16.mxu0 0
        %5694 = vmatpush1.bf16.msra.mxu0 %v5541
        %5695 = vmatprep.subr.bf16.mxu0 0
        %5696 = vmatpush1.bf16.msra.mxu0 %v5542
        %5697 = vmatprep.subr.bf16.mxu0 0
        %5698 = vmatpush1.bf16.msra.mxu0 %v5543
        %5699 = vmatprep.subr.bf16.mxu0 0
        %5700 = vmatpush1.bf16.msra.mxu0 %v5544
        %5701 = vmatprep.subr.bf16.mxu0 0
        %5702 = vmatpush1.bf16.msra.mxu0 %v5545
        %5703 = vmatprep.subr.bf16.mxu0 0
        %5704 = vmatpush1.bf16.msra.mxu0 %v5546
        %5705 = vmatprep.subr.bf16.mxu0 0
        %5706 = vmatpush1.bf16.msra.mxu0 %v5547
        %5707 = vmatprep.subr.bf16.mxu0 0
        %5708 = vmatpush1.bf16.msra.mxu0 %v5548
        %5709 = vmatprep.mubr.bf16.mxu0 %v4951
        %5710 = vmatmul.mubr.bf16.gmra.mrb[0].mxu0 %v4950
        %v5711 = vpop.f32.mrb[0].mxu0
        %v5712 = vadd.f32 %v5243, %v5711
        %v5713 = vpop.f32.mrb[0].mxu0
        %v5714 = vpop.f32.mrb[0].mxu0
        %v5715 = vadd.f32 %v5243, %v5714
        %v5716 = vpop.f32.mrb[0].mxu0
        %5717 = vmatprep.mubr.bf16.mxu0 %v4960
        %5718 = vmatmul.mubr.bf16.gmra.mrb[0].mxu0 %v4959
        %v5719 = vpop.f32.mrb[0].mxu0
        %v5720 = vadd.f32 %v5243, %v5719
        %v5721 = vpop.f32.mrb[0].mxu0
        %v5722 = vpop.f32.mrb[0].mxu0
        %v5723 = vadd.f32 %v5243, %v5722
        %v5724 = vpop.f32.mrb[0].mxu0
        %5725 = vmatprep.mubr.bf16.mxu0 %v4969
        %5726 = vmatmul.mubr.bf16.gmra.mrb[0].mxu0 %v4968
        %v5727 = vpop.f32.mrb[0].mxu0
        %v5728 = vadd.f32 %v5243, %v5727
        %v5729 = vpop.f32.mrb[0].mxu0
        %v5730 = vpop.f32.mrb[0].mxu0
        %v5731 = vadd.f32 %v5243, %v5730
        %v5732 = vpop.f32.mrb[0].mxu0
        %5733 = vmatprep.mubr.bf16.mxu0 %v4978
        %5734 = vmatmul.mubr.bf16.gmra.mrb[0].mxu0 %v4977
        %v5735 = vpop.f32.mrb[0].mxu0
        %v5736 = vadd.f32 %v5243, %v5735
        %v5737 = vpop.f32.mrb[0].mxu0
        %v5738 = vpop.f32.mrb[0].mxu0
        %v5739 = vadd.f32 %v5243, %v5738
        %v5740 = vpop.f32.mrb[0].mxu0
        %5741 = vmatprep.mubr.bf16.mxu0 %v4987
        %5742 = vmatmul.mubr.bf16.gmra.mrb[0].mxu0 %v4986
        %v5743 = vpop.f32.mrb[0].mxu0
        %v5744 = vadd.f32 %v5243, %v5743
        %v5745 = vpop.f32.mrb[0].mxu0
        %v5746 = vpop.f32.mrb[0].mxu0
        %v5747 = vadd.f32 %v5243, %v5746
        %v5748 = vpop.f32.mrb[0].mxu0
        %5749 = vmatprep.mubr.bf16.mxu0 %v4996
        %5750 = vmatmul.mubr.bf16.gmra.mrb[0].mxu0 %v4995
        %v5751 = vpop.f32.mrb[0].mxu0
        %v5752 = vadd.f32 %v5243, %v5751
        %v5753 = vpop.f32.mrb[0].mxu0
        %v5754 = vpop.f32.mrb[0].mxu0
        %v5755 = vadd.f32 %v5243, %v5754
        %v5756 = vpop.f32.mrb[0].mxu0
        %5757 = vmatprep.mubr.bf16.mxu0 %v5005
        %5758 = vmatmul.mubr.bf16.gmra.mrb[0].mxu0 %v5004
        %v5759 = vpop.f32.mrb[0].mxu0
        %v5760 = vadd.f32 %v5243, %v5759
        %v5761 = vpop.f32.mrb[0].mxu0
        %v5762 = vpop.f32.mrb[0].mxu0
        %v5763 = vadd.f32 %v5243, %v5762
        %v5764 = vpop.f32.mrb[0].mxu0
        %5765 = vmatprep.mubr.bf16.mxu0 %v5014
        %5766 = vmatmul.mubr.bf16.gmra.mrb[0].mxu0 %v5013
        %v5767 = vpop.f32.mrb[0].mxu0
        %v5768 = vadd.f32 %v5243, %v5767
        %v5769 = vpop.f32.mrb[0].mxu0
        %v5770 = vpop.f32.mrb[0].mxu0
        %v5771 = vadd.f32 %v5243, %v5770
        %v5772 = vpop.f32.mrb[0].mxu0
        %5773 = vmatprep.mubr.bf16.mxu0 %v5023
        %5774 = vmatmul.mubr.bf16.gmra.mrb[0].mxu0 %v5022
        %v5775 = vpop.f32.mrb[0].mxu0
        %v5776 = vadd.f32 %v5243, %v5775
        %v5777 = vpop.f32.mrb[0].mxu0
        %v5778 = vpop.f32.mrb[0].mxu0
        %v5779 = vadd.f32 %v5243, %v5778
        %v5780 = vpop.f32.mrb[0].mxu0
        %5781 = vmatprep.mubr.bf16.mxu0 %v5032
        %5782 = vmatmul.mubr.bf16.gmra.mrb[0].mxu0 %v5031
        %v5783 = vpop.f32.mrb[0].mxu0
        %v5784 = vadd.f32 %v5243, %v5783
        %v5785 = vpop.f32.mrb[0].mxu0
        %v5786 = vpop.f32.mrb[0].mxu0
        %v5787 = vadd.f32 %v5243, %v5786
        %v5788 = vpop.f32.mrb[0].mxu0
        %5789 = vmatprep.mubr.bf16.mxu0 %v5041
        %5790 = vmatmul.mubr.bf16.gmra.mrb[0].mxu0 %v5040
        %v5791 = vpop.f32.mrb[0].mxu0
        %v5792 = vadd.f32 %v5243, %v5791
        %v5793 = vpop.f32.mrb[0].mxu0
        %v5794 = vpop.f32.mrb[0].mxu0
        %v5795 = vadd.f32 %v5243, %v5794
        %v5796 = vpop.f32.mrb[0].mxu0
        %5797 = vmatprep.mubr.bf16.mxu0 %v5050
        %5798 = vmatmul.mubr.bf16.gmra.mrb[0].mxu0 %v5049
        %v5799 = vpop.f32.mrb[0].mxu0
        %v5800 = vadd.f32 %v5243, %v5799
        %v5801 = vpop.f32.mrb[0].mxu0
        %v5802 = vpop.f32.mrb[0].mxu0
        %v5803 = vadd.f32 %v5243, %v5802
        %v5804 = vpop.f32.mrb[0].mxu0
        %5805 = vmatprep.mubr.bf16.mxu0 %v5059
        %5806 = vmatmul.mubr.bf16.gmra.mrb[0].mxu0 %v5058
        %v5807 = vpop.f32.mrb[0].mxu0
        %v5808 = vadd.f32 %v5243, %v5807
        %v5809 = vpop.f32.mrb[0].mxu0
        %v5810 = vpop.f32.mrb[0].mxu0
        %v5811 = vadd.f32 %v5243, %v5810
        %v5812 = vpop.f32.mrb[0].mxu0
        %5813 = vmatprep.mubr.bf16.mxu0 %v5068
        %5814 = vmatmul.mubr.bf16.gmra.mrb[0].mxu0 %v5067
        %v5815 = vpop.f32.mrb[0].mxu0
        %v5816 = vadd.f32 %v5243, %v5815
        %v5817 = vpop.f32.mrb[0].mxu0
        %v5818 = vpop.f32.mrb[0].mxu0
        %v5819 = vadd.f32 %v5243, %v5818
        %v5820 = vpop.f32.mrb[0].mxu0
        %5821 = vmatprep.mubr.bf16.mxu0 %v5077
        %5822 = vmatmul.mubr.bf16.gmra.mrb[0].mxu0 %v5076
        %v5823 = vpop.f32.mrb[0].mxu0
        %v5824 = vadd.f32 %v5243, %v5823
        %v5825 = vpop.f32.mrb[0].mxu0
        %v5826 = vpop.f32.mrb[0].mxu0
        %v5827 = vadd.f32 %v5243, %v5826
        %v5828 = vpop.f32.mrb[0].mxu0
        %5829 = vmatprep.mubr.bf16.mxu0 %v5086
        %5830 = vmatmul.mubr.bf16.gmra.mrb[0].mxu0 %v5085
        %v5831 = vpop.f32.mrb[0].mxu0
        %v5832 = vadd.f32 %v5243, %v5831
        %v5833 = vpop.f32.mrb[0].mxu0
        %v5834 = vpop.f32.mrb[0].mxu0
        %v5835 = vadd.f32 %v5243, %v5834
        %v5836 = vpop.f32.mrb[0].mxu0
        %5837 = vdwg.mxu0
        %5838 = vmatprep.subr.bf16.mxu0 0
        %5839 = vmatpush1.bf16.msra.mxu0 %v5549
        %5840 = vmatprep.subr.bf16.mxu0 0
        %5841 = vmatpush1.bf16.msra.mxu0 %v5550
        %5842 = vmatprep.subr.bf16.mxu0 0
        %5843 = vmatpush1.bf16.msra.mxu0 %v5551
        %5844 = vmatprep.subr.bf16.mxu0 0
        %5845 = vmatpush1.bf16.msra.mxu0 %v5552
        %5846 = vmatprep.subr.bf16.mxu0 0
        %5847 = vmatpush1.bf16.msra.mxu0 %v5553
        %5848 = vmatprep.subr.bf16.mxu0 0
        %5849 = vmatpush1.bf16.msra.mxu0 %v5554
        %5850 = vmatprep.subr.bf16.mxu0 0
        %5851 = vmatpush1.bf16.msra.mxu0 %v5555
        %5852 = vmatprep.subr.bf16.mxu0 0
        %5853 = vmatpush1.bf16.msra.mxu0 %v5556
        %5854 = vmatprep.subr.bf16.mxu0 0
        %5855 = vmatpush1.bf16.msra.mxu0 %v5557
        %5856 = vmatprep.subr.bf16.mxu0 0
        %5857 = vmatpush1.bf16.msra.mxu0 %v5558
        %5858 = vmatprep.subr.bf16.mxu0 0
        %5859 = vmatpush1.bf16.msra.mxu0 %v5559
        %5860 = vmatprep.subr.bf16.mxu0 0
        %5861 = vmatpush1.bf16.msra.mxu0 %v5560
        %5862 = vmatprep.subr.bf16.mxu0 0
        %5863 = vmatpush1.bf16.msra.mxu0 %v5561
        %5864 = vmatprep.subr.bf16.mxu0 0
        %5865 = vmatpush1.bf16.msra.mxu0 %v5562
        %5866 = vmatprep.subr.bf16.mxu0 0
        %5867 = vmatpush1.bf16.msra.mxu0 %v5563
        %5868 = vmatprep.subr.bf16.mxu0 0
        %5869 = vmatpush1.bf16.msra.mxu0 %v5564
        %5870 = vmatprep.mubr.bf16.mxu0 %v4953
        %5871 = vmatmul.mubr.bf16.gmra.mrb[0].mxu0 %v4952
        %v5872 = vpop.f32.mrb[0].mxu0
        %v5873 = vadd.f32 %v5712, %v5872
        %v5874 = vpop.f32.mrb[0].mxu0
        %v5875 = vpop.f32.mrb[0].mxu0
        %v5876 = vadd.f32 %v5715, %v5875
        %v5877 = vpop.f32.mrb[0].mxu0
        %5878 = vmatprep.mubr.bf16.mxu0 %v4962
        %5879 = vmatmul.mubr.bf16.gmra.mrb[0].mxu0 %v4961
        %v5880 = vpop.f32.mrb[0].mxu0
        %v5881 = vadd.f32 %v5720, %v5880
        %v5882 = vpop.f32.mrb[0].mxu0
        %v5883 = vpop.f32.mrb[0].mxu0
        %v5884 = vadd.f32 %v5723, %v5883
        %v5885 = vpop.f32.mrb[0].mxu0
        %5886 = vmatprep.mubr.bf16.mxu0 %v4971
        %5887 = vmatmul.mubr.bf16.gmra.mrb[0].mxu0 %v4970
        %v5888 = vpop.f32.mrb[0].mxu0
        %v5889 = vadd.f32 %v5728, %v5888
        %v5890 = vpop.f32.mrb[0].mxu0
        %v5891 = vpop.f32.mrb[0].mxu0
        %v5892 = vadd.f32 %v5731, %v5891
        %v5893 = vpop.f32.mrb[0].mxu0
        %5894 = vmatprep.mubr.bf16.mxu0 %v4980
        %5895 = vmatmul.mubr.bf16.gmra.mrb[0].mxu0 %v4979
        %v5896 = vpop.f32.mrb[0].mxu0
        %v5897 = vadd.f32 %v5736, %v5896
        %v5898 = vpop.f32.mrb[0].mxu0
        %v5899 = vpop.f32.mrb[0].mxu0
        %v5900 = vadd.f32 %v5739, %v5899
        %v5901 = vpop.f32.mrb[0].mxu0
        %5902 = vmatprep.mubr.bf16.mxu0 %v4989
        %5903 = vmatmul.mubr.bf16.gmra.mrb[0].mxu0 %v4988
        %v5904 = vpop.f32.mrb[0].mxu0
        %v5905 = vadd.f32 %v5744, %v5904
        %v5906 = vpop.f32.mrb[0].mxu0
        %v5907 = vpop.f32.mrb[0].mxu0
        %v5908 = vadd.f32 %v5747, %v5907
        %v5909 = vpop.f32.mrb[0].mxu0
        %5910 = vmatprep.mubr.bf16.mxu0 %v4998
        %5911 = vmatmul.mubr.bf16.gmra.mrb[0].mxu0 %v4997
        %v5912 = vpop.f32.mrb[0].mxu0
        %v5913 = vadd.f32 %v5752, %v5912
        %v5914 = vpop.f32.mrb[0].mxu0
        %v5915 = vpop.f32.mrb[0].mxu0
        %v5916 = vadd.f32 %v5755, %v5915
        %v5917 = vpop.f32.mrb[0].mxu0
        %5918 = vmatprep.mubr.bf16.mxu0 %v5007
        %5919 = vmatmul.mubr.bf16.gmra.mrb[0].mxu0 %v5006
        %v5920 = vpop.f32.mrb[0].mxu0
        %v5921 = vadd.f32 %v5760, %v5920
        %v5922 = vpop.f32.mrb[0].mxu0
        %v5923 = vpop.f32.mrb[0].mxu0
        %v5924 = vadd.f32 %v5763, %v5923
        %v5925 = vpop.f32.mrb[0].mxu0
        %5926 = vmatprep.mubr.bf16.mxu0 %v5016
        %5927 = vmatmul.mubr.bf16.gmra.mrb[0].mxu0 %v5015
        %v5928 = vpop.f32.mrb[0].mxu0
        %v5929 = vadd.f32 %v5768, %v5928
        %v5930 = vpop.f32.mrb[0].mxu0
        %v5931 = vpop.f32.mrb[0].mxu0
        %v5932 = vadd.f32 %v5771, %v5931
        %v5933 = vpop.f32.mrb[0].mxu0
        %5934 = vmatprep.mubr.bf16.mxu0 %v5025
        %5935 = vmatmul.mubr.bf16.gmra.mrb[0].mxu0 %v5024
        %v5936 = vpop.f32.mrb[0].mxu0
        %v5937 = vadd.f32 %v5776, %v5936
        %v5938 = vpop.f32.mrb[0].mxu0
        %v5939 = vpop.f32.mrb[0].mxu0
        %v5940 = vadd.f32 %v5779, %v5939
        %v5941 = vpop.f32.mrb[0].mxu0
        %5942 = vmatprep.mubr.bf16.mxu0 %v5034
        %5943 = vmatmul.mubr.bf16.gmra.mrb[0].mxu0 %v5033
        %v5944 = vpop.f32.mrb[0].mxu0
        %v5945 = vadd.f32 %v5784, %v5944
        %v5946 = vpop.f32.mrb[0].mxu0
        %v5947 = vpop.f32.mrb[0].mxu0
        %v5948 = vadd.f32 %v5787, %v5947
        %v5949 = vpop.f32.mrb[0].mxu0
        %5950 = vmatprep.mubr.bf16.mxu0 %v5043
        %5951 = vmatmul.mubr.bf16.gmra.mrb[0].mxu0 %v5042
        %v5952 = vpop.f32.mrb[0].mxu0
        %v5953 = vadd.f32 %v5792, %v5952
        %v5954 = vpop.f32.mrb[0].mxu0
        %v5955 = vpop.f32.mrb[0].mxu0
        %v5956 = vadd.f32 %v5795, %v5955
        %v5957 = vpop.f32.mrb[0].mxu0
        %5958 = vmatprep.mubr.bf16.mxu0 %v5052
        %5959 = vmatmul.mubr.bf16.gmra.mrb[0].mxu0 %v5051
        %v5960 = vpop.f32.mrb[0].mxu0
        %v5961 = vadd.f32 %v5800, %v5960
        %v5962 = vpop.f32.mrb[0].mxu0
        %v5963 = vpop.f32.mrb[0].mxu0
        %v5964 = vadd.f32 %v5803, %v5963
        %v5965 = vpop.f32.mrb[0].mxu0
        %5966 = vmatprep.mubr.bf16.mxu0 %v5061
        %5967 = vmatmul.mubr.bf16.gmra.mrb[0].mxu0 %v5060
        %v5968 = vpop.f32.mrb[0].mxu0
        %v5969 = vadd.f32 %v5808, %v5968
        %v5970 = vpop.f32.mrb[0].mxu0
        %v5971 = vpop.f32.mrb[0].mxu0
        %v5972 = vadd.f32 %v5811, %v5971
        %v5973 = vpop.f32.mrb[0].mxu0
        %5974 = vmatprep.mubr.bf16.mxu0 %v5070
        %5975 = vmatmul.mubr.bf16.gmra.mrb[0].mxu0 %v5069
        %v5976 = vpop.f32.mrb[0].mxu0
        %v5977 = vadd.f32 %v5816, %v5976
        %v5978 = vpop.f32.mrb[0].mxu0
        %v5979 = vpop.f32.mrb[0].mxu0
        %v5980 = vadd.f32 %v5819, %v5979
        %v5981 = vpop.f32.mrb[0].mxu0
        %5982 = vmatprep.mubr.bf16.mxu0 %v5079
        %5983 = vmatmul.mubr.bf16.gmra.mrb[0].mxu0 %v5078
        %v5984 = vpop.f32.mrb[0].mxu0
        %v5985 = vadd.f32 %v5824, %v5984
        %v5986 = vpop.f32.mrb[0].mxu0
        %v5987 = vpop.f32.mrb[0].mxu0
        %v5988 = vadd.f32 %v5827, %v5987
        %v5989 = vpop.f32.mrb[0].mxu0
        %5990 = vmatprep.mubr.bf16.mxu0 %v5088
        %5991 = vmatmul.mubr.bf16.gmra.mrb[0].mxu0 %v5087
        %v5992 = vpop.f32.mrb[0].mxu0
        %v5993 = vadd.f32 %v5832, %v5992
        %v5994 = vpop.f32.mrb[0].mxu0
        %v5995 = vpop.f32.mrb[0].mxu0
        %v5996 = vadd.f32 %v5835, %v5995
        %v5997 = vpop.f32.mrb[0].mxu0
        %5998 = vdwg.mxu0
        %5999 = vmatprep.subr.bf16.mxu0 0
        %6000 = vmatpush1.bf16.msra.mxu0 %v5565
        %6001 = vmatprep.subr.bf16.mxu0 0
        %6002 = vmatpush1.bf16.msra.mxu0 %v5566
        %6003 = vmatprep.subr.bf16.mxu0 0
        %6004 = vmatpush1.bf16.msra.mxu0 %v5567
        %6005 = vmatprep.subr.bf16.mxu0 0
        %6006 = vmatpush1.bf16.msra.mxu0 %v5568
        %6007 = vmatprep.subr.bf16.mxu0 0
        %6008 = vmatpush1.bf16.msra.mxu0 %v5569
        %6009 = vmatprep.subr.bf16.mxu0 0
        %6010 = vmatpush1.bf16.msra.mxu0 %v5570
        %6011 = vmatprep.subr.bf16.mxu0 0
        %6012 = vmatpush1.bf16.msra.mxu0 %v5571
        %6013 = vmatprep.subr.bf16.mxu0 0
        %6014 = vmatpush1.bf16.msra.mxu0 %v5572
        %6015 = vmatprep.subr.bf16.mxu0 0
        %6016 = vmatpush1.bf16.msra.mxu0 %v5573
        %6017 = vmatprep.subr.bf16.mxu0 0
        %6018 = vmatpush1.bf16.msra.mxu0 %v5574
        %6019 = vmatprep.subr.bf16.mxu0 0
        %6020 = vmatpush1.bf16.msra.mxu0 %v5575
        %6021 = vmatprep.subr.bf16.mxu0 0
        %6022 = vmatpush1.bf16.msra.mxu0 %v5576
        %6023 = vmatprep.subr.bf16.mxu0 0
        %6024 = vmatpush1.bf16.msra.mxu0 %v5577
        %6025 = vmatprep.subr.bf16.mxu0 0
        %6026 = vmatpush1.bf16.msra.mxu0 %v5578
        %6027 = vmatprep.subr.bf16.mxu0 0
        %6028 = vmatpush1.bf16.msra.mxu0 %v5579
        %6029 = vmatprep.subr.bf16.mxu0 0
        %6030 = vmatpush1.bf16.msra.mxu0 %v5580
        %6031 = vmatprep.mubr.bf16.mxu0 %v4955
        %6032 = vmatmul.mubr.bf16.gmra.mrb[0].mxu0 %v4954
        %v6033 = vpop.f32.mrb[0].mxu0
        %v6034 = vadd.f32 %v5873, %v6033
        %v6035 = vpop.f32.mrb[0].mxu0
        %v6036 = vpop.f32.mrb[0].mxu0
        %v6037 = vadd.f32 %v5876, %v6036
        %v6038 = vpop.f32.mrb[0].mxu0
        %6039 = vmatprep.mubr.bf16.mxu0 %v4964
        %6040 = vmatmul.mubr.bf16.gmra.mrb[0].mxu0 %v4963
        %v6041 = vpop.f32.mrb[0].mxu0
        %v6042 = vadd.f32 %v5881, %v6041
        %v6043 = vpop.f32.mrb[0].mxu0
        %v6044 = vpop.f32.mrb[0].mxu0
        %v6045 = vadd.f32 %v5884, %v6044
        %v6046 = vpop.f32.mrb[0].mxu0
        %6047 = vmatprep.mubr.bf16.mxu0 %v4973
        %6048 = vmatmul.mubr.bf16.gmra.mrb[0].mxu0 %v4972
        %v6049 = vpop.f32.mrb[0].mxu0
        %v6050 = vadd.f32 %v5889, %v6049
        %v6051 = vpop.f32.mrb[0].mxu0
        %v6052 = vpop.f32.mrb[0].mxu0
        %v6053 = vadd.f32 %v5892, %v6052
        %v6054 = vpop.f32.mrb[0].mxu0
        %6055 = vmatprep.mubr.bf16.mxu0 %v4982
        %6056 = vmatmul.mubr.bf16.gmra.mrb[0].mxu0 %v4981
        %v6057 = vpop.f32.mrb[0].mxu0
        %v6058 = vadd.f32 %v5897, %v6057
        %v6059 = vpop.f32.mrb[0].mxu0
        %v6060 = vpop.f32.mrb[0].mxu0
        %v6061 = vadd.f32 %v5900, %v6060
        %v6062 = vpop.f32.mrb[0].mxu0
        %6063 = vmatprep.mubr.bf16.mxu0 %v4991
        %6064 = vmatmul.mubr.bf16.gmra.mrb[0].mxu0 %v4990
        %v6065 = vpop.f32.mrb[0].mxu0
        %v6066 = vadd.f32 %v5905, %v6065
        %v6067 = vpop.f32.mrb[0].mxu0
        %v6068 = vpop.f32.mrb[0].mxu0
        %v6069 = vadd.f32 %v5908, %v6068
        %v6070 = vpop.f32.mrb[0].mxu0
        %6071 = vmatprep.mubr.bf16.mxu0 %v5000
        %6072 = vmatmul.mubr.bf16.gmra.mrb[0].mxu0 %v4999
        %v6073 = vpop.f32.mrb[0].mxu0
        %v6074 = vadd.f32 %v5913, %v6073
        %v6075 = vpop.f32.mrb[0].mxu0
        %v6076 = vpop.f32.mrb[0].mxu0
        %v6077 = vadd.f32 %v5916, %v6076
        %v6078 = vpop.f32.mrb[0].mxu0
        %6079 = vmatprep.mubr.bf16.mxu0 %v5009
        %6080 = vmatmul.mubr.bf16.gmra.mrb[0].mxu0 %v5008
        %v6081 = vpop.f32.mrb[0].mxu0
        %v6082 = vadd.f32 %v5921, %v6081
        %v6083 = vpop.f32.mrb[0].mxu0
        %v6084 = vpop.f32.mrb[0].mxu0
        %v6085 = vadd.f32 %v5924, %v6084
        %v6086 = vpop.f32.mrb[0].mxu0
        %6087 = vmatprep.mubr.bf16.mxu0 %v5018
        %6088 = vmatmul.mubr.bf16.gmra.mrb[0].mxu0 %v5017
        %v6089 = vpop.f32.mrb[0].mxu0
        %v6090 = vadd.f32 %v5929, %v6089
        %v6091 = vpop.f32.mrb[0].mxu0
        %v6092 = vpop.f32.mrb[0].mxu0
        %v6093 = vadd.f32 %v5932, %v6092
        %v6094 = vpop.f32.mrb[0].mxu0
        %6095 = vmatprep.mubr.bf16.mxu0 %v5027
        %6096 = vmatmul.mubr.bf16.gmra.mrb[0].mxu0 %v5026
        %v6097 = vpop.f32.mrb[0].mxu0
        %v6098 = vadd.f32 %v5937, %v6097
        %v6099 = vpop.f32.mrb[0].mxu0
        %v6100 = vpop.f32.mrb[0].mxu0
        %v6101 = vadd.f32 %v5940, %v6100
        %v6102 = vpop.f32.mrb[0].mxu0
        %6103 = vmatprep.mubr.bf16.mxu0 %v5036
        %6104 = vmatmul.mubr.bf16.gmra.mrb[0].mxu0 %v5035
        %v6105 = vpop.f32.mrb[0].mxu0
        %v6106 = vadd.f32 %v5945, %v6105
        %v6107 = vpop.f32.mrb[0].mxu0
        %v6108 = vpop.f32.mrb[0].mxu0
        %v6109 = vadd.f32 %v5948, %v6108
        %v6110 = vpop.f32.mrb[0].mxu0
        %6111 = vmatprep.mubr.bf16.mxu0 %v5045
        %6112 = vmatmul.mubr.bf16.gmra.mrb[0].mxu0 %v5044
        %v6113 = vpop.f32.mrb[0].mxu0
        %v6114 = vadd.f32 %v5953, %v6113
        %v6115 = vpop.f32.mrb[0].mxu0
        %v6116 = vpop.f32.mrb[0].mxu0
        %v6117 = vadd.f32 %v5956, %v6116
        %v6118 = vpop.f32.mrb[0].mxu0
        %6119 = vmatprep.mubr.bf16.mxu0 %v5054
        %6120 = vmatmul.mubr.bf16.gmra.mrb[0].mxu0 %v5053
        %v6121 = vpop.f32.mrb[0].mxu0
        %v6122 = vadd.f32 %v5961, %v6121
        %v6123 = vpop.f32.mrb[0].mxu0
        %v6124 = vpop.f32.mrb[0].mxu0
        %v6125 = vadd.f32 %v5964, %v6124
        %v6126 = vpop.f32.mrb[0].mxu0
        %6127 = vmatprep.mubr.bf16.mxu0 %v5063
        %6128 = vmatmul.mubr.bf16.gmra.mrb[0].mxu0 %v5062
        %v6129 = vpop.f32.mrb[0].mxu0
        %v6130 = vadd.f32 %v5969, %v6129
        %v6131 = vpop.f32.mrb[0].mxu0
        %v6132 = vpop.f32.mrb[0].mxu0
        %v6133 = vadd.f32 %v5972, %v6132
        %v6134 = vpop.f32.mrb[0].mxu0
        %6135 = vmatprep.mubr.bf16.mxu0 %v5072
        %6136 = vmatmul.mubr.bf16.gmra.mrb[0].mxu0 %v5071
        %v6137 = vpop.f32.mrb[0].mxu0
        %v6138 = vadd.f32 %v5977, %v6137
        %v6139 = vpop.f32.mrb[0].mxu0
        %v6140 = vpop.f32.mrb[0].mxu0
        %v6141 = vadd.f32 %v5980, %v6140
        %v6142 = vpop.f32.mrb[0].mxu0
        %6143 = vmatprep.mubr.bf16.mxu0 %v5081
        %6144 = vmatmul.mubr.bf16.gmra.mrb[0].mxu0 %v5080
        %v6145 = vpop.f32.mrb[0].mxu0
        %v6146 = vadd.f32 %v5985, %v6145
        %v6147 = vpop.f32.mrb[0].mxu0
        %v6148 = vpop.f32.mrb[0].mxu0
        %v6149 = vadd.f32 %v5988, %v6148
        %v6150 = vpop.f32.mrb[0].mxu0
        %6151 = vmatprep.mubr.bf16.mxu0 %v5090
        %6152 = vmatmul.mubr.bf16.gmra.mrb[0].mxu0 %v5089
        %v6153 = vpop.f32.mrb[0].mxu0
        %v6154 = vadd.f32 %v5993, %v6153
        %v6155 = vpop.f32.mrb[0].mxu0
        %v6156 = vpop.f32.mrb[0].mxu0
        %v6157 = vadd.f32 %v5996, %v6156
        %v6158 = vpop.f32.mrb[0].mxu0
        %6159 = vdwg.mxu0
        %6160 = vmatprep.subr.bf16.mxu0 0
        %6161 = vmatpush1.bf16.msra.mxu0 %v5581
        %6162 = vmatprep.subr.bf16.mxu0 0
        %6163 = vmatpush1.bf16.msra.mxu0 %v5582
        %6164 = vmatprep.subr.bf16.mxu0 0
        %6165 = vmatpush1.bf16.msra.mxu0 %v5583
        %6166 = vmatprep.subr.bf16.mxu0 0
        %6167 = vmatpush1.bf16.msra.mxu0 %v5584
        %6168 = vmatprep.subr.bf16.mxu0 0
        %6169 = vmatpush1.bf16.msra.mxu0 %v5585
        %6170 = vmatprep.subr.bf16.mxu0 0
        %6171 = vmatpush1.bf16.msra.mxu0 %v5586
        %6172 = vmatprep.subr.bf16.mxu0 0
        %6173 = vmatpush1.bf16.msra.mxu0 %v5587
        %6174 = vmatprep.subr.bf16.mxu0 0
        %6175 = vmatpush1.bf16.msra.mxu0 %v5588
        %6176 = vmatprep.subr.bf16.mxu0 0
        %6177 = vmatpush1.bf16.msra.mxu0 %v5589
        %6178 = vmatprep.subr.bf16.mxu0 0
        %6179 = vmatpush1.bf16.msra.mxu0 %v5590
        %6180 = vmatprep.subr.bf16.mxu0 0
        %6181 = vmatpush1.bf16.msra.mxu0 %v5591
        %6182 = vmatprep.subr.bf16.mxu0 0
        %6183 = vmatpush1.bf16.msra.mxu0 %v5592
        %6184 = vmatprep.subr.bf16.mxu0 0
        %6185 = vmatpush1.bf16.msra.mxu0 %v5593
        %6186 = vmatprep.subr.bf16.mxu0 0
        %6187 = vmatpush1.bf16.msra.mxu0 %v5594
        %6188 = vmatprep.subr.bf16.mxu0 0
        %6189 = vmatpush1.bf16.msra.mxu0 %v5595
        %6190 = vmatprep.subr.bf16.mxu0 0
        %6191 = vmatpush1.bf16.msra.mxu0 %v5596
        %6192 = vmatprep.mubr.bf16.mxu0 %v4957
        %6193 = vmatmul.mubr.bf16.gmra.mrb[0].mxu0 %v4956
        %v6194 = vpop.f32.mrb[0].mxu0
        %v6195 = vadd.f32 %v6034, %v6194
        %v6196 = vpop.f32.mrb[0].mxu0
        %v6197 = vpop.f32.mrb[0].mxu0
        %v6198 = vadd.f32 %v6037, %v6197
        %v6199 = vpop.f32.mrb[0].mxu0
        %6200 = vmatprep.mubr.bf16.mxu0 %v4966
        %6201 = vmatmul.mubr.bf16.gmra.mrb[0].mxu0 %v4965
        %v6202 = vpop.f32.mrb[0].mxu0
        %v6203 = vadd.f32 %v6042, %v6202
        %v6204 = vpop.f32.mrb[0].mxu0
        %v6205 = vpop.f32.mrb[0].mxu0
        %v6206 = vadd.f32 %v6045, %v6205
        %v6207 = vpop.f32.mrb[0].mxu0
        %6208 = vmatprep.mubr.bf16.mxu0 %v4975
        %6209 = vmatmul.mubr.bf16.gmra.mrb[0].mxu0 %v4974
        %v6210 = vpop.f32.mrb[0].mxu0
        %v6211 = vadd.f32 %v6050, %v6210
        %v6212 = vpop.f32.mrb[0].mxu0
        %v6213 = vpop.f32.mrb[0].mxu0
        %v6214 = vadd.f32 %v6053, %v6213
        %v6215 = vpop.f32.mrb[0].mxu0
        %6216 = vmatprep.mubr.bf16.mxu0 %v4984
        %6217 = vmatmul.mubr.bf16.gmra.mrb[0].mxu0 %v4983
        %v6218 = vpop.f32.mrb[0].mxu0
        %v6219 = vadd.f32 %v6058, %v6218
        %v6220 = vpop.f32.mrb[0].mxu0
        %v6221 = vpop.f32.mrb[0].mxu0
        %v6222 = vadd.f32 %v6061, %v6221
        %v6223 = vpop.f32.mrb[0].mxu0
        %6224 = vmatprep.mubr.bf16.mxu0 %v4993
        %6225 = vmatmul.mubr.bf16.gmra.mrb[0].mxu0 %v4992
        %v6226 = vpop.f32.mrb[0].mxu0
        %v6227 = vadd.f32 %v6066, %v6226
        %v6228 = vpop.f32.mrb[0].mxu0
        %v6229 = vpop.f32.mrb[0].mxu0
        %v6230 = vadd.f32 %v6069, %v6229
        %v6231 = vpop.f32.mrb[0].mxu0
        %6232 = vmatprep.mubr.bf16.mxu0 %v5002
        %6233 = vmatmul.mubr.bf16.gmra.mrb[0].mxu0 %v5001
        %v6234 = vpop.f32.mrb[0].mxu0
        %v6235 = vadd.f32 %v6074, %v6234
        %v6236 = vpop.f32.mrb[0].mxu0
        %v6237 = vpop.f32.mrb[0].mxu0
        %v6238 = vadd.f32 %v6077, %v6237
        %v6239 = vpop.f32.mrb[0].mxu0
        %6240 = vmatprep.mubr.bf16.mxu0 %v5011
        %6241 = vmatmul.mubr.bf16.gmra.mrb[0].mxu0 %v5010
        %v6242 = vpop.f32.mrb[0].mxu0
        %v6243 = vadd.f32 %v6082, %v6242
        %v6244 = vpop.f32.mrb[0].mxu0
        %v6245 = vpop.f32.mrb[0].mxu0
        %v6246 = vadd.f32 %v6085, %v6245
        %v6247 = vpop.f32.mrb[0].mxu0
        %6248 = vmatprep.mubr.bf16.mxu0 %v5020
        %6249 = vmatmul.mubr.bf16.gmra.mrb[0].mxu0 %v5019
        %v6250 = vpop.f32.mrb[0].mxu0
        %v6251 = vadd.f32 %v6090, %v6250
        %v6252 = vpop.f32.mrb[0].mxu0
        %v6253 = vpop.f32.mrb[0].mxu0
        %v6254 = vadd.f32 %v6093, %v6253
        %v6255 = vpop.f32.mrb[0].mxu0
        %6256 = vmatprep.mubr.bf16.mxu0 %v5029
        %6257 = vmatmul.mubr.bf16.gmra.mrb[0].mxu0 %v5028
        %v6258 = vpop.f32.mrb[0].mxu0
        %v6259 = vadd.f32 %v6098, %v6258
        %v6260 = vpop.f32.mrb[0].mxu0
        %v6261 = vpop.f32.mrb[0].mxu0
        %v6262 = vadd.f32 %v6101, %v6261
        %v6263 = vpop.f32.mrb[0].mxu0
        %6264 = vmatprep.mubr.bf16.mxu0 %v5038
        %6265 = vmatmul.mubr.bf16.gmra.mrb[0].mxu0 %v5037
        %v6266 = vpop.f32.mrb[0].mxu0
        %v6267 = vadd.f32 %v6106, %v6266
        %v6268 = vpop.f32.mrb[0].mxu0
        %v6269 = vpop.f32.mrb[0].mxu0
        %v6270 = vadd.f32 %v6109, %v6269
        %v6271 = vpop.f32.mrb[0].mxu0
        %6272 = vmatprep.mubr.bf16.mxu0 %v5047
        %6273 = vmatmul.mubr.bf16.gmra.mrb[0].mxu0 %v5046
        %v6274 = vpop.f32.mrb[0].mxu0
        %v6275 = vadd.f32 %v6114, %v6274
        %v6276 = vpop.f32.mrb[0].mxu0
        %v6277 = vpop.f32.mrb[0].mxu0
        %v6278 = vadd.f32 %v6117, %v6277
        %v6279 = vpop.f32.mrb[0].mxu0
        %6280 = vmatprep.mubr.bf16.mxu0 %v5056
        %6281 = vmatmul.mubr.bf16.gmra.mrb[0].mxu0 %v5055
        %v6282 = vpop.f32.mrb[0].mxu0
        %v6283 = vadd.f32 %v6122, %v6282
        %v6284 = vpop.f32.mrb[0].mxu0
        %v6285 = vpop.f32.mrb[0].mxu0
        %v6286 = vadd.f32 %v6125, %v6285
        %v6287 = vpop.f32.mrb[0].mxu0
        %6288 = vmatprep.mubr.bf16.mxu0 %v5065
        %6289 = vmatmul.mubr.bf16.gmra.mrb[0].mxu0 %v5064
        %v6290 = vpop.f32.mrb[0].mxu0
        %v6291 = vadd.f32 %v6130, %v6290
        %v6292 = vpop.f32.mrb[0].mxu0
        %v6293 = vpop.f32.mrb[0].mxu0
        %v6294 = vadd.f32 %v6133, %v6293
        %v6295 = vpop.f32.mrb[0].mxu0
        %6296 = vmatprep.mubr.bf16.mxu0 %v5074
        %6297 = vmatmul.mubr.bf16.gmra.mrb[0].mxu0 %v5073
        %v6298 = vpop.f32.mrb[0].mxu0
        %v6299 = vadd.f32 %v6138, %v6298
        %v6300 = vpop.f32.mrb[0].mxu0
        %v6301 = vpop.f32.mrb[0].mxu0
        %v6302 = vadd.f32 %v6141, %v6301
        %v6303 = vpop.f32.mrb[0].mxu0
        %6304 = vmatprep.mubr.bf16.mxu0 %v5083
        %6305 = vmatmul.mubr.bf16.gmra.mrb[0].mxu0 %v5082
        %v6306 = vpop.f32.mrb[0].mxu0
        %v6307 = vadd.f32 %v6146, %v6306
        %v6308 = vpop.f32.mrb[0].mxu0
        %v6309 = vpop.f32.mrb[0].mxu0
        %v6310 = vadd.f32 %v6149, %v6309
        %v6311 = vpop.f32.mrb[0].mxu0
        %6312 = vmatprep.mubr.bf16.mxu0 %v5092
        %6313 = vmatmul.mubr.bf16.gmra.mrb[0].mxu0 %v5091
        %v6314 = vpop.f32.mrb[0].mxu0
        %v6315 = vadd.f32 %v6154, %v6314
        %v6316 = vpop.f32.mrb[0].mxu0
        %v6317 = vpop.f32.mrb[0].mxu0
        %v6318 = vadd.f32 %v6157, %v6317
        %v6319 = vpop.f32.mrb[0].mxu0
        %6320 = vdwg.mxu0
        %6321 = vmatprep.subr.bf16.mxu0 0
        %6322 = vmatpush1.bf16.msra.mxu0 %v5597
        %6323 = vmatprep.subr.bf16.mxu0 0
        %6324 = vmatpush1.bf16.msra.mxu0 %v5598
        %6325 = vmatprep.subr.bf16.mxu0 0
        %6326 = vmatpush1.bf16.msra.mxu0 %v5599
        %6327 = vmatprep.subr.bf16.mxu0 0
        %6328 = vmatpush1.bf16.msra.mxu0 %v5600
        %6329 = vmatprep.subr.bf16.mxu0 0
        %6330 = vmatpush1.bf16.msra.mxu0 %v5601
        %6331 = vmatprep.subr.bf16.mxu0 0
        %6332 = vmatpush1.bf16.msra.mxu0 %v5602
        %6333 = vmatprep.subr.bf16.mxu0 0
        %6334 = vmatpush1.bf16.msra.mxu0 %v5603
        %6335 = vmatprep.subr.bf16.mxu0 0
        %6336 = vmatpush1.bf16.msra.mxu0 %v5604
        %6337 = vmatprep.subr.bf16.mxu0 0
        %6338 = vmatpush1.bf16.msra.mxu0 0
        %6339 = vmatprep.subr.bf16.mxu0 0
        %6340 = vmatpush1.bf16.msra.mxu0 0
        %6341 = vmatprep.subr.bf16.mxu0 0
        %6342 = vmatpush1.bf16.msra.mxu0 0
        %6343 = vmatprep.subr.bf16.mxu0 0
        %6344 = vmatpush1.bf16.msra.mxu0 0
        %6345 = vmatprep.subr.bf16.mxu0 0
        %6346 = vmatpush1.bf16.msra.mxu0 0
        %6347 = vmatprep.subr.bf16.mxu0 0
        %6348 = vmatpush1.bf16.msra.mxu0 0
        %6349 = vmatprep.subr.bf16.mxu0 0
        %6350 = vmatpush1.bf16.msra.mxu0 0
        %6351 = vmatprep.subr.bf16.mxu0 0
        %6352 = vmatpush1.bf16.msra.mxu0 0
        %6353 = vmatprep.mubr.bf16.mxu0 0
        %6354 = vmatmul.mubr.bf16.gmra.mrb[0].mxu0 %v4958
        %v6355 = vpop.f32.mrb[0].mxu0
        %v6356 = vadd.f32 %v6195, %v6355
        %v6357 = vpop.f32.mrb[0].mxu0
        %v6358 = vpop.f32.mrb[0].mxu0
        %v6359 = vadd.f32 %v6198, %v6358
        %v6360 = vpop.f32.mrb[0].mxu0
        %6361 = vmatprep.mubr.bf16.mxu0 0
        %6362 = vmatmul.mubr.bf16.gmra.mrb[0].mxu0 %v4967
        %v6363 = vpop.f32.mrb[0].mxu0
        %v6364 = vadd.f32 %v6203, %v6363
        %v6365 = vpop.f32.mrb[0].mxu0
        %v6366 = vpop.f32.mrb[0].mxu0
        %v6367 = vadd.f32 %v6206, %v6366
        %v6368 = vpop.f32.mrb[0].mxu0
        %6369 = vmatprep.mubr.bf16.mxu0 0
        %6370 = vmatmul.mubr.bf16.gmra.mrb[0].mxu0 %v4976
        %v6371 = vpop.f32.mrb[0].mxu0
        %v6372 = vadd.f32 %v6211, %v6371
        %v6373 = vpop.f32.mrb[0].mxu0
        %v6374 = vpop.f32.mrb[0].mxu0
        %v6375 = vadd.f32 %v6214, %v6374
        %v6376 = vpop.f32.mrb[0].mxu0
        %6377 = vmatprep.mubr.bf16.mxu0 0
        %6378 = vmatmul.mubr.bf16.gmra.mrb[0].mxu0 %v4985
        %v6379 = vpop.f32.mrb[0].mxu0
        %v6380 = vadd.f32 %v6219, %v6379
        %v6381 = vpop.f32.mrb[0].mxu0
        %v6382 = vpop.f32.mrb[0].mxu0
        %v6383 = vadd.f32 %v6222, %v6382
        %v6384 = vpop.f32.mrb[0].mxu0
        %6385 = vmatprep.mubr.bf16.mxu0 0
        %6386 = vmatmul.mubr.bf16.gmra.mrb[0].mxu0 %v4994
        %v6387 = vpop.f32.mrb[0].mxu0
        %v6388 = vadd.f32 %v6227, %v6387
        %v6389 = vpop.f32.mrb[0].mxu0
        %v6390 = vpop.f32.mrb[0].mxu0
        %v6391 = vadd.f32 %v6230, %v6390
        %v6392 = vpop.f32.mrb[0].mxu0
        %6393 = vmatprep.mubr.bf16.mxu0 0
        %6394 = vmatmul.mubr.bf16.gmra.mrb[0].mxu0 %v5003
        %v6395 = vpop.f32.mrb[0].mxu0
        %v6396 = vadd.f32 %v6235, %v6395
        %v6397 = vpop.f32.mrb[0].mxu0
        %v6398 = vpop.f32.mrb[0].mxu0
        %v6399 = vadd.f32 %v6238, %v6398
        %v6400 = vpop.f32.mrb[0].mxu0
        %6401 = vmatprep.mubr.bf16.mxu0 0
        %6402 = vmatmul.mubr.bf16.gmra.mrb[0].mxu0 %v5012
        %v6403 = vpop.f32.mrb[0].mxu0
        %v6404 = vadd.f32 %v6243, %v6403
        %v6405 = vpop.f32.mrb[0].mxu0
        %v6406 = vpop.f32.mrb[0].mxu0
        %v6407 = vadd.f32 %v6246, %v6406
        %v6408 = vpop.f32.mrb[0].mxu0
        %6409 = vmatprep.mubr.bf16.mxu0 0
        %6410 = vmatmul.mubr.bf16.gmra.mrb[0].mxu0 %v5021
        %v6411 = vpop.f32.mrb[0].mxu0
        %v6412 = vadd.f32 %v6251, %v6411
        %v6413 = vpop.f32.mrb[0].mxu0
        %v6414 = vpop.f32.mrb[0].mxu0
        %v6415 = vadd.f32 %v6254, %v6414
        %v6416 = vpop.f32.mrb[0].mxu0
        %6417 = vmatprep.mubr.bf16.mxu0 0
        %6418 = vmatmul.mubr.bf16.gmra.mrb[0].mxu0 %v5030
        %v6419 = vpop.f32.mrb[0].mxu0
        %v6420 = vadd.f32 %v6259, %v6419
        %v6421 = vpop.f32.mrb[0].mxu0
        %v6422 = vpop.f32.mrb[0].mxu0
        %v6423 = vadd.f32 %v6262, %v6422
        %v6424 = vpop.f32.mrb[0].mxu0
        %6425 = vmatprep.mubr.bf16.mxu0 0
        %6426 = vmatmul.mubr.bf16.gmra.mrb[0].mxu0 %v5039
        %v6427 = vpop.f32.mrb[0].mxu0
        %v6428 = vadd.f32 %v6267, %v6427
        %v6429 = vpop.f32.mrb[0].mxu0
        %v6430 = vpop.f32.mrb[0].mxu0
        %v6431 = vadd.f32 %v6270, %v6430
        %v6432 = vpop.f32.mrb[0].mxu0
        %6433 = vmatprep.mubr.bf16.mxu0 0
        %6434 = vmatmul.mubr.bf16.gmra.mrb[0].mxu0 %v5048
        %v6435 = vpop.f32.mrb[0].mxu0
        %v6436 = vadd.f32 %v6275, %v6435
        %v6437 = vpop.f32.mrb[0].mxu0
        %v6438 = vpop.f32.mrb[0].mxu0
        %v6439 = vadd.f32 %v6278, %v6438
        %v6440 = vpop.f32.mrb[0].mxu0
        %6441 = vmatprep.mubr.bf16.mxu0 0
        %6442 = vmatmul.mubr.bf16.gmra.mrb[0].mxu0 %v5057
        %v6443 = vpop.f32.mrb[0].mxu0
        %v6444 = vadd.f32 %v6283, %v6443
        %v6445 = vpop.f32.mrb[0].mxu0
        %v6446 = vpop.f32.mrb[0].mxu0
        %v6447 = vadd.f32 %v6286, %v6446
        %v6448 = vpop.f32.mrb[0].mxu0
        %6449 = vmatprep.mubr.bf16.mxu0 0
        %6450 = vmatmul.mubr.bf16.gmra.mrb[0].mxu0 %v5066
        %v6451 = vpop.f32.mrb[0].mxu0
        %v6452 = vadd.f32 %v6291, %v6451
        %v6453 = vpop.f32.mrb[0].mxu0
        %v6454 = vpop.f32.mrb[0].mxu0
        %v6455 = vadd.f32 %v6294, %v6454
        %v6456 = vpop.f32.mrb[0].mxu0
        %6457 = vmatprep.mubr.bf16.mxu0 0
        %6458 = vmatmul.mubr.bf16.gmra.mrb[0].mxu0 %v5075
        %v6459 = vpop.f32.mrb[0].mxu0
        %v6460 = vadd.f32 %v6299, %v6459
        %v6461 = vpop.f32.mrb[0].mxu0
        %v6462 = vpop.f32.mrb[0].mxu0
        %v6463 = vadd.f32 %v6302, %v6462
        %v6464 = vpop.f32.mrb[0].mxu0
        %6465 = vmatprep.mubr.bf16.mxu0 0
        %6466 = vmatmul.mubr.bf16.gmra.mrb[0].mxu0 %v5084
        %v6467 = vpop.f32.mrb[0].mxu0
        %v6468 = vadd.f32 %v6307, %v6467
        %v6469 = vpop.f32.mrb[0].mxu0
        %v6470 = vpop.f32.mrb[0].mxu0
        %v6471 = vadd.f32 %v6310, %v6470
        %v6472 = vpop.f32.mrb[0].mxu0
        %6473 = vmatprep.mubr.bf16.mxu0 0
        %6474 = vmatmul.mubr.bf16.gmra.mrb[0].mxu0 %v5093
        %v6475 = vpop.f32.mrb[0].mxu0
        %v6476 = vadd.f32 %v6315, %v6475
        %v6477 = vpop.f32.mrb[0].mxu0
        %v6478 = vpop.f32.mrb[0].mxu0
        %v6479 = vadd.f32 %v6318, %v6478
        %v6480 = vpop.f32.mrb[0].mxu0
        %6481 = vdwg.mxu0
        %v6482 = vld [vmem:[%s237] sm:$0xf]
        %v6483 = vld [vmem:[%s237 + $0x4] sm:$0xf]
        %v6484 = vld [vmem:[%s237 + $0x8] sm:$0xf]
        %v6485 = vld [vmem:[%s237 + $0xc] sm:$0xf]
        %v6486 = vld [vmem:[%s237 + $0x10] sm:$0xf]
        %v6487 = vld [vmem:[%s237 + $0x14] sm:$0xf]
        %v6488 = vld [vmem:[%s237 + $0x18] sm:$0xf]
        %v6489 = vld [vmem:[%s237 + $0x1c] sm:$0xf]
        %v6490 = vld [vmem:[%s237 + $0x20] sm:$0xf]
        %v6491 = vld [vmem:[%s237 + $0x24] sm:$0xf]
        %v6492 = vld [vmem:[%s237 + $0x28] sm:$0xf]
        %v6493 = vld [vmem:[%s237 + $0x2c] sm:$0xf]
        %v6494 = vld [vmem:[%s237 + $0x30] sm:$0xf]
        %v6495 = vld [vmem:[%s237 + $0x34] sm:$0xf]
        %v6496 = vld [vmem:[%s237 + $0x38] sm:$0xf]
        %v6497 = vld [vmem:[%s237 + $0x3c] sm:$0xf]
        %v6498 = vld [vmem:[%s237 + $0x40] sm:$0xf]
        %v6499 = vld [vmem:[%s237 + $0x44] sm:$0xf]
        %v6500 = vld [vmem:[%s237 + $0x48] sm:$0xf]
        %v6501 = vld [vmem:[%s237 + $0x4c] sm:$0xf]
        %v6502 = vld [vmem:[%s237 + $0x50] sm:$0xf]
        %v6503 = vld [vmem:[%s237 + $0x54] sm:$0xf]
        %v6504 = vld [vmem:[%s237 + $0x58] sm:$0xf]
        %v6505 = vld [vmem:[%s237 + $0x5c] sm:$0xf]
        %v6506 = vld [vmem:[%s237 + $0x60] sm:$0xf]
        %v6507 = vld [vmem:[%s237 + $0x64] sm:$0xf]
        %v6508 = vld [vmem:[%s237 + $0x68] sm:$0xf]
        %v6509 = vld [vmem:[%s237 + $0x6c] sm:$0xf]
        %v6510 = vld [vmem:[%s237 + $0x70] sm:$0xf]
        %v6511 = vld [vmem:[%s237 + $0x74] sm:$0xf]
        %v6512 = vld [vmem:[%s237 + $0x78] sm:$0xf]
        %v6513 = vld [vmem:[%s237 + $0x7c] sm:$0xf]
        %v6514 = vunpack.c.l.bf16 %v6482
        %v6515 = vunpack.c.l.bf16 %v6483
        %v6516 = vunpack.c.l.bf16 %v6484
        %v6517 = vunpack.c.l.bf16 %v6485
        %v6518 = vunpack.c.l.bf16 %v6486
        %v6519 = vunpack.c.l.bf16 %v6487
        %v6520 = vunpack.c.l.bf16 %v6488
        %v6521 = vunpack.c.l.bf16 %v6489
        %v6522 = vunpack.c.l.bf16 %v6490
        %v6523 = vunpack.c.l.bf16 %v6491
        %v6524 = vunpack.c.l.bf16 %v6492
        %v6525 = vunpack.c.l.bf16 %v6493
        %v6526 = vunpack.c.l.bf16 %v6494
        %v6527 = vunpack.c.l.bf16 %v6495
        %v6528 = vunpack.c.l.bf16 %v6496
        %v6529 = vunpack.c.l.bf16 %v6497
        %v6530 = vunpack.c.l.bf16 %v6498
        %v6531 = vunpack.c.l.bf16 %v6499
        %v6532 = vunpack.c.l.bf16 %v6500
        %v6533 = vunpack.c.l.bf16 %v6501
        %v6534 = vunpack.c.l.bf16 %v6502
        %v6535 = vunpack.c.l.bf16 %v6503
        %v6536 = vunpack.c.l.bf16 %v6504
        %v6537 = vunpack.c.l.bf16 %v6505
        %v6538 = vunpack.c.l.bf16 %v6506
        %v6539 = vunpack.c.l.bf16 %v6507
        %v6540 = vunpack.c.l.bf16 %v6508
        %v6541 = vunpack.c.l.bf16 %v6509
        %v6542 = vunpack.c.l.bf16 %v6510
        %v6543 = vunpack.c.l.bf16 %v6511
        %v6544 = vunpack.c.l.bf16 %v6512
        %v6545 = vunpack.c.l.bf16 %v6513
        %v6546 = vadd.f32 %v6356, %v6514
        %v6547 = vadd.f32 %v6359, %v6515
        %v6548 = vadd.f32 %v6364, %v6516
        %v6549 = vadd.f32 %v6367, %v6517
        %v6550 = vadd.f32 %v6372, %v6518
        %v6551 = vadd.f32 %v6375, %v6519
        %v6552 = vadd.f32 %v6380, %v6520
        %v6553 = vadd.f32 %v6383, %v6521
        %v6554 = vadd.f32 %v6388, %v6522
        %v6555 = vadd.f32 %v6391, %v6523
        %v6556 = vadd.f32 %v6396, %v6524
        %v6557 = vadd.f32 %v6399, %v6525
        %v6558 = vadd.f32 %v6404, %v6526
        %v6559 = vadd.f32 %v6407, %v6527
        %v6560 = vadd.f32 %v6412, %v6528
        %v6561 = vadd.f32 %v6415, %v6529
        %v6562 = vadd.f32 %v6420, %v6530
        %v6563 = vadd.f32 %v6423, %v6531
        %v6564 = vadd.f32 %v6428, %v6532
        %v6565 = vadd.f32 %v6431, %v6533
        %v6566 = vadd.f32 %v6436, %v6534
        %v6567 = vadd.f32 %v6439, %v6535
        %v6568 = vadd.f32 %v6444, %v6536
        %v6569 = vadd.f32 %v6447, %v6537
        %v6570 = vadd.f32 %v6452, %v6538
        %v6571 = vadd.f32 %v6455, %v6539
        %v6572 = vadd.f32 %v6460, %v6540
        %v6573 = vadd.f32 %v6463, %v6541
        %v6574 = vadd.f32 %v6468, %v6542
        %v6575 = vadd.f32 %v6471, %v6543
        %v6576 = vadd.f32 %v6476, %v6544
        %v6577 = vadd.f32 %v6479, %v6545
        %v6578 = vmax.f32 %v6546, 0.0
        %v6579 = vmax.f32 %v6547, 0.0
        %v6580 = vmax.f32 %v6548, 0.0
        %v6581 = vmax.f32 %v6549, 0.0
        %v6582 = vmax.f32 %v6550, 0.0
        %v6583 = vmax.f32 %v6551, 0.0
        %v6584 = vmax.f32 %v6552, 0.0
        %v6585 = vmax.f32 %v6553, 0.0
        %v6586 = vmax.f32 %v6554, 0.0
        %v6587 = vmax.f32 %v6555, 0.0
        %v6588 = vmax.f32 %v6556, 0.0
        %v6589 = vmax.f32 %v6557, 0.0
        %v6590 = vmax.f32 %v6558, 0.0
        %v6591 = vmax.f32 %v6559, 0.0
        %v6592 = vmax.f32 %v6560, 0.0
        %v6593 = vmax.f32 %v6561, 0.0
        %v6594 = vmax.f32 %v6562, 0.0
        %v6595 = vmax.f32 %v6563, 0.0
        %v6596 = vmax.f32 %v6564, 0.0
        %v6597 = vmax.f32 %v6565, 0.0
        %v6598 = vmax.f32 %v6566, 0.0
        %v6599 = vmax.f32 %v6567, 0.0
        %v6600 = vmax.f32 %v6568, 0.0
        %v6601 = vmax.f32 %v6569, 0.0
        %v6602 = vmax.f32 %v6570, 0.0
        %v6603 = vmax.f32 %v6571, 0.0
        %v6604 = vmax.f32 %v6572, 0.0
        %v6605 = vmax.f32 %v6573, 0.0
        %v6606 = vmax.f32 %v6574, 0.0
        %v6607 = vmax.f32 %v6575, 0.0
        %v6608 = vmax.f32 %v6576, 0.0
        %v6609 = vmax.f32 %v6577, 0.0
        %6610 = vxpose.xlu0.b32.start [1/16] %v6578, 128
        %6611 = vxpose.xlu0.b32.cont [2/16] %v6579, 128
        %6612 = vxpose.xlu0.b32.cont [3/16] %v6580, 128
        %6613 = vxpose.xlu0.b32.cont [4/16] %v6581, 128
        %6614 = vxpose.xlu0.b32.cont [5/16] %v6582, 128
        %6615 = vxpose.xlu0.b32.cont [6/16] %v6583, 128
        %6616 = vxpose.xlu0.b32.cont [7/16] %v6584, 128
        %6617 = vxpose.xlu0.b32.cont [8/16] %v6585, 128
        %6618 = vxpose.xlu0.b32.cont [9/16] %v6586, 128
        %6619 = vxpose.xlu0.b32.cont [10/16] %v6587, 128
        %6620 = vxpose.xlu0.b32.cont [11/16] %v6588, 128
        %6621 = vxpose.xlu0.b32.cont [12/16] %v6589, 128
        %6622 = vxpose.xlu0.b32.cont [13/16] %v6590, 128
        %6623 = vxpose.xlu0.b32.cont [14/16] %v6591, 128
        %6624 = vxpose.xlu0.b32.cont [15/16] %v6592, 128
        %6625 = vxpose.xlu0.b32.end [16/16] %v6593, 128
        %v6626 = vpop.trf.xlu0
        %v6627 = vpop.trf.xlu0
        %v6628 = vpop.trf.xlu0
        %v6629 = vpop.trf.xlu0
        %v6630 = vpop.trf.xlu0
        %v6631 = vpop.trf.xlu0
        %v6632 = vpop.trf.xlu0
        %v6633 = vpop.trf.xlu0
        %v6634 = vpop.trf.xlu0
        %v6635 = vpop.trf.xlu0
        %v6636 = vpop.trf.xlu0
        %v6637 = vpop.trf.xlu0
        %v6638 = vpop.trf.xlu0
        %v6639 = vpop.trf.xlu0
        %v6640 = vpop.trf.xlu0
        %v6641 = vpop.trf.xlu0
        %6642 = vxpose.xlu0.b32.start [1/16] %v6594, 128
        %6643 = vxpose.xlu0.b32.cont [2/16] %v6595, 128
        %6644 = vxpose.xlu0.b32.cont [3/16] %v6596, 128
        %6645 = vxpose.xlu0.b32.cont [4/16] %v6597, 128
        %6646 = vxpose.xlu0.b32.cont [5/16] %v6598, 128
        %6647 = vxpose.xlu0.b32.cont [6/16] %v6599, 128
        %6648 = vxpose.xlu0.b32.cont [7/16] %v6600, 128
        %6649 = vxpose.xlu0.b32.cont [8/16] %v6601, 128
        %6650 = vxpose.xlu0.b32.cont [9/16] %v6602, 128
        %6651 = vxpose.xlu0.b32.cont [10/16] %v6603, 128
        %6652 = vxpose.xlu0.b32.cont [11/16] %v6604, 128
        %6653 = vxpose.xlu0.b32.cont [12/16] %v6605, 128
        %6654 = vxpose.xlu0.b32.cont [13/16] %v6606, 128
        %6655 = vxpose.xlu0.b32.cont [14/16] %v6607, 128
        %6656 = vxpose.xlu0.b32.cont [15/16] %v6608, 128
        %6657 = vxpose.xlu0.b32.end [16/16] %v6609, 128
        %v6658 = vpop.trf.xlu0
        %v6659 = vpop.trf.xlu0
        %v6660 = vpop.trf.xlu0
        %v6661 = vpop.trf.xlu0
        %v6662 = vpop.trf.xlu0
        %v6663 = vpop.trf.xlu0
        %v6664 = vpop.trf.xlu0
        %v6665 = vpop.trf.xlu0
        %v6666 = vpop.trf.xlu0
        %v6667 = vpop.trf.xlu0
        %v6668 = vpop.trf.xlu0
        %v6669 = vpop.trf.xlu0
        %v6670 = vpop.trf.xlu0
        %v6671 = vpop.trf.xlu0
        %v6672 = vpop.trf.xlu0
        %v6673 = vpop.trf.xlu0
        %6674 = vst [vmem:[%s271] sm:$0xff] %v6626
        %6675 = vst [vmem:[%s271 + $0x8] sm:$0xff] %v6658
        %6676 = vst [vmem:[%s271 + $0x10] sm:$0xff] %v6627
        %6677 = vst [vmem:[%s271 + $0x18] sm:$0xff] %v6659
        %6678 = vst [vmem:[%s271 + $0x20] sm:$0xff] %v6628
        %6679 = vst [vmem:[%s271 + $0x28] sm:$0xff] %v6660
        %6680 = vst [vmem:[%s271 + $0x30] sm:$0xff] %v6629
        %6681 = vst [vmem:[%s271 + $0x38] sm:$0xff] %v6661
        %6682 = vst [vmem:[%s271 + $0x40] sm:$0xff] %v6630
        %6683 = vst [vmem:[%s271 + $0x48] sm:$0xff] %v6662
        %6684 = vst [vmem:[%s271 + $0x50] sm:$0xff] %v6631
        %6685 = vst [vmem:[%s271 + $0x58] sm:$0xff] %v6663
        %6686 = vst [vmem:[%s271 + $0x60] sm:$0xff] %v6632
        %6687 = vst [vmem:[%s271 + $0x68] sm:$0xff] %v6664
        %6688 = vst [vmem:[%s271 + $0x70] sm:$0xff] %v6633
        %6689 = vst [vmem:[%s271 + $0x78] sm:$0xff] %v6665
        %6690 = vst [vmem:[%s271 + $0x80] sm:$0xff] %v6634
        %6691 = vst [vmem:[%s271 + $0x88] sm:$0xff] %v6666
        %6692 = vst [vmem:[%s271 + $0x90] sm:$0xff] %v6635
        %6693 = vst [vmem:[%s271 + $0x98] sm:$0xff] %v6667
        %6694 = vst [vmem:[%s271 + $0xa0] sm:$0xff] %v6636
        %6695 = vst [vmem:[%s271 + $0xa8] sm:$0xff] %v6668
        %6696 = vst [vmem:[%s271 + $0xb0] sm:$0xff] %v6637
        %6697 = vst [vmem:[%s271 + $0xb8] sm:$0xff] %v6669
        %6698 = vst [vmem:[%s271 + $0xc0] sm:$0xff] %v6638
        %6699 = vst [vmem:[%s271 + $0xc8] sm:$0xff] %v6670
        %6700 = vst [vmem:[%s271 + $0xd0] sm:$0xff] %v6639
        %6701 = vst [vmem:[%s271 + $0xd8] sm:$0xff] %v6671
        %6702 = vst [vmem:[%s271 + $0xe0] sm:$0xff] %v6640
        %6703 = vst [vmem:[%s271 + $0xe8] sm:$0xff] %v6672
        %6704 = vst [vmem:[%s271 + $0xf0] sm:$0xff] %v6641
        %6705 = vst [vmem:[%s271 + $0xf8] sm:$0xff] %v6673
        %s6706 = sand.u32 %s141, 1
        %s6707 = scalar_lea.sflag [#allocation6], %s6706
        %s6708 = sand.u32 %s141, 1
        %s6709 = smul.addr %s6708, 256
        %s6710 = scalar_lea.vmem [#allocation10], %s6709
        // Predicated region
        $region53: #{tpu_custom_call.1} parent=39 // pred_check
          %p6711 = pneg %p151
        $region54: #{tpu_custom_call.1} parent=39 // pred_check_branch
          %6713 = sbr.rel (%p6711) target = $region56
        $region55: #{tpu_custom_call.1} parent=39 // pred_region
          %s6715 = ssub.s32 4096, 4096
          %6716 = vsyncadd %s6707, %s6715
          %s6717 = smul.addr %s23, 32
          %s6718 = smul.addr %s6717, 128
          %s6719 = scalar_lea.hbm %s5, %s6718
          %s6720 = sshll.u32 %s6710, 4
          %s6721 = int_to_ptr.vmem [resolvable:$true] %s6720
          %6726 = dma.vmem_to_hbm [thread:$0]  %s6721, 4096, %s6719, %s6707, 256, 256, 16
        $region56: #{tpu_custom_call.1} parent=39 // pred_fallthru
          _
      $region40: #{tpu_custom_call.1} parent=5 // pred_fallthru
        _
      %p6727 = scmp.le.s32.totalorder 2, %s18
      // Predicated region
      $region57: #{tpu_custom_call.1} parent=5 // pred_check
        %p6728 = pneg %p6727
      $region58: #{tpu_custom_call.1} parent=5 // pred_check_branch
        %6730 = sbr.rel (%p6728) target = $region60
      $region59: #{tpu_custom_call.1} parent=5 // pred_region
        %s6731 = ssub.s32 %s18, 2
        // Predicated region
        $region61: #{tpu_custom_call.1} parent=59 // pred_check
          %p6732 = pneg %p157
        $region62: #{tpu_custom_call.1} parent=59 // pred_check_branch
          %6734 = sbr.rel (%p6732) target = $region64
        $region63: #{tpu_custom_call.1} parent=59 // pred_region
          %s6735 = sand.u32 %s142, 1
          %s6736 = scalar_lea.sflag [#allocation6], %s6735
          %s6737 = sand.u32 %s142, 1
          %s6738 = smul.addr %s6737, 256
          %s6739 = scalar_lea.vmem [#allocation10], %s6738
          %6740 = dma.done %s6736, 4096
        $region64: #{tpu_custom_call.1} parent=59 // pred_fallthru
          _
      $region60: #{tpu_custom_call.1} parent=5 // pred_fallthru
        _
    $region6: #{tpu_custom_call.1} parent=1 // loop_footer
      %s22 = sadd.s32 1, %s18
    $region7: #{tpu_custom_call.1} parent=1 // loop_footer_branch
      %17 = sbr.rel target = $region3
    $region8: #{tpu_custom_call.1} parent=1 // loop_exit
      _
    %6741 = vsyncpa [#allocation5], 1
    %s6742 = scalar_lea.sflag [#allocation5], 1
    %6743 = vsyncpa %s6742, 1
    %6744 = vsyncpa [#allocation8], 1
    %6745 = vsyncpa [#allocation6], 1
    %s6746 = scalar_lea.sflag [#allocation6], 1
    %6747 = vsyncpa %s6746, 1

</llo_original>
